<compile_context>
chip_gen: v7x
topology: tpu7x:2x2x1
jax: 0.10.0
libtpu: 0.0.40
codegen_flags: <defaults>
</compile_context>

<pallas_src>
import jax
import jax.numpy as jnp
from jax.experimental import pallas as pl
from jax.experimental.pallas import tpu as pltpu

HIDDEN = 64
INPUT = 1
OUTPUT = 1
NUM_LAYERS = 3

GP = 128            # one 128-lane vreg column block
NP = 2 * GP         # packed gate width: [r|z] block + [n|zero-pad] block
B_PAD = 8           # batch padded to a full sublane group

# The packed layout relies on HIDDEN == 64 (r,z fill one 128-lane block).
assert 2 * HIDDEN == GP and 3 * HIDDEN <= NP


def gru_kernel(x_ref, w_ref, b_ref, out_ref, gx_ref, seq_ref):
    """3-layer GRU recurrence + final Linear, entirely in VMEM/registers.

    x_ref:   (T*Bp, INPUT)    time-major input, batch padded to Bp.
    w_ref:   (6, HIDDEN, NP)  [whh0, whh1, whh2, wih1, wih2, wfc]; columns are
                              [r 0:64 | z 64:128 | n 128:192 | zeros 192:256].
    b_ref:   (8, NP)          [wih0 row, gb0, gb1, gb2, bhhn0, bhhn1, bhhn2, bfc]
                              gb_l = b_ih + b_hh(r,z only); bhhn_l = n-part of b_hh.
    out_ref: (Bp, GP)         lane-dense output; column 0 is the real fc value.
    gx_ref:  VMEM (T*Bp, NP)  staging for the hoisted input projections.
    seq_ref: VMEM (T*Bp, GP)  per-step hidden states (feed the next layer).
    """
    TB = gx_ref.shape[0]
    Bp = out_ref.shape[0]
    T = TB // Bp
    H = HIDDEN

    # ---- layer-0 input projection hoisted out of the recurrence ----------
    # INPUT == 1, so x @ W_ih0 is a lane broadcast-multiply against one row.
    # gb0 already folds b_ih plus the r/z parts of b_hh.
    x = x_ref[...]                                            # (TB, INPUT)
    gx_ref[...] = x * b_ref[0:1, :] + b_ref[1:2, :]

    h = jnp.zeros((Bp, GP), jnp.float32)
    for layer in range(NUM_LAYERS):
        whh = w_ref[layer]                                    # (H, NP) stationary across T
        # n-gate hidden bias must be added *inside* the r* multiply (PyTorch
        # semantics); its broadcast is hoisted once per layer.
        bhhn = jnp.broadcast_to(b_ref[4 + layer:5 + layer, 0:GP], (Bp, GP))
        h = jnp.zeros((Bp, GP), jnp.float32)                  # h0 = 0 per layer
        # T is small and static: fully unroll so MXU/EUP/XLU work of adjacent
        # steps can overlap.
        for t in range(T):
            gx = gx_ref[t * Bp:(t + 1) * Bp, :]               # (Bp, NP)
            # recurrent matmul on the real K=64 lanes only (padded lanes of h are 0)
            gh = jnp.dot(h[:, 0:H], whh,
                         preferred_element_type=jnp.float32)  # (Bp, NP)
            # fused r|z sigmoid: one 128-lane EUP block (r in 0:64, z in 64:128)
            rz = jax.nn.sigmoid(gx[:, 0:GP] + gh[:, 0:GP])
            # align z with lanes 0:64 via an XLU rotate (64 == -64 mod 128)
            zr = pltpu.roll(rz, shift=HIDDEN, axis=1)         # z in 0:64, r in 64:128
            ghn = gh[:, GP:NP] + bhhn                         # n in 0:64, pad lanes 0
            n = jnp.tanh(gx[:, GP:NP] + rz * ghn)             # pad lanes -> tanh(0) = 0
            # padded lanes of h stay exactly 0: (1-r)*0 + r*0
            h = (1.0 - zr) * n + zr * h
            if layer < NUM_LAYERS - 1:
                seq_ref[t * Bp:(t + 1) * Bp, :] = h
        if layer < NUM_LAYERS - 1:
            # next layer's input projection: one batched (T*Bp, 64) @ (64, 256)
            h_all = seq_ref[...]                              # (TB, GP)
            gx_ref[...] = (jnp.dot(h_all[:, 0:H], w_ref[3 + layer],
                                   preferred_element_type=jnp.float32)
                           + b_ref[2 + layer:3 + layer, :])

    # ---- final Linear on the last layer's final hidden state --------------
    wfc = w_ref[NUM_LAYERS + 2][:, 0:GP]                      # (H, GP), col 0 real
    out_ref[...] = (jnp.dot(h[:, 0:H], wfc, preferred_element_type=jnp.float32)
                    + b_ref[7:8, 0:GP])


# ---------------------------------------------------------------------------
# One-time weight packing (call at model init, NOT per forward call).
# ---------------------------------------------------------------------------
def pack_params(params):
    (wih0, whh0, bih0, bhh0,
     wih1, whh1, bih1, bhh1,
     wih2, whh2, bih2, bhh2, wfc, bfc) = params
    f32 = jnp.float32

    def pad_cols(w):
        w = jnp.asarray(w, f32)
        return jnp.pad(w, ((0, 0), (0, NP - w.shape[1])))

    def combined_bias(bih, bhh):
        # fold b_ih (all gates) + b_hh (r,z gates only); the n-gate b_hh must
        # stay inside the recurrence (it sits under the r* multiply).
        b = jnp.asarray(bih, f32) + jnp.asarray(bhh, f32).at[:, 2 * HIDDEN:].set(0.0)
        return pad_cols(b)

    def n_bias(bhh):
        row = jnp.zeros((1, NP), f32)
        return row.at[:, 0:HIDDEN].set(jnp.asarray(bhh, f32)[:, 2 * HIDDEN:3 * HIDDEN])

    wfc_p = jnp.pad(jnp.asarray(wfc, f32).T, ((0, 0), (0, NP - OUTPUT)))  # (H, NP)
    w_slab = jnp.stack([pad_cols(whh0), pad_cols(whh1), pad_cols(whh2),
                        pad_cols(wih1), pad_cols(wih2), wfc_p], axis=0)   # (6, H, NP)

    bfc_row = jnp.zeros((1, NP), f32).at[:, 0:OUTPUT].set(jnp.asarray(bfc, f32))
    b_slab = jnp.concatenate([pad_cols(wih0),
                              combined_bias(bih0, bhh0),
                              combined_bias(bih1, bhh1),
                              combined_bias(bih2, bhh2),
                              n_bias(bhh0), n_bias(bhh1), n_bias(bhh2),
                              bfc_row], axis=0)                           # (8, NP)
    return w_slab, b_slab


# ---------------------------------------------------------------------------
# Forward wrapper: only x layout plumbing + one pallas_call.
# ---------------------------------------------------------------------------
@jax.jit
def gru_model_forward(x, w_slab, b_slab):
    B, T, in_feat = x.shape
    assert in_feat == INPUT == 1
    Bp = ((B + B_PAD - 1) // B_PAD) * B_PAD

    x_t = jnp.transpose(x, (1, 0, 2)).astype(jnp.float32)    # time-major
    x_t = jnp.pad(x_t, ((0, 0), (0, Bp - B), (0, 0)))
    x_flat = x_t.reshape(T * Bp, in_feat)

    out_p = pl.pallas_call(
        gru_kernel,
        out_shape=jax.ShapeDtypeStruct((Bp, GP), jnp.float32),
        in_specs=[pl.BlockSpec(memory_space=pltpu.MemorySpace.VMEM)] * 3,
        out_specs=pl.BlockSpec(memory_space=pltpu.MemorySpace.VMEM),
        scratch_shapes=[pltpu.VMEM((T * Bp, NP), jnp.float32),   # gx staging
                        pltpu.VMEM((T * Bp, GP), jnp.float32)],  # hidden-state seq
    )(x_flat, w_slab, b_slab)
    return out_p[:B, :OUTPUT]


# ---------------------------------------------------------------------------
# Params + pure-JAX reference (mirrors PyTorch nn.GRU eval + Linear)
# ---------------------------------------------------------------------------
def init_params(key):
    """PyTorch-equivalent shapes (pre-transposed), uniform(-1/sqrt(H), 1/sqrt(H))."""
    k = 1.0 / jnp.sqrt(jnp.float32(HIDDEN))
    params = []
    for layer in range(NUM_LAYERS):
        in_feat = INPUT if layer == 0 else HIDDEN
        key, k1, k2, k3, k4 = jax.random.split(key, 5)
        wih_t = jax.random.uniform(k1, (in_feat, 3 * HIDDEN), jnp.float32, -k, k)
        whh_t = jax.random.uniform(k2, (HIDDEN, 3 * HIDDEN), jnp.float32, -k, k)
        bih = jax.random.uniform(k3, (1, 3 * HIDDEN), jnp.float32, -k, k)
        bhh = jax.random.uniform(k4, (1, 3 * HIDDEN), jnp.float32, -k, k)
        params += [wih_t, whh_t, bih, bhh]
    key, k1, k2 = jax.random.split(key, 3)
    wfc = jax.random.uniform(k1, (OUTPUT, HIDDEN), jnp.float32, -k, k)
    bfc = jax.random.uniform(k2, (1, OUTPUT), jnp.float32, -k, k)
    params += [wfc, bfc]
    return params


def gru_model_reference(x, params):
    B, T, _ = x.shape
    y = x.astype(jnp.float32)
    H = HIDDEN
    for layer in range(NUM_LAYERS):
        wih_t, whh_t, bih, bhh = params[4 * layer: 4 * layer + 4]
        h = jnp.zeros((B, H), jnp.float32)
        outs = []
        for t in range(T):
            gx = y[:, t, :] @ wih_t + bih
            gh = h @ whh_t + bhh
            r = jax.nn.sigmoid(gx[:, 0:H] + gh[:, 0:H])
            z = jax.nn.sigmoid(gx[:, H:2 * H] + gh[:, H:2 * H])
            n = jnp.tanh(gx[:, 2 * H:3 * H] + r * gh[:, 2 * H:3 * H])
            h = (1.0 - z) * n + z * h
            outs.append(h)
        y = jnp.stack(outs, axis=1)
    wfc, bfc = params[-2], params[-1]
    return y[:, -1, :] @ wfc.T + bfc


if __name__ == "__main__":
    key = jax.random.PRNGKey(0)
    key, pkey, xkey = jax.random.split(key, 3)

    params = init_params(pkey)
    # one-time packing, outside the per-call jit path
    w_slab, b_slab = pack_params(params)
    w_slab = jax.device_put(w_slab)
    b_slab = jax.device_put(b_slab)

    B, T = 2, 8
    x = jax.random.normal(xkey, (B, T, INPUT), jnp.float32)

    out = jax.block_until_ready(gru_model_forward(x, w_slab, b_slab))

    ref = gru_model_reference(x, params)
    assert out.shape == (B, OUTPUT), out.shape
    assert jnp.allclose(out, ref, atol=1e-3, rtol=1e-3), (out, ref)

    print("KERNEL_OK")
</pallas_src>

<mosaic_0001>
module attributes {stable_mosaic.version = 11 : i64} {
  func.func @gru_kernel(%arg0: memref<64x1xf32, #tpu.memory_space<vmem>>, %arg1: memref<6x64x256xf32, #tpu.memory_space<vmem>>, %arg2: memref<8x256xf32, #tpu.memory_space<vmem>>, %arg3: memref<8x128xf32, #tpu.memory_space<vmem>>, %arg4: memref<64x256xf32, #tpu.memory_space<vmem>>, %arg5: memref<64x128xf32, #tpu.memory_space<vmem>>) attributes {dimension_semantics = [], scalar_prefetch = 0 : i64, scratch_operands = 2 : i64, tpu.core_type = #tpu.core_type<tc>} {
    %c0 = arith.constant 0 : index
    %c0_0 = arith.constant 0 : index
    %0 = vector.load %arg0[%c0, %c0_0] : memref<64x1xf32, #tpu.memory_space<vmem>>, vector<64x1xf32>
    %c0_1 = arith.constant 0 : index
    %c0_2 = arith.constant 0 : index
    %1 = vector.load %arg2[%c0_1, %c0_2] : memref<8x256xf32, #tpu.memory_space<vmem>>, vector<1x256xf32>
    %2 = vector.broadcast %0 : vector<64x1xf32> to vector<64x256xf32>
    %3 = vector.broadcast %1 : vector<1x256xf32> to vector<64x256xf32>
    %4 = arith.mulf %2, %3 : vector<64x256xf32>
    %c1 = arith.constant 1 : index
    %c0_3 = arith.constant 0 : index
    %5 = vector.load %arg2[%c1, %c0_3] : memref<8x256xf32, #tpu.memory_space<vmem>>, vector<1x256xf32>
    %6 = vector.broadcast %5 : vector<1x256xf32> to vector<64x256xf32>
    %7 = arith.addf %4, %6 : vector<64x256xf32>
    %c0_4 = arith.constant 0 : index
    %c0_5 = arith.constant 0 : index
    %8 = vector.load %arg4[%c0_4, %c0_5] : memref<64x256xf32, #tpu.memory_space<vmem>>, vector<64x256xf32>
    tpu.vector_store %arg4[%c0_4, %c0_5], %7 {strides = array<i32>} : memref<64x256xf32, #tpu.memory_space<vmem>>, vector<64x256xf32>,
    %c0_6 = arith.constant 0 : index
    %c0_7 = arith.constant 0 : index
    %c0_8 = arith.constant 0 : index
    %9 = vector.load %arg1[%c0_6, %c0_7, %c0_8] : memref<6x64x256xf32, #tpu.memory_space<vmem>>, vector<1x64x256xf32>
    %10 = vector.shape_cast %9 : vector<1x64x256xf32> to vector<64x256xf32>
    %c4 = arith.constant 4 : index
    %c0_9 = arith.constant 0 : index
    %11 = vector.load %arg2[%c4, %c0_9] : memref<8x256xf32, #tpu.memory_space<vmem>>, vector<1x128xf32>
    %12 = vector.shape_cast %11 : vector<1x128xf32> to vector<1x128xf32>
    %13 = vector.broadcast %12 : vector<1x128xf32> to vector<8x128xf32>
    %cst = arith.constant 0.000000e+00 : f32
    %14 = vector.broadcast %cst : f32 to vector<8x128xf32>
    %c0_10 = arith.constant 0 : index
    %c0_11 = arith.constant 0 : index
    %15 = vector.load %arg4[%c0_10, %c0_11] : memref<64x256xf32, #tpu.memory_space<vmem>>, vector<8x256xf32>
    %16 = vector.extract_strided_slice %14 {offsets = [0, 0], sizes = [8, 64], strides = [1, 1]} : vector<8x128xf32> to vector<8x64xf32>
    %cst_12 = arith.constant dense<0.000000e+00> : vector<8x256xf32>
    %17 = tpu.matmul %16, %10, %cst_12 {dimension_numbers = #tpu.dot_dimension_numbers<[1], [0], [0], [1], [0, 0, 1, 1], [], []>} : vector<8x64xf32>, vector<64x256xf32>, vector<8x256xf32> -> vector<8x256xf32>
    %18 = vector.extract_strided_slice %15 {offsets = [0, 0], sizes = [8, 128], strides = [1, 1]} : vector<8x256xf32> to vector<8x128xf32>
    %19 = vector.extract_strided_slice %17 {offsets = [0, 0], sizes = [8, 128], strides = [1, 1]} : vector<8x256xf32> to vector<8x128xf32>
    %20 = arith.addf %18, %19 : vector<8x128xf32>
    %21 = arith.negf %20 : vector<8x128xf32>
    %22 = math.exp %21 : vector<8x128xf32>
    %cst_13 = arith.constant 1.000000e+00 : f32
    %23 = vector.broadcast %cst_13 : f32 to vector<8x128xf32>
    %24 = arith.addf %23, %22 : vector<8x128xf32>
    %25 = arith.divf %23, %24 : vector<8x128xf32>
    %c64_i32 = arith.constant 64 : i32
    %26 = tpu.dynamic_rotate %25 by %c64_i32 dim 1 : vector<8x128xf32>, i32 -> vector<8x128xf32>
    %27 = vector.extract_strided_slice %17 {offsets = [0, 128], sizes = [8, 128], strides = [1, 1]} : vector<8x256xf32> to vector<8x128xf32>
    %28 = arith.addf %27, %13 : vector<8x128xf32>
    %29 = vector.extract_strided_slice %15 {offsets = [0, 128], sizes = [8, 128], strides = [1, 1]} : vector<8x256xf32> to vector<8x128xf32>
    %30 = arith.mulf %25, %28 : vector<8x128xf32>
    %31 = arith.addf %29, %30 : vector<8x128xf32>
    %32 = math.tanh %31 : vector<8x128xf32>
    %cst_14 = arith.constant 1.000000e+00 : f32
    %33 = vector.broadcast %cst_14 : f32 to vector<8x128xf32>
    %34 = arith.subf %33, %26 : vector<8x128xf32>
    %35 = arith.mulf %34, %32 : vector<8x128xf32>
    %36 = arith.mulf %26, %14 : vector<8x128xf32>
    %37 = arith.addf %35, %36 : vector<8x128xf32>
    %c0_15 = arith.constant 0 : index
    %c0_16 = arith.constant 0 : index
    %38 = vector.load %arg5[%c0_15, %c0_16] : memref<64x128xf32, #tpu.memory_space<vmem>>, vector<8x128xf32>
    tpu.vector_store %arg5[%c0_15, %c0_16], %37 {strides = array<i32>} : memref<64x128xf32, #tpu.memory_space<vmem>>, vector<8x128xf32>,
    %c8 = arith.constant 8 : index
    %c0_17 = arith.constant 0 : index
    %39 = vector.load %arg4[%c8, %c0_17] : memref<64x256xf32, #tpu.memory_space<vmem>>, vector<8x256xf32>
    %40 = vector.extract_strided_slice %37 {offsets = [0, 0], sizes = [8, 64], strides = [1, 1]} : vector<8x128xf32> to vector<8x64xf32>
    %cst_18 = arith.constant dense<0.000000e+00> : vector<8x256xf32>
    %41 = tpu.matmul %40, %10, %cst_18 {dimension_numbers = #tpu.dot_dimension_numbers<[1], [0], [0], [1], [0, 0, 1, 1], [], []>} : vector<8x64xf32>, vector<64x256xf32>, vector<8x256xf32> -> vector<8x256xf32>
    %42 = vector.extract_strided_slice %39 {offsets = [0, 0], sizes = [8, 128], strides = [1, 1]} : vector<8x256xf32> to vector<8x128xf32>
    %43 = vector.extract_strided_slice %41 {offsets = [0, 0], sizes = [8, 128], strides = [1, 1]} : vector<8x256xf32> to vector<8x128xf32>
    %44 = arith.addf %42, %43 : vector<8x128xf32>
    %45 = arith.negf %44 : vector<8x128xf32>
    %46 = math.exp %45 : vector<8x128xf32>
    %cst_19 = arith.constant 1.000000e+00 : f32
    %47 = vector.broadcast %cst_19 : f32 to vector<8x128xf32>
    %48 = arith.addf %47, %46 : vector<8x128xf32>
    %49 = arith.divf %47, %48 : vector<8x128xf32>
    %c64_i32_20 = arith.constant 64 : i32
    %50 = tpu.dynamic_rotate %49 by %c64_i32_20 dim 1 : vector<8x128xf32>, i32 -> vector<8x128xf32>
    %51 = vector.extract_strided_slice %41 {offsets = [0, 128], sizes = [8, 128], strides = [1, 1]} : vector<8x256xf32> to vector<8x128xf32>
    %52 = arith.addf %51, %13 : vector<8x128xf32>
    %53 = vector.extract_strided_slice %39 {offsets = [0, 128], sizes = [8, 128], strides = [1, 1]} : vector<8x256xf32> to vector<8x128xf32>
    %54 = arith.mulf %49, %52 : vector<8x128xf32>
    %55 = arith.addf %53, %54 : vector<8x128xf32>
    %56 = math.tanh %55 : vector<8x128xf32>
    %cst_21 = arith.constant 1.000000e+00 : f32
    %57 = vector.broadcast %cst_21 : f32 to vector<8x128xf32>
    %58 = arith.subf %57, %50 : vector<8x128xf32>
    %59 = arith.mulf %58, %56 : vector<8x128xf32>
    %60 = arith.mulf %50, %37 : vector<8x128xf32>
    %61 = arith.addf %59, %60 : vector<8x128xf32>
    %c8_22 = arith.constant 8 : index
    %c0_23 = arith.constant 0 : index
    %62 = vector.load %arg5[%c8_22, %c0_23] : memref<64x128xf32, #tpu.memory_space<vmem>>, vector<8x128xf32>
    tpu.vector_store %arg5[%c8_22, %c0_23], %61 {strides = array<i32>} : memref<64x128xf32, #tpu.memory_space<vmem>>, vector<8x128xf32>,
    %c16 = arith.constant 16 : index
    %c0_24 = arith.constant 0 : index
    %63 = vector.load %arg4[%c16, %c0_24] : memref<64x256xf32, #tpu.memory_space<vmem>>, vector<8x256xf32>
    %64 = vector.extract_strided_slice %61 {offsets = [0, 0], sizes = [8, 64], strides = [1, 1]} : vector<8x128xf32> to vector<8x64xf32>
    %cst_25 = arith.constant dense<0.000000e+00> : vector<8x256xf32>
    %65 = tpu.matmul %64, %10, %cst_25 {dimension_numbers = #tpu.dot_dimension_numbers<[1], [0], [0], [1], [0, 0, 1, 1], [], []>} : vector<8x64xf32>, vector<64x256xf32>, vector<8x256xf32> -> vector<8x256xf32>
    %66 = vector.extract_strided_slice %63 {offsets = [0, 0], sizes = [8, 128], strides = [1, 1]} : vector<8x256xf32> to vector<8x128xf32>
    %67 = vector.extract_strided_slice %65 {offsets = [0, 0], sizes = [8, 128], strides = [1, 1]} : vector<8x256xf32> to vector<8x128xf32>
    %68 = arith.addf %66, %67 : vector<8x128xf32>
    %69 = arith.negf %68 : vector<8x128xf32>
    %70 = math.exp %69 : vector<8x128xf32>
    %cst_26 = arith.constant 1.000000e+00 : f32
    %71 = vector.broadcast %cst_26 : f32 to vector<8x128xf32>
    %72 = arith.addf %71, %70 : vector<8x128xf32>
    %73 = arith.divf %71, %72 : vector<8x128xf32>
    %c64_i32_27 = arith.constant 64 : i32
    %74 = tpu.dynamic_rotate %73 by %c64_i32_27 dim 1 : vector<8x128xf32>, i32 -> vector<8x128xf32>
    %75 = vector.extract_strided_slice %65 {offsets = [0, 128], sizes = [8, 128], strides = [1, 1]} : vector<8x256xf32> to vector<8x128xf32>
    %76 = arith.addf %75, %13 : vector<8x128xf32>
    %77 = vector.extract_strided_slice %63 {offsets = [0, 128], sizes = [8, 128], strides = [1, 1]} : vector<8x256xf32> to vector<8x128xf32>
    %78 = arith.mulf %73, %76 : vector<8x128xf32>
    %79 = arith.addf %77, %78 : vector<8x128xf32>
    %80 = math.tanh %79 : vector<8x128xf32>
    %cst_28 = arith.constant 1.000000e+00 : f32
    %81 = vector.broadcast %cst_28 : f32 to vector<8x128xf32>
    %82 = arith.subf %81, %74 : vector<8x128xf32>
    %83 = arith.mulf %82, %80 : vector<8x128xf32>
    %84 = arith.mulf %74, %61 : vector<8x128xf32>
    %85 = arith.addf %83, %84 : vector<8x128xf32>
    %c16_29 = arith.constant 16 : index
    %c0_30 = arith.constant 0 : index
    %86 = vector.load %arg5[%c16_29, %c0_30] : memref<64x128xf32, #tpu.memory_space<vmem>>, vector<8x128xf32>
    tpu.vector_store %arg5[%c16_29, %c0_30], %85 {strides = array<i32>} : memref<64x128xf32, #tpu.memory_space<vmem>>, vector<8x128xf32>,
    %c24 = arith.constant 24 : index
    %c0_31 = arith.constant 0 : index
    %87 = vector.load %arg4[%c24, %c0_31] : memref<64x256xf32, #tpu.memory_space<vmem>>, vector<8x256xf32>
    %88 = vector.extract_strided_slice %85 {offsets = [0, 0], sizes = [8, 64], strides = [1, 1]} : vector<8x128xf32> to vector<8x64xf32>
    %cst_32 = arith.constant dense<0.000000e+00> : vector<8x256xf32>
    %89 = tpu.matmul %88, %10, %cst_32 {dimension_numbers = #tpu.dot_dimension_numbers<[1], [0], [0], [1], [0, 0, 1, 1], [], []>} : vector<8x64xf32>, vector<64x256xf32>, vector<8x256xf32> -> vector<8x256xf32>
    %90 = vector.extract_strided_slice %87 {offsets = [0, 0], sizes = [8, 128], strides = [1, 1]} : vector<8x256xf32> to vector<8x128xf32>
    %91 = vector.extract_strided_slice %89 {offsets = [0, 0], sizes = [8, 128], strides = [1, 1]} : vector<8x256xf32> to vector<8x128xf32>
    %92 = arith.addf %90, %91 : vector<8x128xf32>
    %93 = arith.negf %92 : vector<8x128xf32>
    %94 = math.exp %93 : vector<8x128xf32>
    %cst_33 = arith.constant 1.000000e+00 : f32
    %95 = vector.broadcast %cst_33 : f32 to vector<8x128xf32>
    %96 = arith.addf %95, %94 : vector<8x128xf32>
    %97 = arith.divf %95, %96 : vector<8x128xf32>
    %c64_i32_34 = arith.constant 64 : i32
    %98 = tpu.dynamic_rotate %97 by %c64_i32_34 dim 1 : vector<8x128xf32>, i32 -> vector<8x128xf32>
    %99 = vector.extract_strided_slice %89 {offsets = [0, 128], sizes = [8, 128], strides = [1, 1]} : vector<8x256xf32> to vector<8x128xf32>
    %100 = arith.addf %99, %13 : vector<8x128xf32>
    %101 = vector.extract_strided_slice %87 {offsets = [0, 128], sizes = [8, 128], strides = [1, 1]} : vector<8x256xf32> to vector<8x128xf32>
    %102 = arith.mulf %97, %100 : vector<8x128xf32>
    %103 = arith.addf %101, %102 : vector<8x128xf32>
    %104 = math.tanh %103 : vector<8x128xf32>
    %cst_35 = arith.constant 1.000000e+00 : f32
    %105 = vector.broadcast %cst_35 : f32 to vector<8x128xf32>
    %106 = arith.subf %105, %98 : vector<8x128xf32>
    %107 = arith.mulf %106, %104 : vector<8x128xf32>
    %108 = arith.mulf %98, %85 : vector<8x128xf32>
    %109 = arith.addf %107, %108 : vector<8x128xf32>
    %c24_36 = arith.constant 24 : index
    %c0_37 = arith.constant 0 : index
    %110 = vector.load %arg5[%c24_36, %c0_37] : memref<64x128xf32, #tpu.memory_space<vmem>>, vector<8x128xf32>
    tpu.vector_store %arg5[%c24_36, %c0_37], %109 {strides = array<i32>} : memref<64x128xf32, #tpu.memory_space<vmem>>, vector<8x128xf32>,
    %c32 = arith.constant 32 : index
    %c0_38 = arith.constant 0 : index
    %111 = vector.load %arg4[%c32, %c0_38] : memref<64x256xf32, #tpu.memory_space<vmem>>, vector<8x256xf32>
    %112 = vector.extract_strided_slice %109 {offsets = [0, 0], sizes = [8, 64], strides = [1, 1]} : vector<8x128xf32> to vector<8x64xf32>
    %cst_39 = arith.constant dense<0.000000e+00> : vector<8x256xf32>
    %113 = tpu.matmul %112, %10, %cst_39 {dimension_numbers = #tpu.dot_dimension_numbers<[1], [0], [0], [1], [0, 0, 1, 1], [], []>} : vector<8x64xf32>, vector<64x256xf32>, vector<8x256xf32> -> vector<8x256xf32>
    %114 = vector.extract_strided_slice %111 {offsets = [0, 0], sizes = [8, 128], strides = [1, 1]} : vector<8x256xf32> to vector<8x128xf32>
    %115 = vector.extract_strided_slice %113 {offsets = [0, 0], sizes = [8, 128], strides = [1, 1]} : vector<8x256xf32> to vector<8x128xf32>
    %116 = arith.addf %114, %115 : vector<8x128xf32>
    %117 = arith.negf %116 : vector<8x128xf32>
    %118 = math.exp %117 : vector<8x128xf32>
    %cst_40 = arith.constant 1.000000e+00 : f32
    %119 = vector.broadcast %cst_40 : f32 to vector<8x128xf32>
    %120 = arith.addf %119, %118 : vector<8x128xf32>
    %121 = arith.divf %119, %120 : vector<8x128xf32>
    %c64_i32_41 = arith.constant 64 : i32
    %122 = tpu.dynamic_rotate %121 by %c64_i32_41 dim 1 : vector<8x128xf32>, i32 -> vector<8x128xf32>
    %123 = vector.extract_strided_slice %113 {offsets = [0, 128], sizes = [8, 128], strides = [1, 1]} : vector<8x256xf32> to vector<8x128xf32>
    %124 = arith.addf %123, %13 : vector<8x128xf32>
    %125 = vector.extract_strided_slice %111 {offsets = [0, 128], sizes = [8, 128], strides = [1, 1]} : vector<8x256xf32> to vector<8x128xf32>
    %126 = arith.mulf %121, %124 : vector<8x128xf32>
    %127 = arith.addf %125, %126 : vector<8x128xf32>
    %128 = math.tanh %127 : vector<8x128xf32>
    %cst_42 = arith.constant 1.000000e+00 : f32
    %129 = vector.broadcast %cst_42 : f32 to vector<8x128xf32>
    %130 = arith.subf %129, %122 : vector<8x128xf32>
    %131 = arith.mulf %130, %128 : vector<8x128xf32>
    %132 = arith.mulf %122, %109 : vector<8x128xf32>
    %133 = arith.addf %131, %132 : vector<8x128xf32>
    %c32_43 = arith.constant 32 : index
    %c0_44 = arith.constant 0 : index
    %134 = vector.load %arg5[%c32_43, %c0_44] : memref<64x128xf32, #tpu.memory_space<vmem>>, vector<8x128xf32>
    tpu.vector_store %arg5[%c32_43, %c0_44], %133 {strides = array<i32>} : memref<64x128xf32, #tpu.memory_space<vmem>>, vector<8x128xf32>,
    %c40 = arith.constant 40 : index
    %c0_45 = arith.constant 0 : index
    %135 = vector.load %arg4[%c40, %c0_45] : memref<64x256xf32, #tpu.memory_space<vmem>>, vector<8x256xf32>
    %136 = vector.extract_strided_slice %133 {offsets = [0, 0], sizes = [8, 64], strides = [1, 1]} : vector<8x128xf32> to vector<8x64xf32>
    %cst_46 = arith.constant dense<0.000000e+00> : vector<8x256xf32>
    %137 = tpu.matmul %136, %10, %cst_46 {dimension_numbers = #tpu.dot_dimension_numbers<[1], [0], [0], [1], [0, 0, 1, 1], [], []>} : vector<8x64xf32>, vector<64x256xf32>, vector<8x256xf32> -> vector<8x256xf32>
    %138 = vector.extract_strided_slice %135 {offsets = [0, 0], sizes = [8, 128], strides = [1, 1]} : vector<8x256xf32> to vector<8x128xf32>
    %139 = vector.extract_strided_slice %137 {offsets = [0, 0], sizes = [8, 128], strides = [1, 1]} : vector<8x256xf32> to vector<8x128xf32>
    %140 = arith.addf %138, %139 : vector<8x128xf32>
    %141 = arith.negf %140 : vector<8x128xf32>
    %142 = math.exp %141 : vector<8x128xf32>
    %cst_47 = arith.constant 1.000000e+00 : f32
    %143 = vector.broadcast %cst_47 : f32 to vector<8x128xf32>
    %144 = arith.addf %143, %142 : vector<8x128xf32>
    %145 = arith.divf %143, %144 : vector<8x128xf32>
    %c64_i32_48 = arith.constant 64 : i32
    %146 = tpu.dynamic_rotate %145 by %c64_i32_48 dim 1 : vector<8x128xf32>, i32 -> vector<8x128xf32>
    %147 = vector.extract_strided_slice %137 {offsets = [0, 128], sizes = [8, 128], strides = [1, 1]} : vector<8x256xf32> to vector<8x128xf32>
    %148 = arith.addf %147, %13 : vector<8x128xf32>
    %149 = vector.extract_strided_slice %135 {offsets = [0, 128], sizes = [8, 128], strides = [1, 1]} : vector<8x256xf32> to vector<8x128xf32>
    %150 = arith.mulf %145, %148 : vector<8x128xf32>
    %151 = arith.addf %149, %150 : vector<8x128xf32>
    %152 = math.tanh %151 : vector<8x128xf32>
    %cst_49 = arith.constant 1.000000e+00 : f32
    %153 = vector.broadcast %cst_49 : f32 to vector<8x128xf32>
    %154 = arith.subf %153, %146 : vector<8x128xf32>
    %155 = arith.mulf %154, %152 : vector<8x128xf32>
    %156 = arith.mulf %146, %133 : vector<8x128xf32>
    %157 = arith.addf %155, %156 : vector<8x128xf32>
    %c40_50 = arith.constant 40 : index
    %c0_51 = arith.constant 0 : index
    %158 = vector.load %arg5[%c40_50, %c0_51] : memref<64x128xf32, #tpu.memory_space<vmem>>, vector<8x128xf32>
    tpu.vector_store %arg5[%c40_50, %c0_51], %157 {strides = array<i32>} : memref<64x128xf32, #tpu.memory_space<vmem>>, vector<8x128xf32>,
    %c48 = arith.constant 48 : index
    %c0_52 = arith.constant 0 : index
    %159 = vector.load %arg4[%c48, %c0_52] : memref<64x256xf32, #tpu.memory_space<vmem>>, vector<8x256xf32>
    %160 = vector.extract_strided_slice %157 {offsets = [0, 0], sizes = [8, 64], strides = [1, 1]} : vector<8x128xf32> to vector<8x64xf32>
    %cst_53 = arith.constant dense<0.000000e+00> : vector<8x256xf32>
    %161 = tpu.matmul %160, %10, %cst_53 {dimension_numbers = #tpu.dot_dimension_numbers<[1], [0], [0], [1], [0, 0, 1, 1], [], []>} : vector<8x64xf32>, vector<64x256xf32>, vector<8x256xf32> -> vector<8x256xf32>
    %162 = vector.extract_strided_slice %159 {offsets = [0, 0], sizes = [8, 128], strides = [1, 1]} : vector<8x256xf32> to vector<8x128xf32>
    %163 = vector.extract_strided_slice %161 {offsets = [0, 0], sizes = [8, 128], strides = [1, 1]} : vector<8x256xf32> to vector<8x128xf32>
    %164 = arith.addf %162, %163 : vector<8x128xf32>
    %165 = arith.negf %164 : vector<8x128xf32>
    %166 = math.exp %165 : vector<8x128xf32>
    %cst_54 = arith.constant 1.000000e+00 : f32
    %167 = vector.broadcast %cst_54 : f32 to vector<8x128xf32>
    %168 = arith.addf %167, %166 : vector<8x128xf32>
    %169 = arith.divf %167, %168 : vector<8x128xf32>
    %c64_i32_55 = arith.constant 64 : i32
    %170 = tpu.dynamic_rotate %169 by %c64_i32_55 dim 1 : vector<8x128xf32>, i32 -> vector<8x128xf32>
    %171 = vector.extract_strided_slice %161 {offsets = [0, 128], sizes = [8, 128], strides = [1, 1]} : vector<8x256xf32> to vector<8x128xf32>
    %172 = arith.addf %171, %13 : vector<8x128xf32>
    %173 = vector.extract_strided_slice %159 {offsets = [0, 128], sizes = [8, 128], strides = [1, 1]} : vector<8x256xf32> to vector<8x128xf32>
    %174 = arith.mulf %169, %172 : vector<8x128xf32>
    %175 = arith.addf %173, %174 : vector<8x128xf32>
    %176 = math.tanh %175 : vector<8x128xf32>
    %cst_56 = arith.constant 1.000000e+00 : f32
    %177 = vector.broadcast %cst_56 : f32 to vector<8x128xf32>
    %178 = arith.subf %177, %170 : vector<8x128xf32>
    %179 = arith.mulf %178, %176 : vector<8x128xf32>
    %180 = arith.mulf %170, %157 : vector<8x128xf32>
    %181 = arith.addf %179, %180 : vector<8x128xf32>
    %c48_57 = arith.constant 48 : index
    %c0_58 = arith.constant 0 : index
    %182 = vector.load %arg5[%c48_57, %c0_58] : memref<64x128xf32, #tpu.memory_space<vmem>>, vector<8x128xf32>
    tpu.vector_store %arg5[%c48_57, %c0_58], %181 {strides = array<i32>} : memref<64x128xf32, #tpu.memory_space<vmem>>, vector<8x128xf32>,
    %c56 = arith.constant 56 : index
    %c0_59 = arith.constant 0 : index
    %183 = vector.load %arg4[%c56, %c0_59] : memref<64x256xf32, #tpu.memory_space<vmem>>, vector<8x256xf32>
    %184 = vector.extract_strided_slice %181 {offsets = [0, 0], sizes = [8, 64], strides = [1, 1]} : vector<8x128xf32> to vector<8x64xf32>
    %cst_60 = arith.constant dense<0.000000e+00> : vector<8x256xf32>
    %185 = tpu.matmul %184, %10, %cst_60 {dimension_numbers = #tpu.dot_dimension_numbers<[1], [0], [0], [1], [0, 0, 1, 1], [], []>} : vector<8x64xf32>, vector<64x256xf32>, vector<8x256xf32> -> vector<8x256xf32>
    %186 = vector.extract_strided_slice %183 {offsets = [0, 0], sizes = [8, 128], strides = [1, 1]} : vector<8x256xf32> to vector<8x128xf32>
    %187 = vector.extract_strided_slice %185 {offsets = [0, 0], sizes = [8, 128], strides = [1, 1]} : vector<8x256xf32> to vector<8x128xf32>
    %188 = arith.addf %186, %187 : vector<8x128xf32>
    %189 = arith.negf %188 : vector<8x128xf32>
    %190 = math.exp %189 : vector<8x128xf32>
    %cst_61 = arith.constant 1.000000e+00 : f32
    %191 = vector.broadcast %cst_61 : f32 to vector<8x128xf32>
    %192 = arith.addf %191, %190 : vector<8x128xf32>
    %193 = arith.divf %191, %192 : vector<8x128xf32>
    %c64_i32_62 = arith.constant 64 : i32
    %194 = tpu.dynamic_rotate %193 by %c64_i32_62 dim 1 : vector<8x128xf32>, i32 -> vector<8x128xf32>
    %195 = vector.extract_strided_slice %185 {offsets = [0, 128], sizes = [8, 128], strides = [1, 1]} : vector<8x256xf32> to vector<8x128xf32>
    %196 = arith.addf %195, %13 : vector<8x128xf32>
    %197 = vector.extract_strided_slice %183 {offsets = [0, 128], sizes = [8, 128], strides = [1, 1]} : vector<8x256xf32> to vector<8x128xf32>
    %198 = arith.mulf %193, %196 : vector<8x128xf32>
    %199 = arith.addf %197, %198 : vector<8x128xf32>
    %200 = math.tanh %199 : vector<8x128xf32>
    %cst_63 = arith.constant 1.000000e+00 : f32
    %201 = vector.broadcast %cst_63 : f32 to vector<8x128xf32>
    %202 = arith.subf %201, %194 : vector<8x128xf32>
    %203 = arith.mulf %202, %200 : vector<8x128xf32>
    %204 = arith.mulf %194, %181 : vector<8x128xf32>
    %205 = arith.addf %203, %204 : vector<8x128xf32>
    %c56_64 = arith.constant 56 : index
    %c0_65 = arith.constant 0 : index
    %206 = vector.load %arg5[%c56_64, %c0_65] : memref<64x128xf32, #tpu.memory_space<vmem>>, vector<8x128xf32>
    tpu.vector_store %arg5[%c56_64, %c0_65], %205 {strides = array<i32>} : memref<64x128xf32, #tpu.memory_space<vmem>>, vector<8x128xf32>,
    %c0_66 = arith.constant 0 : index
    %c0_67 = arith.constant 0 : index
    %207 = vector.load %arg5[%c0_66, %c0_67] : memref<64x128xf32, #tpu.memory_space<vmem>>, vector<64x128xf32>
    %208 = vector.extract_strided_slice %207 {offsets = [0, 0], sizes = [64, 64], strides = [1, 1]} : vector<64x128xf32> to vector<64x64xf32>
    %c3 = arith.constant 3 : index
    %c0_68 = arith.constant 0 : index
    %c0_69 = arith.constant 0 : index
    %209 = vector.load %arg1[%c3, %c0_68, %c0_69] : memref<6x64x256xf32, #tpu.memory_space<vmem>>, vector<1x64x256xf32>
    %210 = vector.shape_cast %209 : vector<1x64x256xf32> to vector<64x256xf32>
    %cst_70 = arith.constant dense<0.000000e+00> : vector<64x256xf32>
    %211 = tpu.matmul %208, %210, %cst_70 {dimension_numbers = #tpu.dot_dimension_numbers<[1], [0], [0], [1], [0, 0, 1, 1], [], []>} : vector<64x64xf32>, vector<64x256xf32>, vector<64x256xf32> -> vector<64x256xf32>
    %c2 = arith.constant 2 : index
    %c0_71 = arith.constant 0 : index
    %212 = vector.load %arg2[%c2, %c0_71] : memref<8x256xf32, #tpu.memory_space<vmem>>, vector<1x256xf32>
    %213 = vector.broadcast %212 : vector<1x256xf32> to vector<64x256xf32>
    %214 = arith.addf %211, %213 : vector<64x256xf32>
    %c0_72 = arith.constant 0 : index
    %c0_73 = arith.constant 0 : index
    %215 = vector.load %arg4[%c0_72, %c0_73] : memref<64x256xf32, #tpu.memory_space<vmem>>, vector<64x256xf32>
    tpu.vector_store %arg4[%c0_72, %c0_73], %214 {strides = array<i32>} : memref<64x256xf32, #tpu.memory_space<vmem>>, vector<64x256xf32>,
    %c1_74 = arith.constant 1 : index
    %c0_75 = arith.constant 0 : index
    %c0_76 = arith.constant 0 : index
    %216 = vector.load %arg1[%c1_74, %c0_75, %c0_76] : memref<6x64x256xf32, #tpu.memory_space<vmem>>, vector<1x64x256xf32>
    %217 = vector.shape_cast %216 : vector<1x64x256xf32> to vector<64x256xf32>
    %c5 = arith.constant 5 : index
    %c0_77 = arith.constant 0 : index
    %218 = vector.load %arg2[%c5, %c0_77] : memref<8x256xf32, #tpu.memory_space<vmem>>, vector<1x128xf32>
    %219 = vector.shape_cast %218 : vector<1x128xf32> to vector<1x128xf32>
    %220 = vector.broadcast %219 : vector<1x128xf32> to vector<8x128xf32>
    %cst_78 = arith.constant 0.000000e+00 : f32
    %221 = vector.broadcast %cst_78 : f32 to vector<8x128xf32>
    %c0_79 = arith.constant 0 : index
    %c0_80 = arith.constant 0 : index
    %222 = vector.load %arg4[%c0_79, %c0_80] : memref<64x256xf32, #tpu.memory_space<vmem>>, vector<8x256xf32>
    %223 = vector.extract_strided_slice %221 {offsets = [0, 0], sizes = [8, 64], strides = [1, 1]} : vector<8x128xf32> to vector<8x64xf32>
    %cst_81 = arith.constant dense<0.000000e+00> : vector<8x256xf32>
    %224 = tpu.matmul %223, %217, %cst_81 {dimension_numbers = #tpu.dot_dimension_numbers<[1], [0], [0], [1], [0, 0, 1, 1], [], []>} : vector<8x64xf32>, vector<64x256xf32>, vector<8x256xf32> -> vector<8x256xf32>
    %225 = vector.extract_strided_slice %222 {offsets = [0, 0], sizes = [8, 128], strides = [1, 1]} : vector<8x256xf32> to vector<8x128xf32>
    %226 = vector.extract_strided_slice %224 {offsets = [0, 0], sizes = [8, 128], strides = [1, 1]} : vector<8x256xf32> to vector<8x128xf32>
    %227 = arith.addf %225, %226 : vector<8x128xf32>
    %228 = arith.negf %227 : vector<8x128xf32>
    %229 = math.exp %228 : vector<8x128xf32>
    %cst_82 = arith.constant 1.000000e+00 : f32
    %230 = vector.broadcast %cst_82 : f32 to vector<8x128xf32>
    %231 = arith.addf %230, %229 : vector<8x128xf32>
    %232 = arith.divf %230, %231 : vector<8x128xf32>
    %c64_i32_83 = arith.constant 64 : i32
    %233 = tpu.dynamic_rotate %232 by %c64_i32_83 dim 1 : vector<8x128xf32>, i32 -> vector<8x128xf32>
    %234 = vector.extract_strided_slice %224 {offsets = [0, 128], sizes = [8, 128], strides = [1, 1]} : vector<8x256xf32> to vector<8x128xf32>
    %235 = arith.addf %234, %220 : vector<8x128xf32>
    %236 = vector.extract_strided_slice %222 {offsets = [0, 128], sizes = [8, 128], strides = [1, 1]} : vector<8x256xf32> to vector<8x128xf32>
    %237 = arith.mulf %232, %235 : vector<8x128xf32>
    %238 = arith.addf %236, %237 : vector<8x128xf32>
    %239 = math.tanh %238 : vector<8x128xf32>
    %cst_84 = arith.constant 1.000000e+00 : f32
    %240 = vector.broadcast %cst_84 : f32 to vector<8x128xf32>
    %241 = arith.subf %240, %233 : vector<8x128xf32>
    %242 = arith.mulf %241, %239 : vector<8x128xf32>
    %243 = arith.mulf %233, %221 : vector<8x128xf32>
    %244 = arith.addf %242, %243 : vector<8x128xf32>
    %c0_85 = arith.constant 0 : index
    %c0_86 = arith.constant 0 : index
    %245 = vector.load %arg5[%c0_85, %c0_86] : memref<64x128xf32, #tpu.memory_space<vmem>>, vector<8x128xf32>
    tpu.vector_store %arg5[%c0_85, %c0_86], %244 {strides = array<i32>} : memref<64x128xf32, #tpu.memory_space<vmem>>, vector<8x128xf32>,
    %c8_87 = arith.constant 8 : index
    %c0_88 = arith.constant 0 : index
    %246 = vector.load %arg4[%c8_87, %c0_88] : memref<64x256xf32, #tpu.memory_space<vmem>>, vector<8x256xf32>
    %247 = vector.extract_strided_slice %244 {offsets = [0, 0], sizes = [8, 64], strides = [1, 1]} : vector<8x128xf32> to vector<8x64xf32>
    %cst_89 = arith.constant dense<0.000000e+00> : vector<8x256xf32>
    %248 = tpu.matmul %247, %217, %cst_89 {dimension_numbers = #tpu.dot_dimension_numbers<[1], [0], [0], [1], [0, 0, 1, 1], [], []>} : vector<8x64xf32>, vector<64x256xf32>, vector<8x256xf32> -> vector<8x256xf32>
    %249 = vector.extract_strided_slice %246 {offsets = [0, 0], sizes = [8, 128], strides = [1, 1]} : vector<8x256xf32> to vector<8x128xf32>
    %250 = vector.extract_strided_slice %248 {offsets = [0, 0], sizes = [8, 128], strides = [1, 1]} : vector<8x256xf32> to vector<8x128xf32>
    %251 = arith.addf %249, %250 : vector<8x128xf32>
    %252 = arith.negf %251 : vector<8x128xf32>
    %253 = math.exp %252 : vector<8x128xf32>
    %cst_90 = arith.constant 1.000000e+00 : f32
    %254 = vector.broadcast %cst_90 : f32 to vector<8x128xf32>
    %255 = arith.addf %254, %253 : vector<8x128xf32>
    %256 = arith.divf %254, %255 : vector<8x128xf32>
    %c64_i32_91 = arith.constant 64 : i32
    %257 = tpu.dynamic_rotate %256 by %c64_i32_91 dim 1 : vector<8x128xf32>, i32 -> vector<8x128xf32>
    %258 = vector.extract_strided_slice %248 {offsets = [0, 128], sizes = [8, 128], strides = [1, 1]} : vector<8x256xf32> to vector<8x128xf32>
    %259 = arith.addf %258, %220 : vector<8x128xf32>
    %260 = vector.extract_strided_slice %246 {offsets = [0, 128], sizes = [8, 128], strides = [1, 1]} : vector<8x256xf32> to vector<8x128xf32>
    %261 = arith.mulf %256, %259 : vector<8x128xf32>
    %262 = arith.addf %260, %261 : vector<8x128xf32>
    %263 = math.tanh %262 : vector<8x128xf32>
    %cst_92 = arith.constant 1.000000e+00 : f32
    %264 = vector.broadcast %cst_92 : f32 to vector<8x128xf32>
    %265 = arith.subf %264, %257 : vector<8x128xf32>
    %266 = arith.mulf %265, %263 : vector<8x128xf32>
    %267 = arith.mulf %257, %244 : vector<8x128xf32>
    %268 = arith.addf %266, %267 : vector<8x128xf32>
    %c8_93 = arith.constant 8 : index
    %c0_94 = arith.constant 0 : index
    %269 = vector.load %arg5[%c8_93, %c0_94] : memref<64x128xf32, #tpu.memory_space<vmem>>, vector<8x128xf32>
    tpu.vector_store %arg5[%c8_93, %c0_94], %268 {strides = array<i32>} : memref<64x128xf32, #tpu.memory_space<vmem>>, vector<8x128xf32>,
    %c16_95 = arith.constant 16 : index
    %c0_96 = arith.constant 0 : index
    %270 = vector.load %arg4[%c16_95, %c0_96] : memref<64x256xf32, #tpu.memory_space<vmem>>, vector<8x256xf32>
    %271 = vector.extract_strided_slice %268 {offsets = [0, 0], sizes = [8, 64], strides = [1, 1]} : vector<8x128xf32> to vector<8x64xf32>
    %cst_97 = arith.constant dense<0.000000e+00> : vector<8x256xf32>
    %272 = tpu.matmul %271, %217, %cst_97 {dimension_numbers = #tpu.dot_dimension_numbers<[1], [0], [0], [1], [0, 0, 1, 1], [], []>} : vector<8x64xf32>, vector<64x256xf32>, vector<8x256xf32> -> vector<8x256xf32>
    %273 = vector.extract_strided_slice %270 {offsets = [0, 0], sizes = [8, 128], strides = [1, 1]} : vector<8x256xf32> to vector<8x128xf32>
    %274 = vector.extract_strided_slice %272 {offsets = [0, 0], sizes = [8, 128], strides = [1, 1]} : vector<8x256xf32> to vector<8x128xf32>
    %275 = arith.addf %273, %274 : vector<8x128xf32>
    %276 = arith.negf %275 : vector<8x128xf32>
    %277 = math.exp %276 : vector<8x128xf32>
    %cst_98 = arith.constant 1.000000e+00 : f32
    %278 = vector.broadcast %cst_98 : f32 to vector<8x128xf32>
    %279 = arith.addf %278, %277 : vector<8x128xf32>
    %280 = arith.divf %278, %279 : vector<8x128xf32>
    %c64_i32_99 = arith.constant 64 : i32
    %281 = tpu.dynamic_rotate %280 by %c64_i32_99 dim 1 : vector<8x128xf32>, i32 -> vector<8x128xf32>
    %282 = vector.extract_strided_slice %272 {offsets = [0, 128], sizes = [8, 128], strides = [1, 1]} : vector<8x256xf32> to vector<8x128xf32>
    %283 = arith.addf %282, %220 : vector<8x128xf32>
    %284 = vector.extract_strided_slice %270 {offsets = [0, 128], sizes = [8, 128], strides = [1, 1]} : vector<8x256xf32> to vector<8x128xf32>
    %285 = arith.mulf %280, %283 : vector<8x128xf32>
    %286 = arith.addf %284, %285 : vector<8x128xf32>
    %287 = math.tanh %286 : vector<8x128xf32>
    %cst_100 = arith.constant 1.000000e+00 : f32
    %288 = vector.broadcast %cst_100 : f32 to vector<8x128xf32>
    %289 = arith.subf %288, %281 : vector<8x128xf32>
    %290 = arith.mulf %289, %287 : vector<8x128xf32>
    %291 = arith.mulf %281, %268 : vector<8x128xf32>
    %292 = arith.addf %290, %291 : vector<8x128xf32>
    %c16_101 = arith.constant 16 : index
    %c0_102 = arith.constant 0 : index
    %293 = vector.load %arg5[%c16_101, %c0_102] : memref<64x128xf32, #tpu.memory_space<vmem>>, vector<8x128xf32>
    tpu.vector_store %arg5[%c16_101, %c0_102], %292 {strides = array<i32>} : memref<64x128xf32, #tpu.memory_space<vmem>>, vector<8x128xf32>,
    %c24_103 = arith.constant 24 : index
    %c0_104 = arith.constant 0 : index
    %294 = vector.load %arg4[%c24_103, %c0_104] : memref<64x256xf32, #tpu.memory_space<vmem>>, vector<8x256xf32>
    %295 = vector.extract_strided_slice %292 {offsets = [0, 0], sizes = [8, 64], strides = [1, 1]} : vector<8x128xf32> to vector<8x64xf32>
    %cst_105 = arith.constant dense<0.000000e+00> : vector<8x256xf32>
    %296 = tpu.matmul %295, %217, %cst_105 {dimension_numbers = #tpu.dot_dimension_numbers<[1], [0], [0], [1], [0, 0, 1, 1], [], []>} : vector<8x64xf32>, vector<64x256xf32>, vector<8x256xf32> -> vector<8x256xf32>
    %297 = vector.extract_strided_slice %294 {offsets = [0, 0], sizes = [8, 128], strides = [1, 1]} : vector<8x256xf32> to vector<8x128xf32>
    %298 = vector.extract_strided_slice %296 {offsets = [0, 0], sizes = [8, 128], strides = [1, 1]} : vector<8x256xf32> to vector<8x128xf32>
    %299 = arith.addf %297, %298 : vector<8x128xf32>
    %300 = arith.negf %299 : vector<8x128xf32>
    %301 = math.exp %300 : vector<8x128xf32>
    %cst_106 = arith.constant 1.000000e+00 : f32
    %302 = vector.broadcast %cst_106 : f32 to vector<8x128xf32>
    %303 = arith.addf %302, %301 : vector<8x128xf32>
    %304 = arith.divf %302, %303 : vector<8x128xf32>
    %c64_i32_107 = arith.constant 64 : i32
    %305 = tpu.dynamic_rotate %304 by %c64_i32_107 dim 1 : vector<8x128xf32>, i32 -> vector<8x128xf32>
    %306 = vector.extract_strided_slice %296 {offsets = [0, 128], sizes = [8, 128], strides = [1, 1]} : vector<8x256xf32> to vector<8x128xf32>
    %307 = arith.addf %306, %220 : vector<8x128xf32>
    %308 = vector.extract_strided_slice %294 {offsets = [0, 128], sizes = [8, 128], strides = [1, 1]} : vector<8x256xf32> to vector<8x128xf32>
    %309 = arith.mulf %304, %307 : vector<8x128xf32>
    %310 = arith.addf %308, %309 : vector<8x128xf32>
    %311 = math.tanh %310 : vector<8x128xf32>
    %cst_108 = arith.constant 1.000000e+00 : f32
    %312 = vector.broadcast %cst_108 : f32 to vector<8x128xf32>
    %313 = arith.subf %312, %305 : vector<8x128xf32>
    %314 = arith.mulf %313, %311 : vector<8x128xf32>
    %315 = arith.mulf %305, %292 : vector<8x128xf32>
    %316 = arith.addf %314, %315 : vector<8x128xf32>
    %c24_109 = arith.constant 24 : index
    %c0_110 = arith.constant 0 : index
    %317 = vector.load %arg5[%c24_109, %c0_110] : memref<64x128xf32, #tpu.memory_space<vmem>>, vector<8x128xf32>
    tpu.vector_store %arg5[%c24_109, %c0_110], %316 {strides = array<i32>} : memref<64x128xf32, #tpu.memory_space<vmem>>, vector<8x128xf32>,
    %c32_111 = arith.constant 32 : index
    %c0_112 = arith.constant 0 : index
    %318 = vector.load %arg4[%c32_111, %c0_112] : memref<64x256xf32, #tpu.memory_space<vmem>>, vector<8x256xf32>
    %319 = vector.extract_strided_slice %316 {offsets = [0, 0], sizes = [8, 64], strides = [1, 1]} : vector<8x128xf32> to vector<8x64xf32>
    %cst_113 = arith.constant dense<0.000000e+00> : vector<8x256xf32>
    %320 = tpu.matmul %319, %217, %cst_113 {dimension_numbers = #tpu.dot_dimension_numbers<[1], [0], [0], [1], [0, 0, 1, 1], [], []>} : vector<8x64xf32>, vector<64x256xf32>, vector<8x256xf32> -> vector<8x256xf32>
    %321 = vector.extract_strided_slice %318 {offsets = [0, 0], sizes = [8, 128], strides = [1, 1]} : vector<8x256xf32> to vector<8x128xf32>
    %322 = vector.extract_strided_slice %320 {offsets = [0, 0], sizes = [8, 128], strides = [1, 1]} : vector<8x256xf32> to vector<8x128xf32>
    %323 = arith.addf %321, %322 : vector<8x128xf32>
    %324 = arith.negf %323 : vector<8x128xf32>
    %325 = math.exp %324 : vector<8x128xf32>
    %cst_114 = arith.constant 1.000000e+00 : f32
    %326 = vector.broadcast %cst_114 : f32 to vector<8x128xf32>
    %327 = arith.addf %326, %325 : vector<8x128xf32>
    %328 = arith.divf %326, %327 : vector<8x128xf32>
    %c64_i32_115 = arith.constant 64 : i32
    %329 = tpu.dynamic_rotate %328 by %c64_i32_115 dim 1 : vector<8x128xf32>, i32 -> vector<8x128xf32>
    %330 = vector.extract_strided_slice %320 {offsets = [0, 128], sizes = [8, 128], strides = [1, 1]} : vector<8x256xf32> to vector<8x128xf32>
    %331 = arith.addf %330, %220 : vector<8x128xf32>
    %332 = vector.extract_strided_slice %318 {offsets = [0, 128], sizes = [8, 128], strides = [1, 1]} : vector<8x256xf32> to vector<8x128xf32>
    %333 = arith.mulf %328, %331 : vector<8x128xf32>
    %334 = arith.addf %332, %333 : vector<8x128xf32>
    %335 = math.tanh %334 : vector<8x128xf32>
    %cst_116 = arith.constant 1.000000e+00 : f32
    %336 = vector.broadcast %cst_116 : f32 to vector<8x128xf32>
    %337 = arith.subf %336, %329 : vector<8x128xf32>
    %338 = arith.mulf %337, %335 : vector<8x128xf32>
    %339 = arith.mulf %329, %316 : vector<8x128xf32>
    %340 = arith.addf %338, %339 : vector<8x128xf32>
    %c32_117 = arith.constant 32 : index
    %c0_118 = arith.constant 0 : index
    %341 = vector.load %arg5[%c32_117, %c0_118] : memref<64x128xf32, #tpu.memory_space<vmem>>, vector<8x128xf32>
    tpu.vector_store %arg5[%c32_117, %c0_118], %340 {strides = array<i32>} : memref<64x128xf32, #tpu.memory_space<vmem>>, vector<8x128xf32>,
    %c40_119 = arith.constant 40 : index
    %c0_120 = arith.constant 0 : index
    %342 = vector.load %arg4[%c40_119, %c0_120] : memref<64x256xf32, #tpu.memory_space<vmem>>, vector<8x256xf32>
    %343 = vector.extract_strided_slice %340 {offsets = [0, 0], sizes = [8, 64], strides = [1, 1]} : vector<8x128xf32> to vector<8x64xf32>
    %cst_121 = arith.constant dense<0.000000e+00> : vector<8x256xf32>
    %344 = tpu.matmul %343, %217, %cst_121 {dimension_numbers = #tpu.dot_dimension_numbers<[1], [0], [0], [1], [0, 0, 1, 1], [], []>} : vector<8x64xf32>, vector<64x256xf32>, vector<8x256xf32> -> vector<8x256xf32>
    %345 = vector.extract_strided_slice %342 {offsets = [0, 0], sizes = [8, 128], strides = [1, 1]} : vector<8x256xf32> to vector<8x128xf32>
    %346 = vector.extract_strided_slice %344 {offsets = [0, 0], sizes = [8, 128], strides = [1, 1]} : vector<8x256xf32> to vector<8x128xf32>
    %347 = arith.addf %345, %346 : vector<8x128xf32>
    %348 = arith.negf %347 : vector<8x128xf32>
    %349 = math.exp %348 : vector<8x128xf32>
    %cst_122 = arith.constant 1.000000e+00 : f32
    %350 = vector.broadcast %cst_122 : f32 to vector<8x128xf32>
    %351 = arith.addf %350, %349 : vector<8x128xf32>
    %352 = arith.divf %350, %351 : vector<8x128xf32>
    %c64_i32_123 = arith.constant 64 : i32
    %353 = tpu.dynamic_rotate %352 by %c64_i32_123 dim 1 : vector<8x128xf32>, i32 -> vector<8x128xf32>
    %354 = vector.extract_strided_slice %344 {offsets = [0, 128], sizes = [8, 128], strides = [1, 1]} : vector<8x256xf32> to vector<8x128xf32>
    %355 = arith.addf %354, %220 : vector<8x128xf32>
    %356 = vector.extract_strided_slice %342 {offsets = [0, 128], sizes = [8, 128], strides = [1, 1]} : vector<8x256xf32> to vector<8x128xf32>
    %357 = arith.mulf %352, %355 : vector<8x128xf32>
    %358 = arith.addf %356, %357 : vector<8x128xf32>
    %359 = math.tanh %358 : vector<8x128xf32>
    %cst_124 = arith.constant 1.000000e+00 : f32
    %360 = vector.broadcast %cst_124 : f32 to vector<8x128xf32>
    %361 = arith.subf %360, %353 : vector<8x128xf32>
    %362 = arith.mulf %361, %359 : vector<8x128xf32>
    %363 = arith.mulf %353, %340 : vector<8x128xf32>
    %364 = arith.addf %362, %363 : vector<8x128xf32>
    %c40_125 = arith.constant 40 : index
    %c0_126 = arith.constant 0 : index
    %365 = vector.load %arg5[%c40_125, %c0_126] : memref<64x128xf32, #tpu.memory_space<vmem>>, vector<8x128xf32>
    tpu.vector_store %arg5[%c40_125, %c0_126], %364 {strides = array<i32>} : memref<64x128xf32, #tpu.memory_space<vmem>>, vector<8x128xf32>,
    %c48_127 = arith.constant 48 : index
    %c0_128 = arith.constant 0 : index
    %366 = vector.load %arg4[%c48_127, %c0_128] : memref<64x256xf32, #tpu.memory_space<vmem>>, vector<8x256xf32>
    %367 = vector.extract_strided_slice %364 {offsets = [0, 0], sizes = [8, 64], strides = [1, 1]} : vector<8x128xf32> to vector<8x64xf32>
    %cst_129 = arith.constant dense<0.000000e+00> : vector<8x256xf32>
    %368 = tpu.matmul %367, %217, %cst_129 {dimension_numbers = #tpu.dot_dimension_numbers<[1], [0], [0], [1], [0, 0, 1, 1], [], []>} : vector<8x64xf32>, vector<64x256xf32>, vector<8x256xf32> -> vector<8x256xf32>
    %369 = vector.extract_strided_slice %366 {offsets = [0, 0], sizes = [8, 128], strides = [1, 1]} : vector<8x256xf32> to vector<8x128xf32>
    %370 = vector.extract_strided_slice %368 {offsets = [0, 0], sizes = [8, 128], strides = [1, 1]} : vector<8x256xf32> to vector<8x128xf32>
    %371 = arith.addf %369, %370 : vector<8x128xf32>
    %372 = arith.negf %371 : vector<8x128xf32>
    %373 = math.exp %372 : vector<8x128xf32>
    %cst_130 = arith.constant 1.000000e+00 : f32
    %374 = vector.broadcast %cst_130 : f32 to vector<8x128xf32>
    %375 = arith.addf %374, %373 : vector<8x128xf32>
    %376 = arith.divf %374, %375 : vector<8x128xf32>
    %c64_i32_131 = arith.constant 64 : i32
    %377 = tpu.dynamic_rotate %376 by %c64_i32_131 dim 1 : vector<8x128xf32>, i32 -> vector<8x128xf32>
    %378 = vector.extract_strided_slice %368 {offsets = [0, 128], sizes = [8, 128], strides = [1, 1]} : vector<8x256xf32> to vector<8x128xf32>
    %379 = arith.addf %378, %220 : vector<8x128xf32>
    %380 = vector.extract_strided_slice %366 {offsets = [0, 128], sizes = [8, 128], strides = [1, 1]} : vector<8x256xf32> to vector<8x128xf32>
    %381 = arith.mulf %376, %379 : vector<8x128xf32>
    %382 = arith.addf %380, %381 : vector<8x128xf32>
    %383 = math.tanh %382 : vector<8x128xf32>
    %cst_132 = arith.constant 1.000000e+00 : f32
    %384 = vector.broadcast %cst_132 : f32 to vector<8x128xf32>
    %385 = arith.subf %384, %377 : vector<8x128xf32>
    %386 = arith.mulf %385, %383 : vector<8x128xf32>
    %387 = arith.mulf %377, %364 : vector<8x128xf32>
    %388 = arith.addf %386, %387 : vector<8x128xf32>
    %c48_133 = arith.constant 48 : index
    %c0_134 = arith.constant 0 : index
    %389 = vector.load %arg5[%c48_133, %c0_134] : memref<64x128xf32, #tpu.memory_space<vmem>>, vector<8x128xf32>
    tpu.vector_store %arg5[%c48_133, %c0_134], %388 {strides = array<i32>} : memref<64x128xf32, #tpu.memory_space<vmem>>, vector<8x128xf32>,
    %c56_135 = arith.constant 56 : index
    %c0_136 = arith.constant 0 : index
    %390 = vector.load %arg4[%c56_135, %c0_136] : memref<64x256xf32, #tpu.memory_space<vmem>>, vector<8x256xf32>
    %391 = vector.extract_strided_slice %388 {offsets = [0, 0], sizes = [8, 64], strides = [1, 1]} : vector<8x128xf32> to vector<8x64xf32>
    %cst_137 = arith.constant dense<0.000000e+00> : vector<8x256xf32>
    %392 = tpu.matmul %391, %217, %cst_137 {dimension_numbers = #tpu.dot_dimension_numbers<[1], [0], [0], [1], [0, 0, 1, 1], [], []>} : vector<8x64xf32>, vector<64x256xf32>, vector<8x256xf32> -> vector<8x256xf32>
    %393 = vector.extract_strided_slice %390 {offsets = [0, 0], sizes = [8, 128], strides = [1, 1]} : vector<8x256xf32> to vector<8x128xf32>
    %394 = vector.extract_strided_slice %392 {offsets = [0, 0], sizes = [8, 128], strides = [1, 1]} : vector<8x256xf32> to vector<8x128xf32>
    %395 = arith.addf %393, %394 : vector<8x128xf32>
    %396 = arith.negf %395 : vector<8x128xf32>
    %397 = math.exp %396 : vector<8x128xf32>
    %cst_138 = arith.constant 1.000000e+00 : f32
    %398 = vector.broadcast %cst_138 : f32 to vector<8x128xf32>
    %399 = arith.addf %398, %397 : vector<8x128xf32>
    %400 = arith.divf %398, %399 : vector<8x128xf32>
    %c64_i32_139 = arith.constant 64 : i32
    %401 = tpu.dynamic_rotate %400 by %c64_i32_139 dim 1 : vector<8x128xf32>, i32 -> vector<8x128xf32>
    %402 = vector.extract_strided_slice %392 {offsets = [0, 128], sizes = [8, 128], strides = [1, 1]} : vector<8x256xf32> to vector<8x128xf32>
    %403 = arith.addf %402, %220 : vector<8x128xf32>
    %404 = vector.extract_strided_slice %390 {offsets = [0, 128], sizes = [8, 128], strides = [1, 1]} : vector<8x256xf32> to vector<8x128xf32>
    %405 = arith.mulf %400, %403 : vector<8x128xf32>
    %406 = arith.addf %404, %405 : vector<8x128xf32>
    %407 = math.tanh %406 : vector<8x128xf32>
    %cst_140 = arith.constant 1.000000e+00 : f32
    %408 = vector.broadcast %cst_140 : f32 to vector<8x128xf32>
    %409 = arith.subf %408, %401 : vector<8x128xf32>
    %410 = arith.mulf %409, %407 : vector<8x128xf32>
    %411 = arith.mulf %401, %388 : vector<8x128xf32>
    %412 = arith.addf %410, %411 : vector<8x128xf32>
    %c56_141 = arith.constant 56 : index
    %c0_142 = arith.constant 0 : index
    %413 = vector.load %arg5[%c56_141, %c0_142] : memref<64x128xf32, #tpu.memory_space<vmem>>, vector<8x128xf32>
    tpu.vector_store %arg5[%c56_141, %c0_142], %412 {strides = array<i32>} : memref<64x128xf32, #tpu.memory_space<vmem>>, vector<8x128xf32>,
    %c0_143 = arith.constant 0 : index
    %c0_144 = arith.constant 0 : index
    %414 = vector.load %arg5[%c0_143, %c0_144] : memref<64x128xf32, #tpu.memory_space<vmem>>, vector<64x128xf32>
    %415 = vector.extract_strided_slice %414 {offsets = [0, 0], sizes = [64, 64], strides = [1, 1]} : vector<64x128xf32> to vector<64x64xf32>
    %c4_145 = arith.constant 4 : index
    %c0_146 = arith.constant 0 : index
    %c0_147 = arith.constant 0 : index
    %416 = vector.load %arg1[%c4_145, %c0_146, %c0_147] : memref<6x64x256xf32, #tpu.memory_space<vmem>>, vector<1x64x256xf32>
    %417 = vector.shape_cast %416 : vector<1x64x256xf32> to vector<64x256xf32>
    %cst_148 = arith.constant dense<0.000000e+00> : vector<64x256xf32>
    %418 = tpu.matmul %415, %417, %cst_148 {dimension_numbers = #tpu.dot_dimension_numbers<[1], [0], [0], [1], [0, 0, 1, 1], [], []>} : vector<64x64xf32>, vector<64x256xf32>, vector<64x256xf32> -> vector<64x256xf32>
    %c3_149 = arith.constant 3 : index
    %c0_150 = arith.constant 0 : index
    %419 = vector.load %arg2[%c3_149, %c0_150] : memref<8x256xf32, #tpu.memory_space<vmem>>, vector<1x256xf32>
    %420 = vector.broadcast %419 : vector<1x256xf32> to vector<64x256xf32>
    %421 = arith.addf %418, %420 : vector<64x256xf32>
    %c0_151 = arith.constant 0 : index
    %c0_152 = arith.constant 0 : index
    %422 = vector.load %arg4[%c0_151, %c0_152] : memref<64x256xf32, #tpu.memory_space<vmem>>, vector<64x256xf32>
    tpu.vector_store %arg4[%c0_151, %c0_152], %421 {strides = array<i32>} : memref<64x256xf32, #tpu.memory_space<vmem>>, vector<64x256xf32>,
    %c2_153 = arith.constant 2 : index
    %c0_154 = arith.constant 0 : index
    %c0_155 = arith.constant 0 : index
    %423 = vector.load %arg1[%c2_153, %c0_154, %c0_155] : memref<6x64x256xf32, #tpu.memory_space<vmem>>, vector<1x64x256xf32>
    %424 = vector.shape_cast %423 : vector<1x64x256xf32> to vector<64x256xf32>
    %c6 = arith.constant 6 : index
    %c0_156 = arith.constant 0 : index
    %425 = vector.load %arg2[%c6, %c0_156] : memref<8x256xf32, #tpu.memory_space<vmem>>, vector<1x128xf32>
    %426 = vector.shape_cast %425 : vector<1x128xf32> to vector<1x128xf32>
    %427 = vector.broadcast %426 : vector<1x128xf32> to vector<8x128xf32>
    %cst_157 = arith.constant 0.000000e+00 : f32
    %428 = vector.broadcast %cst_157 : f32 to vector<8x128xf32>
    %c0_158 = arith.constant 0 : index
    %c0_159 = arith.constant 0 : index
    %429 = vector.load %arg4[%c0_158, %c0_159] : memref<64x256xf32, #tpu.memory_space<vmem>>, vector<8x256xf32>
    %430 = vector.extract_strided_slice %428 {offsets = [0, 0], sizes = [8, 64], strides = [1, 1]} : vector<8x128xf32> to vector<8x64xf32>
    %cst_160 = arith.constant dense<0.000000e+00> : vector<8x256xf32>
    %431 = tpu.matmul %430, %424, %cst_160 {dimension_numbers = #tpu.dot_dimension_numbers<[1], [0], [0], [1], [0, 0, 1, 1], [], []>} : vector<8x64xf32>, vector<64x256xf32>, vector<8x256xf32> -> vector<8x256xf32>
    %432 = vector.extract_strided_slice %429 {offsets = [0, 0], sizes = [8, 128], strides = [1, 1]} : vector<8x256xf32> to vector<8x128xf32>
    %433 = vector.extract_strided_slice %431 {offsets = [0, 0], sizes = [8, 128], strides = [1, 1]} : vector<8x256xf32> to vector<8x128xf32>
    %434 = arith.addf %432, %433 : vector<8x128xf32>
    %435 = arith.negf %434 : vector<8x128xf32>
    %436 = math.exp %435 : vector<8x128xf32>
    %cst_161 = arith.constant 1.000000e+00 : f32
    %437 = vector.broadcast %cst_161 : f32 to vector<8x128xf32>
    %438 = arith.addf %437, %436 : vector<8x128xf32>
    %439 = arith.divf %437, %438 : vector<8x128xf32>
    %c64_i32_162 = arith.constant 64 : i32
    %440 = tpu.dynamic_rotate %439 by %c64_i32_162 dim 1 : vector<8x128xf32>, i32 -> vector<8x128xf32>
    %441 = vector.extract_strided_slice %431 {offsets = [0, 128], sizes = [8, 128], strides = [1, 1]} : vector<8x256xf32> to vector<8x128xf32>
    %442 = arith.addf %441, %427 : vector<8x128xf32>
    %443 = vector.extract_strided_slice %429 {offsets = [0, 128], sizes = [8, 128], strides = [1, 1]} : vector<8x256xf32> to vector<8x128xf32>
    %444 = arith.mulf %439, %442 : vector<8x128xf32>
    %445 = arith.addf %443, %444 : vector<8x128xf32>
    %446 = math.tanh %445 : vector<8x128xf32>
    %cst_163 = arith.constant 1.000000e+00 : f32
    %447 = vector.broadcast %cst_163 : f32 to vector<8x128xf32>
    %448 = arith.subf %447, %440 : vector<8x128xf32>
    %449 = arith.mulf %448, %446 : vector<8x128xf32>
    %450 = arith.mulf %440, %428 : vector<8x128xf32>
    %451 = arith.addf %449, %450 : vector<8x128xf32>
    %c8_164 = arith.constant 8 : index
    %c0_165 = arith.constant 0 : index
    %452 = vector.load %arg4[%c8_164, %c0_165] : memref<64x256xf32, #tpu.memory_space<vmem>>, vector<8x256xf32>
    %453 = vector.extract_strided_slice %451 {offsets = [0, 0], sizes = [8, 64], strides = [1, 1]} : vector<8x128xf32> to vector<8x64xf32>
    %cst_166 = arith.constant dense<0.000000e+00> : vector<8x256xf32>
    %454 = tpu.matmul %453, %424, %cst_166 {dimension_numbers = #tpu.dot_dimension_numbers<[1], [0], [0], [1], [0, 0, 1, 1], [], []>} : vector<8x64xf32>, vector<64x256xf32>, vector<8x256xf32> -> vector<8x256xf32>
    %455 = vector.extract_strided_slice %452 {offsets = [0, 0], sizes = [8, 128], strides = [1, 1]} : vector<8x256xf32> to vector<8x128xf32>
    %456 = vector.extract_strided_slice %454 {offsets = [0, 0], sizes = [8, 128], strides = [1, 1]} : vector<8x256xf32> to vector<8x128xf32>
    %457 = arith.addf %455, %456 : vector<8x128xf32>
    %458 = arith.negf %457 : vector<8x128xf32>
    %459 = math.exp %458 : vector<8x128xf32>
    %cst_167 = arith.constant 1.000000e+00 : f32
    %460 = vector.broadcast %cst_167 : f32 to vector<8x128xf32>
    %461 = arith.addf %460, %459 : vector<8x128xf32>
    %462 = arith.divf %460, %461 : vector<8x128xf32>
    %c64_i32_168 = arith.constant 64 : i32
    %463 = tpu.dynamic_rotate %462 by %c64_i32_168 dim 1 : vector<8x128xf32>, i32 -> vector<8x128xf32>
    %464 = vector.extract_strided_slice %454 {offsets = [0, 128], sizes = [8, 128], strides = [1, 1]} : vector<8x256xf32> to vector<8x128xf32>
    %465 = arith.addf %464, %427 : vector<8x128xf32>
    %466 = vector.extract_strided_slice %452 {offsets = [0, 128], sizes = [8, 128], strides = [1, 1]} : vector<8x256xf32> to vector<8x128xf32>
    %467 = arith.mulf %462, %465 : vector<8x128xf32>
    %468 = arith.addf %466, %467 : vector<8x128xf32>
    %469 = math.tanh %468 : vector<8x128xf32>
    %cst_169 = arith.constant 1.000000e+00 : f32
    %470 = vector.broadcast %cst_169 : f32 to vector<8x128xf32>
    %471 = arith.subf %470, %463 : vector<8x128xf32>
    %472 = arith.mulf %471, %469 : vector<8x128xf32>
    %473 = arith.mulf %463, %451 : vector<8x128xf32>
    %474 = arith.addf %472, %473 : vector<8x128xf32>
    %c16_170 = arith.constant 16 : index
    %c0_171 = arith.constant 0 : index
    %475 = vector.load %arg4[%c16_170, %c0_171] : memref<64x256xf32, #tpu.memory_space<vmem>>, vector<8x256xf32>
    %476 = vector.extract_strided_slice %474 {offsets = [0, 0], sizes = [8, 64], strides = [1, 1]} : vector<8x128xf32> to vector<8x64xf32>
    %cst_172 = arith.constant dense<0.000000e+00> : vector<8x256xf32>
    %477 = tpu.matmul %476, %424, %cst_172 {dimension_numbers = #tpu.dot_dimension_numbers<[1], [0], [0], [1], [0, 0, 1, 1], [], []>} : vector<8x64xf32>, vector<64x256xf32>, vector<8x256xf32> -> vector<8x256xf32>
    %478 = vector.extract_strided_slice %475 {offsets = [0, 0], sizes = [8, 128], strides = [1, 1]} : vector<8x256xf32> to vector<8x128xf32>
    %479 = vector.extract_strided_slice %477 {offsets = [0, 0], sizes = [8, 128], strides = [1, 1]} : vector<8x256xf32> to vector<8x128xf32>
    %480 = arith.addf %478, %479 : vector<8x128xf32>
    %481 = arith.negf %480 : vector<8x128xf32>
    %482 = math.exp %481 : vector<8x128xf32>
    %cst_173 = arith.constant 1.000000e+00 : f32
    %483 = vector.broadcast %cst_173 : f32 to vector<8x128xf32>
    %484 = arith.addf %483, %482 : vector<8x128xf32>
    %485 = arith.divf %483, %484 : vector<8x128xf32>
    %c64_i32_174 = arith.constant 64 : i32
    %486 = tpu.dynamic_rotate %485 by %c64_i32_174 dim 1 : vector<8x128xf32>, i32 -> vector<8x128xf32>
    %487 = vector.extract_strided_slice %477 {offsets = [0, 128], sizes = [8, 128], strides = [1, 1]} : vector<8x256xf32> to vector<8x128xf32>
    %488 = arith.addf %487, %427 : vector<8x128xf32>
    %489 = vector.extract_strided_slice %475 {offsets = [0, 128], sizes = [8, 128], strides = [1, 1]} : vector<8x256xf32> to vector<8x128xf32>
    %490 = arith.mulf %485, %488 : vector<8x128xf32>
    %491 = arith.addf %489, %490 : vector<8x128xf32>
    %492 = math.tanh %491 : vector<8x128xf32>
    %cst_175 = arith.constant 1.000000e+00 : f32
    %493 = vector.broadcast %cst_175 : f32 to vector<8x128xf32>
    %494 = arith.subf %493, %486 : vector<8x128xf32>
    %495 = arith.mulf %494, %492 : vector<8x128xf32>
    %496 = arith.mulf %486, %474 : vector<8x128xf32>
    %497 = arith.addf %495, %496 : vector<8x128xf32>
    %c24_176 = arith.constant 24 : index
    %c0_177 = arith.constant 0 : index
    %498 = vector.load %arg4[%c24_176, %c0_177] : memref<64x256xf32, #tpu.memory_space<vmem>>, vector<8x256xf32>
    %499 = vector.extract_strided_slice %497 {offsets = [0, 0], sizes = [8, 64], strides = [1, 1]} : vector<8x128xf32> to vector<8x64xf32>
    %cst_178 = arith.constant dense<0.000000e+00> : vector<8x256xf32>
    %500 = tpu.matmul %499, %424, %cst_178 {dimension_numbers = #tpu.dot_dimension_numbers<[1], [0], [0], [1], [0, 0, 1, 1], [], []>} : vector<8x64xf32>, vector<64x256xf32>, vector<8x256xf32> -> vector<8x256xf32>
    %501 = vector.extract_strided_slice %498 {offsets = [0, 0], sizes = [8, 128], strides = [1, 1]} : vector<8x256xf32> to vector<8x128xf32>
    %502 = vector.extract_strided_slice %500 {offsets = [0, 0], sizes = [8, 128], strides = [1, 1]} : vector<8x256xf32> to vector<8x128xf32>
    %503 = arith.addf %501, %502 : vector<8x128xf32>
    %504 = arith.negf %503 : vector<8x128xf32>
    %505 = math.exp %504 : vector<8x128xf32>
    %cst_179 = arith.constant 1.000000e+00 : f32
    %506 = vector.broadcast %cst_179 : f32 to vector<8x128xf32>
    %507 = arith.addf %506, %505 : vector<8x128xf32>
    %508 = arith.divf %506, %507 : vector<8x128xf32>
    %c64_i32_180 = arith.constant 64 : i32
    %509 = tpu.dynamic_rotate %508 by %c64_i32_180 dim 1 : vector<8x128xf32>, i32 -> vector<8x128xf32>
    %510 = vector.extract_strided_slice %500 {offsets = [0, 128], sizes = [8, 128], strides = [1, 1]} : vector<8x256xf32> to vector<8x128xf32>
    %511 = arith.addf %510, %427 : vector<8x128xf32>
    %512 = vector.extract_strided_slice %498 {offsets = [0, 128], sizes = [8, 128], strides = [1, 1]} : vector<8x256xf32> to vector<8x128xf32>
    %513 = arith.mulf %508, %511 : vector<8x128xf32>
    %514 = arith.addf %512, %513 : vector<8x128xf32>
    %515 = math.tanh %514 : vector<8x128xf32>
    %cst_181 = arith.constant 1.000000e+00 : f32
    %516 = vector.broadcast %cst_181 : f32 to vector<8x128xf32>
    %517 = arith.subf %516, %509 : vector<8x128xf32>
    %518 = arith.mulf %517, %515 : vector<8x128xf32>
    %519 = arith.mulf %509, %497 : vector<8x128xf32>
    %520 = arith.addf %518, %519 : vector<8x128xf32>
    %c32_182 = arith.constant 32 : index
    %c0_183 = arith.constant 0 : index
    %521 = vector.load %arg4[%c32_182, %c0_183] : memref<64x256xf32, #tpu.memory_space<vmem>>, vector<8x256xf32>
    %522 = vector.extract_strided_slice %520 {offsets = [0, 0], sizes = [8, 64], strides = [1, 1]} : vector<8x128xf32> to vector<8x64xf32>
    %cst_184 = arith.constant dense<0.000000e+00> : vector<8x256xf32>
    %523 = tpu.matmul %522, %424, %cst_184 {dimension_numbers = #tpu.dot_dimension_numbers<[1], [0], [0], [1], [0, 0, 1, 1], [], []>} : vector<8x64xf32>, vector<64x256xf32>, vector<8x256xf32> -> vector<8x256xf32>
    %524 = vector.extract_strided_slice %521 {offsets = [0, 0], sizes = [8, 128], strides = [1, 1]} : vector<8x256xf32> to vector<8x128xf32>
    %525 = vector.extract_strided_slice %523 {offsets = [0, 0], sizes = [8, 128], strides = [1, 1]} : vector<8x256xf32> to vector<8x128xf32>
    %526 = arith.addf %524, %525 : vector<8x128xf32>
    %527 = arith.negf %526 : vector<8x128xf32>
    %528 = math.exp %527 : vector<8x128xf32>
    %cst_185 = arith.constant 1.000000e+00 : f32
    %529 = vector.broadcast %cst_185 : f32 to vector<8x128xf32>
    %530 = arith.addf %529, %528 : vector<8x128xf32>
    %531 = arith.divf %529, %530 : vector<8x128xf32>
    %c64_i32_186 = arith.constant 64 : i32
    %532 = tpu.dynamic_rotate %531 by %c64_i32_186 dim 1 : vector<8x128xf32>, i32 -> vector<8x128xf32>
    %533 = vector.extract_strided_slice %523 {offsets = [0, 128], sizes = [8, 128], strides = [1, 1]} : vector<8x256xf32> to vector<8x128xf32>
    %534 = arith.addf %533, %427 : vector<8x128xf32>
    %535 = vector.extract_strided_slice %521 {offsets = [0, 128], sizes = [8, 128], strides = [1, 1]} : vector<8x256xf32> to vector<8x128xf32>
    %536 = arith.mulf %531, %534 : vector<8x128xf32>
    %537 = arith.addf %535, %536 : vector<8x128xf32>
    %538 = math.tanh %537 : vector<8x128xf32>
    %cst_187 = arith.constant 1.000000e+00 : f32
    %539 = vector.broadcast %cst_187 : f32 to vector<8x128xf32>
    %540 = arith.subf %539, %532 : vector<8x128xf32>
    %541 = arith.mulf %540, %538 : vector<8x128xf32>
    %542 = arith.mulf %532, %520 : vector<8x128xf32>
    %543 = arith.addf %541, %542 : vector<8x128xf32>
    %c40_188 = arith.constant 40 : index
    %c0_189 = arith.constant 0 : index
    %544 = vector.load %arg4[%c40_188, %c0_189] : memref<64x256xf32, #tpu.memory_space<vmem>>, vector<8x256xf32>
    %545 = vector.extract_strided_slice %543 {offsets = [0, 0], sizes = [8, 64], strides = [1, 1]} : vector<8x128xf32> to vector<8x64xf32>
    %cst_190 = arith.constant dense<0.000000e+00> : vector<8x256xf32>
    %546 = tpu.matmul %545, %424, %cst_190 {dimension_numbers = #tpu.dot_dimension_numbers<[1], [0], [0], [1], [0, 0, 1, 1], [], []>} : vector<8x64xf32>, vector<64x256xf32>, vector<8x256xf32> -> vector<8x256xf32>
    %547 = vector.extract_strided_slice %544 {offsets = [0, 0], sizes = [8, 128], strides = [1, 1]} : vector<8x256xf32> to vector<8x128xf32>
    %548 = vector.extract_strided_slice %546 {offsets = [0, 0], sizes = [8, 128], strides = [1, 1]} : vector<8x256xf32> to vector<8x128xf32>
    %549 = arith.addf %547, %548 : vector<8x128xf32>
    %550 = arith.negf %549 : vector<8x128xf32>
    %551 = math.exp %550 : vector<8x128xf32>
    %cst_191 = arith.constant 1.000000e+00 : f32
    %552 = vector.broadcast %cst_191 : f32 to vector<8x128xf32>
    %553 = arith.addf %552, %551 : vector<8x128xf32>
    %554 = arith.divf %552, %553 : vector<8x128xf32>
    %c64_i32_192 = arith.constant 64 : i32
    %555 = tpu.dynamic_rotate %554 by %c64_i32_192 dim 1 : vector<8x128xf32>, i32 -> vector<8x128xf32>
    %556 = vector.extract_strided_slice %546 {offsets = [0, 128], sizes = [8, 128], strides = [1, 1]} : vector<8x256xf32> to vector<8x128xf32>
    %557 = arith.addf %556, %427 : vector<8x128xf32>
    %558 = vector.extract_strided_slice %544 {offsets = [0, 128], sizes = [8, 128], strides = [1, 1]} : vector<8x256xf32> to vector<8x128xf32>
    %559 = arith.mulf %554, %557 : vector<8x128xf32>
    %560 = arith.addf %558, %559 : vector<8x128xf32>
    %561 = math.tanh %560 : vector<8x128xf32>
    %cst_193 = arith.constant 1.000000e+00 : f32
    %562 = vector.broadcast %cst_193 : f32 to vector<8x128xf32>
    %563 = arith.subf %562, %555 : vector<8x128xf32>
    %564 = arith.mulf %563, %561 : vector<8x128xf32>
    %565 = arith.mulf %555, %543 : vector<8x128xf32>
    %566 = arith.addf %564, %565 : vector<8x128xf32>
    %c48_194 = arith.constant 48 : index
    %c0_195 = arith.constant 0 : index
    %567 = vector.load %arg4[%c48_194, %c0_195] : memref<64x256xf32, #tpu.memory_space<vmem>>, vector<8x256xf32>
    %568 = vector.extract_strided_slice %566 {offsets = [0, 0], sizes = [8, 64], strides = [1, 1]} : vector<8x128xf32> to vector<8x64xf32>
    %cst_196 = arith.constant dense<0.000000e+00> : vector<8x256xf32>
    %569 = tpu.matmul %568, %424, %cst_196 {dimension_numbers = #tpu.dot_dimension_numbers<[1], [0], [0], [1], [0, 0, 1, 1], [], []>} : vector<8x64xf32>, vector<64x256xf32>, vector<8x256xf32> -> vector<8x256xf32>
    %570 = vector.extract_strided_slice %567 {offsets = [0, 0], sizes = [8, 128], strides = [1, 1]} : vector<8x256xf32> to vector<8x128xf32>
    %571 = vector.extract_strided_slice %569 {offsets = [0, 0], sizes = [8, 128], strides = [1, 1]} : vector<8x256xf32> to vector<8x128xf32>
    %572 = arith.addf %570, %571 : vector<8x128xf32>
    %573 = arith.negf %572 : vector<8x128xf32>
    %574 = math.exp %573 : vector<8x128xf32>
    %cst_197 = arith.constant 1.000000e+00 : f32
    %575 = vector.broadcast %cst_197 : f32 to vector<8x128xf32>
    %576 = arith.addf %575, %574 : vector<8x128xf32>
    %577 = arith.divf %575, %576 : vector<8x128xf32>
    %c64_i32_198 = arith.constant 64 : i32
    %578 = tpu.dynamic_rotate %577 by %c64_i32_198 dim 1 : vector<8x128xf32>, i32 -> vector<8x128xf32>
    %579 = vector.extract_strided_slice %569 {offsets = [0, 128], sizes = [8, 128], strides = [1, 1]} : vector<8x256xf32> to vector<8x128xf32>
    %580 = arith.addf %579, %427 : vector<8x128xf32>
    %581 = vector.extract_strided_slice %567 {offsets = [0, 128], sizes = [8, 128], strides = [1, 1]} : vector<8x256xf32> to vector<8x128xf32>
    %582 = arith.mulf %577, %580 : vector<8x128xf32>
    %583 = arith.addf %581, %582 : vector<8x128xf32>
    %584 = math.tanh %583 : vector<8x128xf32>
    %cst_199 = arith.constant 1.000000e+00 : f32
    %585 = vector.broadcast %cst_199 : f32 to vector<8x128xf32>
    %586 = arith.subf %585, %578 : vector<8x128xf32>
    %587 = arith.mulf %586, %584 : vector<8x128xf32>
    %588 = arith.mulf %578, %566 : vector<8x128xf32>
    %589 = arith.addf %587, %588 : vector<8x128xf32>
    %c56_200 = arith.constant 56 : index
    %c0_201 = arith.constant 0 : index
    %590 = vector.load %arg4[%c56_200, %c0_201] : memref<64x256xf32, #tpu.memory_space<vmem>>, vector<8x256xf32>
    %591 = vector.extract_strided_slice %589 {offsets = [0, 0], sizes = [8, 64], strides = [1, 1]} : vector<8x128xf32> to vector<8x64xf32>
    %cst_202 = arith.constant dense<0.000000e+00> : vector<8x256xf32>
    %592 = tpu.matmul %591, %424, %cst_202 {dimension_numbers = #tpu.dot_dimension_numbers<[1], [0], [0], [1], [0, 0, 1, 1], [], []>} : vector<8x64xf32>, vector<64x256xf32>, vector<8x256xf32> -> vector<8x256xf32>
    %593 = vector.extract_strided_slice %590 {offsets = [0, 0], sizes = [8, 128], strides = [1, 1]} : vector<8x256xf32> to vector<8x128xf32>
    %594 = vector.extract_strided_slice %592 {offsets = [0, 0], sizes = [8, 128], strides = [1, 1]} : vector<8x256xf32> to vector<8x128xf32>
    %595 = arith.addf %593, %594 : vector<8x128xf32>
    %596 = arith.negf %595 : vector<8x128xf32>
    %597 = math.exp %596 : vector<8x128xf32>
    %cst_203 = arith.constant 1.000000e+00 : f32
    %598 = vector.broadcast %cst_203 : f32 to vector<8x128xf32>
    %599 = arith.addf %598, %597 : vector<8x128xf32>
    %600 = arith.divf %598, %599 : vector<8x128xf32>
    %c64_i32_204 = arith.constant 64 : i32
    %601 = tpu.dynamic_rotate %600 by %c64_i32_204 dim 1 : vector<8x128xf32>, i32 -> vector<8x128xf32>
    %602 = vector.extract_strided_slice %592 {offsets = [0, 128], sizes = [8, 128], strides = [1, 1]} : vector<8x256xf32> to vector<8x128xf32>
    %603 = arith.addf %602, %427 : vector<8x128xf32>
    %604 = vector.extract_strided_slice %590 {offsets = [0, 128], sizes = [8, 128], strides = [1, 1]} : vector<8x256xf32> to vector<8x128xf32>
    %605 = arith.mulf %600, %603 : vector<8x128xf32>
    %606 = arith.addf %604, %605 : vector<8x128xf32>
    %607 = math.tanh %606 : vector<8x128xf32>
    %cst_205 = arith.constant 1.000000e+00 : f32
    %608 = vector.broadcast %cst_205 : f32 to vector<8x128xf32>
    %609 = arith.subf %608, %601 : vector<8x128xf32>
    %610 = arith.mulf %609, %607 : vector<8x128xf32>
    %611 = arith.mulf %601, %589 : vector<8x128xf32>
    %612 = arith.addf %610, %611 : vector<8x128xf32>
    %c5_206 = arith.constant 5 : index
    %c0_207 = arith.constant 0 : index
    %c0_208 = arith.constant 0 : index
    %613 = vector.load %arg1[%c5_206, %c0_207, %c0_208] : memref<6x64x256xf32, #tpu.memory_space<vmem>>, vector<1x64x256xf32>
    %614 = vector.shape_cast %613 : vector<1x64x256xf32> to vector<64x256xf32>
    %615 = vector.extract_strided_slice %614 {offsets = [0, 0], sizes = [64, 128], strides = [1, 1]} : vector<64x256xf32> to vector<64x128xf32>
    %616 = vector.extract_strided_slice %612 {offsets = [0, 0], sizes = [8, 64], strides = [1, 1]} : vector<8x128xf32> to vector<8x64xf32>
    %cst_209 = arith.constant dense<0.000000e+00> : vector<8x128xf32>
    %617 = tpu.matmul %616, %615, %cst_209 {dimension_numbers = #tpu.dot_dimension_numbers<[1], [0], [0], [1], [0, 0, 1, 1], [], []>} : vector<8x64xf32>, vector<64x128xf32>, vector<8x128xf32> -> vector<8x128xf32>
    %c7 = arith.constant 7 : index
    %c0_210 = arith.constant 0 : index
    %618 = vector.load %arg2[%c7, %c0_210] : memref<8x256xf32, #tpu.memory_space<vmem>>, vector<1x128xf32>
    %619 = vector.broadcast %618 : vector<1x128xf32> to vector<8x128xf32>
    %620 = arith.addf %617, %619 : vector<8x128xf32>
    %c0_211 = arith.constant 0 : index
    %c0_212 = arith.constant 0 : index
    %621 = vector.load %arg3[%c0_211, %c0_212] : memref<8x128xf32, #tpu.memory_space<vmem>>, vector<8x128xf32>
    tpu.vector_store %arg3[%c0_211, %c0_212], %620 {strides = array<i32>} : memref<8x128xf32, #tpu.memory_space<vmem>>, vector<8x128xf32>,
    return
  }
}

</mosaic_0001>

<llo_original>
// kernel: gru_model_forward.1
$region0: #{gru_model_forward.1}
  #allocation0 [shape = 'u32[]', space=smem, size = 0x4, offset = 0x4, fixed_abs, tag = 'smem constant byte address 0x4 - core index']
  #allocation1 [shape = 'u32[144,128]{1,0:T(1,128)}', space=vmem, size = 0x12000, scoped, tag = 'internal scratch']
  #allocation2 [shape = 'f32[64,256]{1,0:T(8,128)}', space=vmem, size = 0x10000, scoped, tag = 'scratch operand']
  #allocation3 [shape = 'f32[64,128]{1,0:T(8,128)}', space=vmem, size = 0x8000, scoped, tag = 'scratch operand']
  %s0 = inlined_call_operand.vmem [shape: f32[64,1], index: 0, kind: input, shape index: {}]
  %s1 = inlined_call_operand.hbm [shape: f32[6,64,256], index: 1, kind: input, shape index: {}]
  %s2 = inlined_call_operand.vmem [shape: f32[8,256], index: 2, kind: input, shape index: {}]
  %s3 = inlined_call_operand.vmem [shape: f32[8,128], index: 3, kind: output, shape index: {}]
  %s4 = sld [smem:[#allocation0]]
  $region26: #{gru_model_forward.1} parent=0
    _
  %s6 = ssub.s32 1, %s4
  %s7 = scalar_select 0, %s6, %s4
  $region1: #{gru_model_forward.1} parent=0
    #allocation4 [shape = 'u8[393216]{0}', space=vmem, size = 0x60000, scoped, tag = 'input window, operand 1, single buffered']
    #allocation5 [shape = 's32[1]{0}', space=sflag, size = 0x4, scoped, tag = 'scoped memory for gru_model_forward.1']
    %8 = vsyncpa [#allocation5], 0
    // Predicated region
    $region2: #{gru_model_forward.1} parent=1 // pred_check
      _
    $region3: #{gru_model_forward.1} parent=1 // pred_check_branch
      %10 = sbr.rel (0) target = $region5
    $region4: #{gru_model_forward.1} parent=1 // pred_region
      _
    $region5: #{gru_model_forward.1} parent=1 // pred_fallthru
      _
    // Predicated region
    $region6: #{gru_model_forward.1} parent=1 // pred_check
      _
    $region7: #{gru_model_forward.1} parent=1 // pred_check_branch
      %12 = sbr.rel (0) target = $region9
    $region8: #{gru_model_forward.1} parent=1 // pred_region
      %s14 = ssub.s32 12288, 12288
      %15 = vsyncadd [#allocation5], %s14
      %s16 = sshll.u32 [#allocation4], 4
      %s17 = int_to_ptr.vmem [resolvable:$true] %s16
      %22 = dma.hbm_to_vmem [thread:$0]  %s1, 12288, %s17, [#allocation5], 256, 256, 16
    $region9: #{gru_model_forward.1} parent=1 // pred_fallthru
      _
    // Predicated region
    $region10: #{gru_model_forward.1} parent=1 // pred_check
      _
    $region11: #{gru_model_forward.1} parent=1 // pred_check_branch
      %24 = sbr.rel (0) target = $region13
    $region12: #{gru_model_forward.1} parent=1 // pred_region
      _
    $region13: #{gru_model_forward.1} parent=1 // pred_fallthru
      _
    // Predicated region
    $region14: #{gru_model_forward.1} parent=1 // pred_check
      _
    $region15: #{gru_model_forward.1} parent=1 // pred_check_branch
      %26 = sbr.rel (0) target = $region17
    $region16: #{gru_model_forward.1} parent=1 // pred_region
      %27 = dma.done [#allocation5], 12288
    $region17: #{gru_model_forward.1} parent=1 // pred_fallthru
      _
    %v28 = vld [vmem:[%s0] sm:$0xff]
    %v29 = vld [vmem:[%s0 + $0x8] sm:$0xff]
    %v30 = vld [vmem:[%s0 + $0x10] sm:$0xff]
    %v31 = vld [vmem:[%s0 + $0x18] sm:$0xff]
    %v32 = vld [vmem:[%s0 + $0x20] sm:$0xff]
    %v33 = vld [vmem:[%s0 + $0x28] sm:$0xff]
    %v34 = vld [vmem:[%s0 + $0x30] sm:$0xff]
    %v35 = vld [vmem:[%s0 + $0x38] sm:$0xff]
    %v36 = vld [vmem:[%s2] ss:$8 sm:$0x3]
    %38 = vset.pattern.permute.xlu0 0
    %39 = vperm.xlu0 %38, %v28
    %v40 = vpop.permute.xlu0 %39
    %43 = vset.pattern.permute.xlu0 0
    %44 = vperm.xlu0 %43, %v29
    %v45 = vpop.permute.xlu0 %44
    %48 = vset.pattern.permute.xlu0 0
    %49 = vperm.xlu0 %48, %v30
    %v50 = vpop.permute.xlu0 %49
    %53 = vset.pattern.permute.xlu0 0
    %54 = vperm.xlu0 %53, %v31
    %v55 = vpop.permute.xlu0 %54
    %58 = vset.pattern.permute.xlu0 0
    %59 = vperm.xlu0 %58, %v32
    %v60 = vpop.permute.xlu0 %59
    %63 = vset.pattern.permute.xlu0 0
    %64 = vperm.xlu0 %63, %v33
    %v65 = vpop.permute.xlu0 %64
    %68 = vset.pattern.permute.xlu0 0
    %69 = vperm.xlu0 %68, %v34
    %v70 = vpop.permute.xlu0 %69
    %73 = vset.pattern.permute.xlu0 0
    %74 = vperm.xlu0 %73, %v35
    %v75 = vpop.permute.xlu0 %74
    %v78 = vlaneseq
    %v79 = vshrl.u32 %v78, 7
    %v80 = vsub.s32 0, %v79
    %v81 = vrot.slane %v36, %v80
    %v82 = vlaneseq
    %v83 = vshrl.u32 %v82, 7
    %v84 = vsub.s32 1, %v83
    %v85 = vrot.slane %v36, %v84
    %v88 = vmul.f32 %v40, %v81
    %v89 = vmul.f32 %v40, %v85
    %v90 = vmul.f32 %v45, %v81
    %v91 = vmul.f32 %v45, %v85
    %v92 = vmul.f32 %v50, %v81
    %v93 = vmul.f32 %v50, %v85
    %v94 = vmul.f32 %v55, %v81
    %v95 = vmul.f32 %v55, %v85
    %v96 = vmul.f32 %v60, %v81
    %v97 = vmul.f32 %v60, %v85
    %v98 = vmul.f32 %v65, %v81
    %v99 = vmul.f32 %v65, %v85
    %v100 = vmul.f32 %v70, %v81
    %v101 = vmul.f32 %v70, %v85
    %v102 = vmul.f32 %v75, %v81
    %v103 = vmul.f32 %v75, %v85
    %s104 = scalar_lea.vmem %s2, 1
    %v105 = vld [vmem:[%s104] ss:$8 sm:$0x3]
    %v107 = vlaneseq
    %v108 = vshrl.u32 %v107, 7
    %v109 = vsub.s32 0, %v108
    %v110 = vrot.slane %v105, %v109
    %v111 = vlaneseq
    %v112 = vshrl.u32 %v111, 7
    %v113 = vsub.s32 1, %v112
    %v114 = vrot.slane %v105, %v113
    %v117 = vadd.f32 %v88, %v110
    %v118 = vadd.f32 %v89, %v114
    %v119 = vadd.f32 %v90, %v110
    %v120 = vadd.f32 %v91, %v114
    %v121 = vadd.f32 %v92, %v110
    %v122 = vadd.f32 %v93, %v114
    %v123 = vadd.f32 %v94, %v110
    %v124 = vadd.f32 %v95, %v114
    %v125 = vadd.f32 %v96, %v110
    %v126 = vadd.f32 %v97, %v114
    %v127 = vadd.f32 %v98, %v110
    %v128 = vadd.f32 %v99, %v114
    %v129 = vadd.f32 %v100, %v110
    %v130 = vadd.f32 %v101, %v114
    %v131 = vadd.f32 %v102, %v110
    %v132 = vadd.f32 %v103, %v114
    %133 = vst [vmem:[#allocation2] sm:$0xff] %v117
    %134 = vst [vmem:[#allocation2 + $0x8] sm:$0xff] %v118
    %135 = vst [vmem:[#allocation2 + $0x10] sm:$0xff] %v119
    %136 = vst [vmem:[#allocation2 + $0x18] sm:$0xff] %v120
    %137 = vst [vmem:[#allocation2 + $0x20] sm:$0xff] %v121
    %138 = vst [vmem:[#allocation2 + $0x28] sm:$0xff] %v122
    %139 = vst [vmem:[#allocation2 + $0x30] sm:$0xff] %v123
    %140 = vst [vmem:[#allocation2 + $0x38] sm:$0xff] %v124
    %141 = vst [vmem:[#allocation2 + $0x40] sm:$0xff] %v125
    %142 = vst [vmem:[#allocation2 + $0x48] sm:$0xff] %v126
    %143 = vst [vmem:[#allocation2 + $0x50] sm:$0xff] %v127
    %144 = vst [vmem:[#allocation2 + $0x58] sm:$0xff] %v128
    %145 = vst [vmem:[#allocation2 + $0x60] sm:$0xff] %v129
    %146 = vst [vmem:[#allocation2 + $0x68] sm:$0xff] %v130
    %147 = vst [vmem:[#allocation2 + $0x70] sm:$0xff] %v131
    %148 = vst [vmem:[#allocation2 + $0x78] sm:$0xff] %v132
    %v149 = vld [vmem:[#allocation4] sm:$0xff]
    %v150 = vld [vmem:[#allocation4 + $0x8] sm:$0xff]
    %v151 = vld [vmem:[#allocation4 + $0x10] sm:$0xff]
    %v152 = vld [vmem:[#allocation4 + $0x18] sm:$0xff]
    %v153 = vld [vmem:[#allocation4 + $0x20] sm:$0xff]
    %v154 = vld [vmem:[#allocation4 + $0x28] sm:$0xff]
    %v155 = vld [vmem:[#allocation4 + $0x30] sm:$0xff]
    %v156 = vld [vmem:[#allocation4 + $0x38] sm:$0xff]
    %v157 = vld [vmem:[#allocation4 + $0x40] sm:$0xff]
    %v158 = vld [vmem:[#allocation4 + $0x48] sm:$0xff]
    %v159 = vld [vmem:[#allocation4 + $0x50] sm:$0xff]
    %v160 = vld [vmem:[#allocation4 + $0x58] sm:$0xff]
    %v161 = vld [vmem:[#allocation4 + $0x60] sm:$0xff]
    %v162 = vld [vmem:[#allocation4 + $0x68] sm:$0xff]
    %v163 = vld [vmem:[#allocation4 + $0x70] sm:$0xff]
    %v164 = vld [vmem:[#allocation4 + $0x78] sm:$0xff]
    %v165 = vld [vmem:[%s2 + $0x4] ss:$0 sm:$0xff]
    %v166 = vld [vmem:[#allocation2] sm:$0xff]
    %v167 = vld [vmem:[#allocation2 + $0x8] sm:$0xff]
    %vm168 = vcmask 523264
    %v170 = vsel %vm168, 0.0, 0
    %172 = vmatprep.subr.mxu0 %v150
    %173 = vmatpush1.msra.mxu0 %v149
    %174 = vmatprep.subr.mxu0 %v152
    %175 = vmatpush1.msra.mxu0 %v151
    %176 = vmatprep.subr.mxu0 %v154
    %177 = vmatpush1.msra.mxu0 %v153
    %178 = vmatprep.subr.mxu0 %v156
    %179 = vmatpush1.msra.mxu0 %v155
    %180 = vmatprep.subr.mxu0 %v158
    %181 = vmatpush1.msra.mxu0 %v157
    %182 = vmatprep.subr.mxu0 %v160
    %183 = vmatpush1.msra.mxu0 %v159
    %184 = vmatprep.subr.mxu0 %v162
    %185 = vmatpush1.msra.mxu0 %v161
    %186 = vmatprep.subr.mxu0 %v164
    %187 = vmatpush1.msra.mxu0 %v163
    %188 = vmatprep.subr.mxu0 0.0
    %189 = vmatpush1.msra.mxu0 0.0
    %190 = vmatprep.subr.mxu0 0.0
    %191 = vmatpush1.msra.mxu0 0.0
    %192 = vmatprep.subr.mxu0 0.0
    %193 = vmatpush1.msra.mxu0 0.0
    %194 = vmatprep.subr.mxu0 0.0
    %195 = vmatpush1.msra.mxu0 0.0
    %196 = vmatprep.subr.mxu0 0.0
    %197 = vmatpush1.msra.mxu0 0.0
    %198 = vmatprep.subr.mxu0 0.0
    %199 = vmatpush1.msra.mxu0 0.0
    %200 = vmatprep.subr.mxu0 0.0
    %201 = vmatpush1.msra.mxu0 0.0
    %202 = vmatprep.subr.mxu0 0.0
    %203 = vmatpush1.msra.mxu0 0.0
    %204 = vmatprep.subr.mxu0 0.0
    %205 = vmatpush1.msra.mxu0 0.0
    %206 = vmatprep.subr.mxu0 0.0
    %207 = vmatpush1.msra.mxu0 0.0
    %208 = vmatprep.subr.mxu0 0.0
    %209 = vmatpush1.msra.mxu0 0.0
    %210 = vmatprep.subr.mxu0 0.0
    %211 = vmatpush1.msra.mxu0 0.0
    %212 = vmatprep.subr.mxu0 0.0
    %213 = vmatpush1.msra.mxu0 0.0
    %214 = vmatprep.subr.mxu0 0.0
    %215 = vmatpush1.msra.mxu0 0.0
    %216 = vmatprep.subr.mxu0 0.0
    %217 = vmatpush1.msra.mxu0 0.0
    %218 = vmatprep.subr.mxu0 0.0
    %219 = vmatpush1.msra.mxu0 0.0
    %220 = vmatprep.subr.mxu0 0.0
    %221 = vmatpush1.msra.mxu0 0.0
    %222 = vmatprep.subr.mxu0 0.0
    %223 = vmatpush1.msra.mxu0 0.0
    %224 = vmatprep.subr.mxu0 0.0
    %225 = vmatpush1.msra.mxu0 0.0
    %226 = vmatprep.subr.mxu0 0.0
    %227 = vmatpush1.msra.mxu0 0.0
    %228 = vmatprep.subr.mxu0 0.0
    %229 = vmatpush1.msra.mxu0 0.0
    %230 = vmatprep.subr.mxu0 0.0
    %231 = vmatpush1.msra.mxu0 0.0
    %232 = vmatprep.subr.mxu0 0.0
    %233 = vmatpush1.msra.mxu0 0.0
    %234 = vmatprep.subr.mxu0 0.0
    %235 = vmatpush1.msra.mxu0 0.0
    %236 = vmatprep.mubr.f32.mxu0 0.0
    %237 = vmatmul.mubr.f32.gmra.mrb[0].mxu0 %v170
    %v238 = vpop.f32.mrb[0].mxu0
    %v239 = vadd.f32 0.0, %v238
    %v240 = vpop.f32.mrb[0].mxu0
    %v241 = vadd.f32 0.0, %v240
    %242 = vdwg.mxu0
    %v243 = vadd.f32 %v166, %v239
    %v244 = vxor.u32 %v243, 2147483648
    %v245 = vmul.f32 %v244, 1.442695
    %v246 = vpow.pop %v245
    %v247 = vadd.f32 %v246, 1.0
    %v248 = vrcp.pop %v247
    %v249 = vmul.f32 1.0, %v248
    %250 = vrot.lane.b32.xlu0 %v249, 64
    %v251 = vpop.permute.xlu0 %250
    %v252 = vadd.f32 %v241, %v165
    %v253 = vmul.f32 %v249, %v252
    %v254 = vadd.f32 %v167, %v253
    %v255 = vtanh.pop %v254
    %v256 = vsub.f32 1.0, %v251
    %v257 = vmul.f32 %v256, %v255
    %v258 = vmul.f32 %v251, 0.0
    %v259 = vadd.f32 %v257, %v258
    %260 = vst [vmem:[#allocation3] sm:$0xff] %v259
    %v261 = vld [vmem:[#allocation2 + $0x10] sm:$0xff]
    %v262 = vld [vmem:[#allocation2 + $0x18] sm:$0xff]
    %v264 = vsel %vm168, %v259, 0
    %266 = vmatprep.subr.mxu0 %v150
    %267 = vmatpush1.msra.mxu0 %v149
    %268 = vmatprep.subr.mxu0 %v152
    %269 = vmatpush1.msra.mxu0 %v151
    %270 = vmatprep.subr.mxu0 %v154
    %271 = vmatpush1.msra.mxu0 %v153
    %272 = vmatprep.subr.mxu0 %v156
    %273 = vmatpush1.msra.mxu0 %v155
    %274 = vmatprep.subr.mxu0 %v158
    %275 = vmatpush1.msra.mxu0 %v157
    %276 = vmatprep.subr.mxu0 %v160
    %277 = vmatpush1.msra.mxu0 %v159
    %278 = vmatprep.subr.mxu0 %v162
    %279 = vmatpush1.msra.mxu0 %v161
    %280 = vmatprep.subr.mxu0 %v164
    %281 = vmatpush1.msra.mxu0 %v163
    %282 = vmatprep.subr.mxu0 0.0
    %283 = vmatpush1.msra.mxu0 0.0
    %284 = vmatprep.subr.mxu0 0.0
    %285 = vmatpush1.msra.mxu0 0.0
    %286 = vmatprep.subr.mxu0 0.0
    %287 = vmatpush1.msra.mxu0 0.0
    %288 = vmatprep.subr.mxu0 0.0
    %289 = vmatpush1.msra.mxu0 0.0
    %290 = vmatprep.subr.mxu0 0.0
    %291 = vmatpush1.msra.mxu0 0.0
    %292 = vmatprep.subr.mxu0 0.0
    %293 = vmatpush1.msra.mxu0 0.0
    %294 = vmatprep.subr.mxu0 0.0
    %295 = vmatpush1.msra.mxu0 0.0
    %296 = vmatprep.subr.mxu0 0.0
    %297 = vmatpush1.msra.mxu0 0.0
    %298 = vmatprep.subr.mxu0 0.0
    %299 = vmatpush1.msra.mxu0 0.0
    %300 = vmatprep.subr.mxu0 0.0
    %301 = vmatpush1.msra.mxu0 0.0
    %302 = vmatprep.subr.mxu0 0.0
    %303 = vmatpush1.msra.mxu0 0.0
    %304 = vmatprep.subr.mxu0 0.0
    %305 = vmatpush1.msra.mxu0 0.0
    %306 = vmatprep.subr.mxu0 0.0
    %307 = vmatpush1.msra.mxu0 0.0
    %308 = vmatprep.subr.mxu0 0.0
    %309 = vmatpush1.msra.mxu0 0.0
    %310 = vmatprep.subr.mxu0 0.0
    %311 = vmatpush1.msra.mxu0 0.0
    %312 = vmatprep.subr.mxu0 0.0
    %313 = vmatpush1.msra.mxu0 0.0
    %314 = vmatprep.subr.mxu0 0.0
    %315 = vmatpush1.msra.mxu0 0.0
    %316 = vmatprep.subr.mxu0 0.0
    %317 = vmatpush1.msra.mxu0 0.0
    %318 = vmatprep.subr.mxu0 0.0
    %319 = vmatpush1.msra.mxu0 0.0
    %320 = vmatprep.subr.mxu0 0.0
    %321 = vmatpush1.msra.mxu0 0.0
    %322 = vmatprep.subr.mxu0 0.0
    %323 = vmatpush1.msra.mxu0 0.0
    %324 = vmatprep.subr.mxu0 0.0
    %325 = vmatpush1.msra.mxu0 0.0
    %326 = vmatprep.subr.mxu0 0.0
    %327 = vmatpush1.msra.mxu0 0.0
    %328 = vmatprep.subr.mxu0 0.0
    %329 = vmatpush1.msra.mxu0 0.0
    %330 = vmatprep.mubr.f32.mxu0 0.0
    %331 = vmatmul.mubr.f32.gmra.mrb[0].mxu0 %v264
    %v332 = vpop.f32.mrb[0].mxu0
    %v333 = vadd.f32 0.0, %v332
    %v334 = vpop.f32.mrb[0].mxu0
    %v335 = vadd.f32 0.0, %v334
    %336 = vdwg.mxu0
    %v337 = vadd.f32 %v261, %v333
    %v338 = vxor.u32 %v337, 2147483648
    %v339 = vmul.f32 %v338, 1.442695
    %v340 = vpow.pop %v339
    %v341 = vadd.f32 %v340, 1.0
    %v342 = vrcp.pop %v341
    %v343 = vmul.f32 1.0, %v342
    %344 = vrot.lane.b32.xlu0 %v343, 64
    %v345 = vpop.permute.xlu0 %344
    %v346 = vadd.f32 %v335, %v165
    %v347 = vmul.f32 %v343, %v346
    %v348 = vadd.f32 %v262, %v347
    %v349 = vtanh.pop %v348
    %v350 = vsub.f32 1.0, %v345
    %v351 = vmul.f32 %v350, %v349
    %v352 = vmul.f32 %v345, %v259
    %v353 = vadd.f32 %v351, %v352
    %354 = vst [vmem:[#allocation3 + $0x8] sm:$0xff] %v353
    %v355 = vld [vmem:[#allocation2 + $0x20] sm:$0xff]
    %v356 = vld [vmem:[#allocation2 + $0x28] sm:$0xff]
    %v358 = vsel %vm168, %v353, 0
    %360 = vmatprep.subr.mxu0 %v150
    %361 = vmatpush1.msra.mxu0 %v149
    %362 = vmatprep.subr.mxu0 %v152
    %363 = vmatpush1.msra.mxu0 %v151
    %364 = vmatprep.subr.mxu0 %v154
    %365 = vmatpush1.msra.mxu0 %v153
    %366 = vmatprep.subr.mxu0 %v156
    %367 = vmatpush1.msra.mxu0 %v155
    %368 = vmatprep.subr.mxu0 %v158
    %369 = vmatpush1.msra.mxu0 %v157
    %370 = vmatprep.subr.mxu0 %v160
    %371 = vmatpush1.msra.mxu0 %v159
    %372 = vmatprep.subr.mxu0 %v162
    %373 = vmatpush1.msra.mxu0 %v161
    %374 = vmatprep.subr.mxu0 %v164
    %375 = vmatpush1.msra.mxu0 %v163
    %376 = vmatprep.subr.mxu0 0.0
    %377 = vmatpush1.msra.mxu0 0.0
    %378 = vmatprep.subr.mxu0 0.0
    %379 = vmatpush1.msra.mxu0 0.0
    %380 = vmatprep.subr.mxu0 0.0
    %381 = vmatpush1.msra.mxu0 0.0
    %382 = vmatprep.subr.mxu0 0.0
    %383 = vmatpush1.msra.mxu0 0.0
    %384 = vmatprep.subr.mxu0 0.0
    %385 = vmatpush1.msra.mxu0 0.0
    %386 = vmatprep.subr.mxu0 0.0
    %387 = vmatpush1.msra.mxu0 0.0
    %388 = vmatprep.subr.mxu0 0.0
    %389 = vmatpush1.msra.mxu0 0.0
    %390 = vmatprep.subr.mxu0 0.0
    %391 = vmatpush1.msra.mxu0 0.0
    %392 = vmatprep.subr.mxu0 0.0
    %393 = vmatpush1.msra.mxu0 0.0
    %394 = vmatprep.subr.mxu0 0.0
    %395 = vmatpush1.msra.mxu0 0.0
    %396 = vmatprep.subr.mxu0 0.0
    %397 = vmatpush1.msra.mxu0 0.0
    %398 = vmatprep.subr.mxu0 0.0
    %399 = vmatpush1.msra.mxu0 0.0
    %400 = vmatprep.subr.mxu0 0.0
    %401 = vmatpush1.msra.mxu0 0.0
    %402 = vmatprep.subr.mxu0 0.0
    %403 = vmatpush1.msra.mxu0 0.0
    %404 = vmatprep.subr.mxu0 0.0
    %405 = vmatpush1.msra.mxu0 0.0
    %406 = vmatprep.subr.mxu0 0.0
    %407 = vmatpush1.msra.mxu0 0.0
    %408 = vmatprep.subr.mxu0 0.0
    %409 = vmatpush1.msra.mxu0 0.0
    %410 = vmatprep.subr.mxu0 0.0
    %411 = vmatpush1.msra.mxu0 0.0
    %412 = vmatprep.subr.mxu0 0.0
    %413 = vmatpush1.msra.mxu0 0.0
    %414 = vmatprep.subr.mxu0 0.0
    %415 = vmatpush1.msra.mxu0 0.0
    %416 = vmatprep.subr.mxu0 0.0
    %417 = vmatpush1.msra.mxu0 0.0
    %418 = vmatprep.subr.mxu0 0.0
    %419 = vmatpush1.msra.mxu0 0.0
    %420 = vmatprep.subr.mxu0 0.0
    %421 = vmatpush1.msra.mxu0 0.0
    %422 = vmatprep.subr.mxu0 0.0
    %423 = vmatpush1.msra.mxu0 0.0
    %424 = vmatprep.mubr.f32.mxu0 0.0
    %425 = vmatmul.mubr.f32.gmra.mrb[0].mxu0 %v358
    %v426 = vpop.f32.mrb[0].mxu0
    %v427 = vadd.f32 0.0, %v426
    %v428 = vpop.f32.mrb[0].mxu0
    %v429 = vadd.f32 0.0, %v428
    %430 = vdwg.mxu0
    %v431 = vadd.f32 %v355, %v427
    %v432 = vxor.u32 %v431, 2147483648
    %v433 = vmul.f32 %v432, 1.442695
    %v434 = vpow.pop %v433
    %v435 = vadd.f32 %v434, 1.0
    %v436 = vrcp.pop %v435
    %v437 = vmul.f32 1.0, %v436
    %438 = vrot.lane.b32.xlu0 %v437, 64
    %v439 = vpop.permute.xlu0 %438
    %v440 = vadd.f32 %v429, %v165
    %v441 = vmul.f32 %v437, %v440
    %v442 = vadd.f32 %v356, %v441
    %v443 = vtanh.pop %v442
    %v444 = vsub.f32 1.0, %v439
    %v445 = vmul.f32 %v444, %v443
    %v446 = vmul.f32 %v439, %v353
    %v447 = vadd.f32 %v445, %v446
    %448 = vst [vmem:[#allocation3 + $0x10] sm:$0xff] %v447
    %v449 = vld [vmem:[#allocation2 + $0x30] sm:$0xff]
    %v450 = vld [vmem:[#allocation2 + $0x38] sm:$0xff]
    %v452 = vsel %vm168, %v447, 0
    %454 = vmatprep.subr.mxu0 %v150
    %455 = vmatpush1.msra.mxu0 %v149
    %456 = vmatprep.subr.mxu0 %v152
    %457 = vmatpush1.msra.mxu0 %v151
    %458 = vmatprep.subr.mxu0 %v154
    %459 = vmatpush1.msra.mxu0 %v153
    %460 = vmatprep.subr.mxu0 %v156
    %461 = vmatpush1.msra.mxu0 %v155
    %462 = vmatprep.subr.mxu0 %v158
    %463 = vmatpush1.msra.mxu0 %v157
    %464 = vmatprep.subr.mxu0 %v160
    %465 = vmatpush1.msra.mxu0 %v159
    %466 = vmatprep.subr.mxu0 %v162
    %467 = vmatpush1.msra.mxu0 %v161
    %468 = vmatprep.subr.mxu0 %v164
    %469 = vmatpush1.msra.mxu0 %v163
    %470 = vmatprep.subr.mxu0 0.0
    %471 = vmatpush1.msra.mxu0 0.0
    %472 = vmatprep.subr.mxu0 0.0
    %473 = vmatpush1.msra.mxu0 0.0
    %474 = vmatprep.subr.mxu0 0.0
    %475 = vmatpush1.msra.mxu0 0.0
    %476 = vmatprep.subr.mxu0 0.0
    %477 = vmatpush1.msra.mxu0 0.0
    %478 = vmatprep.subr.mxu0 0.0
    %479 = vmatpush1.msra.mxu0 0.0
    %480 = vmatprep.subr.mxu0 0.0
    %481 = vmatpush1.msra.mxu0 0.0
    %482 = vmatprep.subr.mxu0 0.0
    %483 = vmatpush1.msra.mxu0 0.0
    %484 = vmatprep.subr.mxu0 0.0
    %485 = vmatpush1.msra.mxu0 0.0
    %486 = vmatprep.subr.mxu0 0.0
    %487 = vmatpush1.msra.mxu0 0.0
    %488 = vmatprep.subr.mxu0 0.0
    %489 = vmatpush1.msra.mxu0 0.0
    %490 = vmatprep.subr.mxu0 0.0
    %491 = vmatpush1.msra.mxu0 0.0
    %492 = vmatprep.subr.mxu0 0.0
    %493 = vmatpush1.msra.mxu0 0.0
    %494 = vmatprep.subr.mxu0 0.0
    %495 = vmatpush1.msra.mxu0 0.0
    %496 = vmatprep.subr.mxu0 0.0
    %497 = vmatpush1.msra.mxu0 0.0
    %498 = vmatprep.subr.mxu0 0.0
    %499 = vmatpush1.msra.mxu0 0.0
    %500 = vmatprep.subr.mxu0 0.0
    %501 = vmatpush1.msra.mxu0 0.0
    %502 = vmatprep.subr.mxu0 0.0
    %503 = vmatpush1.msra.mxu0 0.0
    %504 = vmatprep.subr.mxu0 0.0
    %505 = vmatpush1.msra.mxu0 0.0
    %506 = vmatprep.subr.mxu0 0.0
    %507 = vmatpush1.msra.mxu0 0.0
    %508 = vmatprep.subr.mxu0 0.0
    %509 = vmatpush1.msra.mxu0 0.0
    %510 = vmatprep.subr.mxu0 0.0
    %511 = vmatpush1.msra.mxu0 0.0
    %512 = vmatprep.subr.mxu0 0.0
    %513 = vmatpush1.msra.mxu0 0.0
    %514 = vmatprep.subr.mxu0 0.0
    %515 = vmatpush1.msra.mxu0 0.0
    %516 = vmatprep.subr.mxu0 0.0
    %517 = vmatpush1.msra.mxu0 0.0
    %518 = vmatprep.mubr.f32.mxu0 0.0
    %519 = vmatmul.mubr.f32.gmra.mrb[0].mxu0 %v452
    %v520 = vpop.f32.mrb[0].mxu0
    %v521 = vadd.f32 0.0, %v520
    %v522 = vpop.f32.mrb[0].mxu0
    %v523 = vadd.f32 0.0, %v522
    %524 = vdwg.mxu0
    %v525 = vadd.f32 %v449, %v521
    %v526 = vxor.u32 %v525, 2147483648
    %v527 = vmul.f32 %v526, 1.442695
    %v528 = vpow.pop %v527
    %v529 = vadd.f32 %v528, 1.0
    %v530 = vrcp.pop %v529
    %v531 = vmul.f32 1.0, %v530
    %532 = vrot.lane.b32.xlu0 %v531, 64
    %v533 = vpop.permute.xlu0 %532
    %v534 = vadd.f32 %v523, %v165
    %v535 = vmul.f32 %v531, %v534
    %v536 = vadd.f32 %v450, %v535
    %v537 = vtanh.pop %v536
    %v538 = vsub.f32 1.0, %v533
    %v539 = vmul.f32 %v538, %v537
    %v540 = vmul.f32 %v533, %v447
    %v541 = vadd.f32 %v539, %v540
    %542 = vst [vmem:[#allocation3 + $0x18] sm:$0xff] %v541
    %v543 = vld [vmem:[#allocation2 + $0x40] sm:$0xff]
    %v544 = vld [vmem:[#allocation2 + $0x48] sm:$0xff]
    %v546 = vsel %vm168, %v541, 0
    %548 = vmatprep.subr.mxu0 %v150
    %549 = vmatpush1.msra.mxu0 %v149
    %550 = vmatprep.subr.mxu0 %v152
    %551 = vmatpush1.msra.mxu0 %v151
    %552 = vmatprep.subr.mxu0 %v154
    %553 = vmatpush1.msra.mxu0 %v153
    %554 = vmatprep.subr.mxu0 %v156
    %555 = vmatpush1.msra.mxu0 %v155
    %556 = vmatprep.subr.mxu0 %v158
    %557 = vmatpush1.msra.mxu0 %v157
    %558 = vmatprep.subr.mxu0 %v160
    %559 = vmatpush1.msra.mxu0 %v159
    %560 = vmatprep.subr.mxu0 %v162
    %561 = vmatpush1.msra.mxu0 %v161
    %562 = vmatprep.subr.mxu0 %v164
    %563 = vmatpush1.msra.mxu0 %v163
    %564 = vmatprep.subr.mxu0 0.0
    %565 = vmatpush1.msra.mxu0 0.0
    %566 = vmatprep.subr.mxu0 0.0
    %567 = vmatpush1.msra.mxu0 0.0
    %568 = vmatprep.subr.mxu0 0.0
    %569 = vmatpush1.msra.mxu0 0.0
    %570 = vmatprep.subr.mxu0 0.0
    %571 = vmatpush1.msra.mxu0 0.0
    %572 = vmatprep.subr.mxu0 0.0
    %573 = vmatpush1.msra.mxu0 0.0
    %574 = vmatprep.subr.mxu0 0.0
    %575 = vmatpush1.msra.mxu0 0.0
    %576 = vmatprep.subr.mxu0 0.0
    %577 = vmatpush1.msra.mxu0 0.0
    %578 = vmatprep.subr.mxu0 0.0
    %579 = vmatpush1.msra.mxu0 0.0
    %580 = vmatprep.subr.mxu0 0.0
    %581 = vmatpush1.msra.mxu0 0.0
    %582 = vmatprep.subr.mxu0 0.0
    %583 = vmatpush1.msra.mxu0 0.0
    %584 = vmatprep.subr.mxu0 0.0
    %585 = vmatpush1.msra.mxu0 0.0
    %586 = vmatprep.subr.mxu0 0.0
    %587 = vmatpush1.msra.mxu0 0.0
    %588 = vmatprep.subr.mxu0 0.0
    %589 = vmatpush1.msra.mxu0 0.0
    %590 = vmatprep.subr.mxu0 0.0
    %591 = vmatpush1.msra.mxu0 0.0
    %592 = vmatprep.subr.mxu0 0.0
    %593 = vmatpush1.msra.mxu0 0.0
    %594 = vmatprep.subr.mxu0 0.0
    %595 = vmatpush1.msra.mxu0 0.0
    %596 = vmatprep.subr.mxu0 0.0
    %597 = vmatpush1.msra.mxu0 0.0
    %598 = vmatprep.subr.mxu0 0.0
    %599 = vmatpush1.msra.mxu0 0.0
    %600 = vmatprep.subr.mxu0 0.0
    %601 = vmatpush1.msra.mxu0 0.0
    %602 = vmatprep.subr.mxu0 0.0
    %603 = vmatpush1.msra.mxu0 0.0
    %604 = vmatprep.subr.mxu0 0.0
    %605 = vmatpush1.msra.mxu0 0.0
    %606 = vmatprep.subr.mxu0 0.0
    %607 = vmatpush1.msra.mxu0 0.0
    %608 = vmatprep.subr.mxu0 0.0
    %609 = vmatpush1.msra.mxu0 0.0
    %610 = vmatprep.subr.mxu0 0.0
    %611 = vmatpush1.msra.mxu0 0.0
    %612 = vmatprep.mubr.f32.mxu0 0.0
    %613 = vmatmul.mubr.f32.gmra.mrb[0].mxu0 %v546
    %v614 = vpop.f32.mrb[0].mxu0
    %v615 = vadd.f32 0.0, %v614
    %v616 = vpop.f32.mrb[0].mxu0
    %v617 = vadd.f32 0.0, %v616
    %618 = vdwg.mxu0
    %v619 = vadd.f32 %v543, %v615
    %v620 = vxor.u32 %v619, 2147483648
    %v621 = vmul.f32 %v620, 1.442695
    %v622 = vpow.pop %v621
    %v623 = vadd.f32 %v622, 1.0
    %v624 = vrcp.pop %v623
    %v625 = vmul.f32 1.0, %v624
    %626 = vrot.lane.b32.xlu0 %v625, 64
    %v627 = vpop.permute.xlu0 %626
    %v628 = vadd.f32 %v617, %v165
    %v629 = vmul.f32 %v625, %v628
    %v630 = vadd.f32 %v544, %v629
    %v631 = vtanh.pop %v630
    %v632 = vsub.f32 1.0, %v627
    %v633 = vmul.f32 %v632, %v631
    %v634 = vmul.f32 %v627, %v541
    %v635 = vadd.f32 %v633, %v634
    %636 = vst [vmem:[#allocation3 + $0x20] sm:$0xff] %v635
    %v637 = vld [vmem:[#allocation2 + $0x50] sm:$0xff]
    %v638 = vld [vmem:[#allocation2 + $0x58] sm:$0xff]
    %v640 = vsel %vm168, %v635, 0
    %642 = vmatprep.subr.mxu0 %v150
    %643 = vmatpush1.msra.mxu0 %v149
    %644 = vmatprep.subr.mxu0 %v152
    %645 = vmatpush1.msra.mxu0 %v151
    %646 = vmatprep.subr.mxu0 %v154
    %647 = vmatpush1.msra.mxu0 %v153
    %648 = vmatprep.subr.mxu0 %v156
    %649 = vmatpush1.msra.mxu0 %v155
    %650 = vmatprep.subr.mxu0 %v158
    %651 = vmatpush1.msra.mxu0 %v157
    %652 = vmatprep.subr.mxu0 %v160
    %653 = vmatpush1.msra.mxu0 %v159
    %654 = vmatprep.subr.mxu0 %v162
    %655 = vmatpush1.msra.mxu0 %v161
    %656 = vmatprep.subr.mxu0 %v164
    %657 = vmatpush1.msra.mxu0 %v163
    %658 = vmatprep.subr.mxu0 0.0
    %659 = vmatpush1.msra.mxu0 0.0
    %660 = vmatprep.subr.mxu0 0.0
    %661 = vmatpush1.msra.mxu0 0.0
    %662 = vmatprep.subr.mxu0 0.0
    %663 = vmatpush1.msra.mxu0 0.0
    %664 = vmatprep.subr.mxu0 0.0
    %665 = vmatpush1.msra.mxu0 0.0
    %666 = vmatprep.subr.mxu0 0.0
    %667 = vmatpush1.msra.mxu0 0.0
    %668 = vmatprep.subr.mxu0 0.0
    %669 = vmatpush1.msra.mxu0 0.0
    %670 = vmatprep.subr.mxu0 0.0
    %671 = vmatpush1.msra.mxu0 0.0
    %672 = vmatprep.subr.mxu0 0.0
    %673 = vmatpush1.msra.mxu0 0.0
    %674 = vmatprep.subr.mxu0 0.0
    %675 = vmatpush1.msra.mxu0 0.0
    %676 = vmatprep.subr.mxu0 0.0
    %677 = vmatpush1.msra.mxu0 0.0
    %678 = vmatprep.subr.mxu0 0.0
    %679 = vmatpush1.msra.mxu0 0.0
    %680 = vmatprep.subr.mxu0 0.0
    %681 = vmatpush1.msra.mxu0 0.0
    %682 = vmatprep.subr.mxu0 0.0
    %683 = vmatpush1.msra.mxu0 0.0
    %684 = vmatprep.subr.mxu0 0.0
    %685 = vmatpush1.msra.mxu0 0.0
    %686 = vmatprep.subr.mxu0 0.0
    %687 = vmatpush1.msra.mxu0 0.0
    %688 = vmatprep.subr.mxu0 0.0
    %689 = vmatpush1.msra.mxu0 0.0
    %690 = vmatprep.subr.mxu0 0.0
    %691 = vmatpush1.msra.mxu0 0.0
    %692 = vmatprep.subr.mxu0 0.0
    %693 = vmatpush1.msra.mxu0 0.0
    %694 = vmatprep.subr.mxu0 0.0
    %695 = vmatpush1.msra.mxu0 0.0
    %696 = vmatprep.subr.mxu0 0.0
    %697 = vmatpush1.msra.mxu0 0.0
    %698 = vmatprep.subr.mxu0 0.0
    %699 = vmatpush1.msra.mxu0 0.0
    %700 = vmatprep.subr.mxu0 0.0
    %701 = vmatpush1.msra.mxu0 0.0
    %702 = vmatprep.subr.mxu0 0.0
    %703 = vmatpush1.msra.mxu0 0.0
    %704 = vmatprep.subr.mxu0 0.0
    %705 = vmatpush1.msra.mxu0 0.0
    %706 = vmatprep.mubr.f32.mxu0 0.0
    %707 = vmatmul.mubr.f32.gmra.mrb[0].mxu0 %v640
    %v708 = vpop.f32.mrb[0].mxu0
    %v709 = vadd.f32 0.0, %v708
    %v710 = vpop.f32.mrb[0].mxu0
    %v711 = vadd.f32 0.0, %v710
    %712 = vdwg.mxu0
    %v713 = vadd.f32 %v637, %v709
    %v714 = vxor.u32 %v713, 2147483648
    %v715 = vmul.f32 %v714, 1.442695
    %v716 = vpow.pop %v715
    %v717 = vadd.f32 %v716, 1.0
    %v718 = vrcp.pop %v717
    %v719 = vmul.f32 1.0, %v718
    %720 = vrot.lane.b32.xlu0 %v719, 64
    %v721 = vpop.permute.xlu0 %720
    %v722 = vadd.f32 %v711, %v165
    %v723 = vmul.f32 %v719, %v722
    %v724 = vadd.f32 %v638, %v723
    %v725 = vtanh.pop %v724
    %v726 = vsub.f32 1.0, %v721
    %v727 = vmul.f32 %v726, %v725
    %v728 = vmul.f32 %v721, %v635
    %v729 = vadd.f32 %v727, %v728
    %730 = vst [vmem:[#allocation3 + $0x28] sm:$0xff] %v729
    %v731 = vld [vmem:[#allocation2 + $0x60] sm:$0xff]
    %v732 = vld [vmem:[#allocation2 + $0x68] sm:$0xff]
    %v734 = vsel %vm168, %v729, 0
    %736 = vmatprep.subr.mxu0 %v150
    %737 = vmatpush1.msra.mxu0 %v149
    %738 = vmatprep.subr.mxu0 %v152
    %739 = vmatpush1.msra.mxu0 %v151
    %740 = vmatprep.subr.mxu0 %v154
    %741 = vmatpush1.msra.mxu0 %v153
    %742 = vmatprep.subr.mxu0 %v156
    %743 = vmatpush1.msra.mxu0 %v155
    %744 = vmatprep.subr.mxu0 %v158
    %745 = vmatpush1.msra.mxu0 %v157
    %746 = vmatprep.subr.mxu0 %v160
    %747 = vmatpush1.msra.mxu0 %v159
    %748 = vmatprep.subr.mxu0 %v162
    %749 = vmatpush1.msra.mxu0 %v161
    %750 = vmatprep.subr.mxu0 %v164
    %751 = vmatpush1.msra.mxu0 %v163
    %752 = vmatprep.subr.mxu0 0.0
    %753 = vmatpush1.msra.mxu0 0.0
    %754 = vmatprep.subr.mxu0 0.0
    %755 = vmatpush1.msra.mxu0 0.0
    %756 = vmatprep.subr.mxu0 0.0
    %757 = vmatpush1.msra.mxu0 0.0
    %758 = vmatprep.subr.mxu0 0.0
    %759 = vmatpush1.msra.mxu0 0.0
    %760 = vmatprep.subr.mxu0 0.0
    %761 = vmatpush1.msra.mxu0 0.0
    %762 = vmatprep.subr.mxu0 0.0
    %763 = vmatpush1.msra.mxu0 0.0
    %764 = vmatprep.subr.mxu0 0.0
    %765 = vmatpush1.msra.mxu0 0.0
    %766 = vmatprep.subr.mxu0 0.0
    %767 = vmatpush1.msra.mxu0 0.0
    %768 = vmatprep.subr.mxu0 0.0
    %769 = vmatpush1.msra.mxu0 0.0
    %770 = vmatprep.subr.mxu0 0.0
    %771 = vmatpush1.msra.mxu0 0.0
    %772 = vmatprep.subr.mxu0 0.0
    %773 = vmatpush1.msra.mxu0 0.0
    %774 = vmatprep.subr.mxu0 0.0
    %775 = vmatpush1.msra.mxu0 0.0
    %776 = vmatprep.subr.mxu0 0.0
    %777 = vmatpush1.msra.mxu0 0.0
    %778 = vmatprep.subr.mxu0 0.0
    %779 = vmatpush1.msra.mxu0 0.0
    %780 = vmatprep.subr.mxu0 0.0
    %781 = vmatpush1.msra.mxu0 0.0
    %782 = vmatprep.subr.mxu0 0.0
    %783 = vmatpush1.msra.mxu0 0.0
    %784 = vmatprep.subr.mxu0 0.0
    %785 = vmatpush1.msra.mxu0 0.0
    %786 = vmatprep.subr.mxu0 0.0
    %787 = vmatpush1.msra.mxu0 0.0
    %788 = vmatprep.subr.mxu0 0.0
    %789 = vmatpush1.msra.mxu0 0.0
    %790 = vmatprep.subr.mxu0 0.0
    %791 = vmatpush1.msra.mxu0 0.0
    %792 = vmatprep.subr.mxu0 0.0
    %793 = vmatpush1.msra.mxu0 0.0
    %794 = vmatprep.subr.mxu0 0.0
    %795 = vmatpush1.msra.mxu0 0.0
    %796 = vmatprep.subr.mxu0 0.0
    %797 = vmatpush1.msra.mxu0 0.0
    %798 = vmatprep.subr.mxu0 0.0
    %799 = vmatpush1.msra.mxu0 0.0
    %800 = vmatprep.mubr.f32.mxu0 0.0
    %801 = vmatmul.mubr.f32.gmra.mrb[0].mxu0 %v734
    %v802 = vpop.f32.mrb[0].mxu0
    %v803 = vadd.f32 0.0, %v802
    %v804 = vpop.f32.mrb[0].mxu0
    %v805 = vadd.f32 0.0, %v804
    %806 = vdwg.mxu0
    %v807 = vadd.f32 %v731, %v803
    %v808 = vxor.u32 %v807, 2147483648
    %v809 = vmul.f32 %v808, 1.442695
    %v810 = vpow.pop %v809
    %v811 = vadd.f32 %v810, 1.0
    %v812 = vrcp.pop %v811
    %v813 = vmul.f32 1.0, %v812
    %814 = vrot.lane.b32.xlu0 %v813, 64
    %v815 = vpop.permute.xlu0 %814
    %v816 = vadd.f32 %v805, %v165
    %v817 = vmul.f32 %v813, %v816
    %v818 = vadd.f32 %v732, %v817
    %v819 = vtanh.pop %v818
    %v820 = vsub.f32 1.0, %v815
    %v821 = vmul.f32 %v820, %v819
    %v822 = vmul.f32 %v815, %v729
    %v823 = vadd.f32 %v821, %v822
    %824 = vst [vmem:[#allocation3 + $0x30] sm:$0xff] %v823
    %v825 = vld [vmem:[#allocation2 + $0x70] sm:$0xff]
    %v826 = vld [vmem:[#allocation2 + $0x78] sm:$0xff]
    %v828 = vsel %vm168, %v823, 0
    %830 = vmatprep.subr.mxu0 %v150
    %831 = vmatpush1.msra.mxu0 %v149
    %832 = vmatprep.subr.mxu0 %v152
    %833 = vmatpush1.msra.mxu0 %v151
    %834 = vmatprep.subr.mxu0 %v154
    %835 = vmatpush1.msra.mxu0 %v153
    %836 = vmatprep.subr.mxu0 %v156
    %837 = vmatpush1.msra.mxu0 %v155
    %838 = vmatprep.subr.mxu0 %v158
    %839 = vmatpush1.msra.mxu0 %v157
    %840 = vmatprep.subr.mxu0 %v160
    %841 = vmatpush1.msra.mxu0 %v159
    %842 = vmatprep.subr.mxu0 %v162
    %843 = vmatpush1.msra.mxu0 %v161
    %844 = vmatprep.subr.mxu0 %v164
    %845 = vmatpush1.msra.mxu0 %v163
    %846 = vmatprep.subr.mxu0 0.0
    %847 = vmatpush1.msra.mxu0 0.0
    %848 = vmatprep.subr.mxu0 0.0
    %849 = vmatpush1.msra.mxu0 0.0
    %850 = vmatprep.subr.mxu0 0.0
    %851 = vmatpush1.msra.mxu0 0.0
    %852 = vmatprep.subr.mxu0 0.0
    %853 = vmatpush1.msra.mxu0 0.0
    %854 = vmatprep.subr.mxu0 0.0
    %855 = vmatpush1.msra.mxu0 0.0
    %856 = vmatprep.subr.mxu0 0.0
    %857 = vmatpush1.msra.mxu0 0.0
    %858 = vmatprep.subr.mxu0 0.0
    %859 = vmatpush1.msra.mxu0 0.0
    %860 = vmatprep.subr.mxu0 0.0
    %861 = vmatpush1.msra.mxu0 0.0
    %862 = vmatprep.subr.mxu0 0.0
    %863 = vmatpush1.msra.mxu0 0.0
    %864 = vmatprep.subr.mxu0 0.0
    %865 = vmatpush1.msra.mxu0 0.0
    %866 = vmatprep.subr.mxu0 0.0
    %867 = vmatpush1.msra.mxu0 0.0
    %868 = vmatprep.subr.mxu0 0.0
    %869 = vmatpush1.msra.mxu0 0.0
    %870 = vmatprep.subr.mxu0 0.0
    %871 = vmatpush1.msra.mxu0 0.0
    %872 = vmatprep.subr.mxu0 0.0
    %873 = vmatpush1.msra.mxu0 0.0
    %874 = vmatprep.subr.mxu0 0.0
    %875 = vmatpush1.msra.mxu0 0.0
    %876 = vmatprep.subr.mxu0 0.0
    %877 = vmatpush1.msra.mxu0 0.0
    %878 = vmatprep.subr.mxu0 0.0
    %879 = vmatpush1.msra.mxu0 0.0
    %880 = vmatprep.subr.mxu0 0.0
    %881 = vmatpush1.msra.mxu0 0.0
    %882 = vmatprep.subr.mxu0 0.0
    %883 = vmatpush1.msra.mxu0 0.0
    %884 = vmatprep.subr.mxu0 0.0
    %885 = vmatpush1.msra.mxu0 0.0
    %886 = vmatprep.subr.mxu0 0.0
    %887 = vmatpush1.msra.mxu0 0.0
    %888 = vmatprep.subr.mxu0 0.0
    %889 = vmatpush1.msra.mxu0 0.0
    %890 = vmatprep.subr.mxu0 0.0
    %891 = vmatpush1.msra.mxu0 0.0
    %892 = vmatprep.subr.mxu0 0.0
    %893 = vmatpush1.msra.mxu0 0.0
    %894 = vmatprep.mubr.f32.mxu0 0.0
    %895 = vmatmul.mubr.f32.gmra.mrb[0].mxu0 %v828
    %v896 = vpop.f32.mrb[0].mxu0
    %v897 = vadd.f32 0.0, %v896
    %v898 = vpop.f32.mrb[0].mxu0
    %v899 = vadd.f32 0.0, %v898
    %900 = vdwg.mxu0
    %v901 = vadd.f32 %v825, %v897
    %v902 = vxor.u32 %v901, 2147483648
    %v903 = vmul.f32 %v902, 1.442695
    %v904 = vpow.pop %v903
    %v905 = vadd.f32 %v904, 1.0
    %v906 = vrcp.pop %v905
    %v907 = vmul.f32 1.0, %v906
    %908 = vrot.lane.b32.xlu0 %v907, 64
    %v909 = vpop.permute.xlu0 %908
    %v910 = vadd.f32 %v899, %v165
    %v911 = vmul.f32 %v907, %v910
    %v912 = vadd.f32 %v826, %v911
    %v913 = vtanh.pop %v912
    %v914 = vsub.f32 1.0, %v909
    %v915 = vmul.f32 %v914, %v913
    %v916 = vmul.f32 %v909, %v823
    %v917 = vadd.f32 %v915, %v916
    %918 = vst [vmem:[#allocation3 + $0x38] sm:$0xff] %v917
    %v919 = vld [vmem:[#allocation3] sm:$0xff]
    %v920 = vld [vmem:[#allocation3 + $0x8] sm:$0xff]
    %v921 = vld [vmem:[#allocation3 + $0x10] sm:$0xff]
    %v922 = vld [vmem:[#allocation3 + $0x18] sm:$0xff]
    %v923 = vld [vmem:[#allocation3 + $0x20] sm:$0xff]
    %v924 = vld [vmem:[#allocation3 + $0x28] sm:$0xff]
    %v925 = vld [vmem:[#allocation3 + $0x30] sm:$0xff]
    %v926 = vld [vmem:[#allocation3 + $0x38] sm:$0xff]
    %s927 = scalar_lea.vmem [#allocation4], 384
    %v928 = vld [vmem:[%s927] sm:$0xff]
    %v929 = vld [vmem:[%s927 + $0x8] sm:$0xff]
    %v930 = vld [vmem:[%s927 + $0x10] sm:$0xff]
    %v931 = vld [vmem:[%s927 + $0x18] sm:$0xff]
    %v932 = vld [vmem:[%s927 + $0x20] sm:$0xff]
    %v933 = vld [vmem:[%s927 + $0x28] sm:$0xff]
    %v934 = vld [vmem:[%s927 + $0x30] sm:$0xff]
    %v935 = vld [vmem:[%s927 + $0x38] sm:$0xff]
    %v936 = vld [vmem:[%s927 + $0x40] sm:$0xff]
    %v937 = vld [vmem:[%s927 + $0x48] sm:$0xff]
    %v938 = vld [vmem:[%s927 + $0x50] sm:$0xff]
    %v939 = vld [vmem:[%s927 + $0x58] sm:$0xff]
    %v940 = vld [vmem:[%s927 + $0x60] sm:$0xff]
    %v941 = vld [vmem:[%s927 + $0x68] sm:$0xff]
    %v942 = vld [vmem:[%s927 + $0x70] sm:$0xff]
    %v943 = vld [vmem:[%s927 + $0x78] sm:$0xff]
    %s944 = scalar_lea.vmem %s2, 2
    %v945 = vld [vmem:[%s944] ss:$8 sm:$0x3]
    %v947 = vlaneseq
    %v948 = vshrl.u32 %v947, 7
    %v949 = vsub.s32 0, %v948
    %v950 = vrot.slane %v945, %v949
    %v951 = vlaneseq
    %v952 = vshrl.u32 %v951, 7
    %v953 = vsub.s32 1, %v952
    %v954 = vrot.slane %v945, %v953
    %v958 = vsel %vm168, %v919, 0
    %v961 = vsel %vm168, %v920, 0
    %v964 = vsel %vm168, %v921, 0
    %v967 = vsel %vm168, %v922, 0
    %v970 = vsel %vm168, %v923, 0
    %v973 = vsel %vm168, %v924, 0
    %v976 = vsel %vm168, %v925, 0
    %v979 = vsel %vm168, %v926, 0
    %981 = vmatprep.subr.mxu0 %v929
    %982 = vmatpush1.msra.mxu0 %v928
    %983 = vmatprep.subr.mxu0 %v931
    %984 = vmatpush1.msra.mxu0 %v930
    %985 = vmatprep.subr.mxu0 %v933
    %986 = vmatpush1.msra.mxu0 %v932
    %987 = vmatprep.subr.mxu0 %v935
    %988 = vmatpush1.msra.mxu0 %v934
    %989 = vmatprep.subr.mxu0 %v937
    %990 = vmatpush1.msra.mxu0 %v936
    %991 = vmatprep.subr.mxu0 %v939
    %992 = vmatpush1.msra.mxu0 %v938
    %993 = vmatprep.subr.mxu0 %v941
    %994 = vmatpush1.msra.mxu0 %v940
    %995 = vmatprep.subr.mxu0 %v943
    %996 = vmatpush1.msra.mxu0 %v942
    %997 = vmatprep.subr.mxu0 0.0
    %998 = vmatpush1.msra.mxu0 0.0
    %999 = vmatprep.subr.mxu0 0.0
    %1000 = vmatpush1.msra.mxu0 0.0
    %1001 = vmatprep.subr.mxu0 0.0
    %1002 = vmatpush1.msra.mxu0 0.0
    %1003 = vmatprep.subr.mxu0 0.0
    %1004 = vmatpush1.msra.mxu0 0.0
    %1005 = vmatprep.subr.mxu0 0.0
    %1006 = vmatpush1.msra.mxu0 0.0
    %1007 = vmatprep.subr.mxu0 0.0
    %1008 = vmatpush1.msra.mxu0 0.0
    %1009 = vmatprep.subr.mxu0 0.0
    %1010 = vmatpush1.msra.mxu0 0.0
    %1011 = vmatprep.subr.mxu0 0.0
    %1012 = vmatpush1.msra.mxu0 0.0
    %1013 = vmatprep.subr.mxu0 0.0
    %1014 = vmatpush1.msra.mxu0 0.0
    %1015 = vmatprep.subr.mxu0 0.0
    %1016 = vmatpush1.msra.mxu0 0.0
    %1017 = vmatprep.subr.mxu0 0.0
    %1018 = vmatpush1.msra.mxu0 0.0
    %1019 = vmatprep.subr.mxu0 0.0
    %1020 = vmatpush1.msra.mxu0 0.0
    %1021 = vmatprep.subr.mxu0 0.0
    %1022 = vmatpush1.msra.mxu0 0.0
    %1023 = vmatprep.subr.mxu0 0.0
    %1024 = vmatpush1.msra.mxu0 0.0
    %1025 = vmatprep.subr.mxu0 0.0
    %1026 = vmatpush1.msra.mxu0 0.0
    %1027 = vmatprep.subr.mxu0 0.0
    %1028 = vmatpush1.msra.mxu0 0.0
    %1029 = vmatprep.subr.mxu0 0.0
    %1030 = vmatpush1.msra.mxu0 0.0
    %1031 = vmatprep.subr.mxu0 0.0
    %1032 = vmatpush1.msra.mxu0 0.0
    %1033 = vmatprep.subr.mxu0 0.0
    %1034 = vmatpush1.msra.mxu0 0.0
    %1035 = vmatprep.subr.mxu0 0.0
    %1036 = vmatpush1.msra.mxu0 0.0
    %1037 = vmatprep.subr.mxu0 0.0
    %1038 = vmatpush1.msra.mxu0 0.0
    %1039 = vmatprep.subr.mxu0 0.0
    %1040 = vmatpush1.msra.mxu0 0.0
    %1041 = vmatprep.subr.mxu0 0.0
    %1042 = vmatpush1.msra.mxu0 0.0
    %1043 = vmatprep.subr.mxu0 0.0
    %1044 = vmatpush1.msra.mxu0 0.0
    %1045 = vmatprep.mubr.f32.mxu0 0.0
    %1046 = vmatmul.mubr.f32.gmra.mrb[0].mxu0 %v958
    %v1047 = vpop.f32.mrb[0].mxu0
    %v1048 = vadd.f32 %v950, %v1047
    %v1049 = vpop.f32.mrb[0].mxu0
    %v1050 = vadd.f32 %v954, %v1049
    %1051 = vmatprep.mubr.f32.mxu0 0.0
    %1052 = vmatmul.mubr.f32.gmra.mrb[0].mxu0 %v961
    %v1053 = vpop.f32.mrb[0].mxu0
    %v1054 = vadd.f32 %v950, %v1053
    %v1055 = vpop.f32.mrb[0].mxu0
    %v1056 = vadd.f32 %v954, %v1055
    %1057 = vmatprep.mubr.f32.mxu0 0.0
    %1058 = vmatmul.mubr.f32.gmra.mrb[0].mxu0 %v964
    %v1059 = vpop.f32.mrb[0].mxu0
    %v1060 = vadd.f32 %v950, %v1059
    %v1061 = vpop.f32.mrb[0].mxu0
    %v1062 = vadd.f32 %v954, %v1061
    %1063 = vmatprep.mubr.f32.mxu0 0.0
    %1064 = vmatmul.mubr.f32.gmra.mrb[0].mxu0 %v967
    %v1065 = vpop.f32.mrb[0].mxu0
    %v1066 = vadd.f32 %v950, %v1065
    %v1067 = vpop.f32.mrb[0].mxu0
    %v1068 = vadd.f32 %v954, %v1067
    %1069 = vmatprep.mubr.f32.mxu0 0.0
    %1070 = vmatmul.mubr.f32.gmra.mrb[0].mxu0 %v970
    %v1071 = vpop.f32.mrb[0].mxu0
    %v1072 = vadd.f32 %v950, %v1071
    %v1073 = vpop.f32.mrb[0].mxu0
    %v1074 = vadd.f32 %v954, %v1073
    %1075 = vmatprep.mubr.f32.mxu0 0.0
    %1076 = vmatmul.mubr.f32.gmra.mrb[0].mxu0 %v973
    %v1077 = vpop.f32.mrb[0].mxu0
    %v1078 = vadd.f32 %v950, %v1077
    %v1079 = vpop.f32.mrb[0].mxu0
    %v1080 = vadd.f32 %v954, %v1079
    %1081 = vmatprep.mubr.f32.mxu0 0.0
    %1082 = vmatmul.mubr.f32.gmra.mrb[0].mxu0 %v976
    %v1083 = vpop.f32.mrb[0].mxu0
    %v1084 = vadd.f32 %v950, %v1083
    %v1085 = vpop.f32.mrb[0].mxu0
    %v1086 = vadd.f32 %v954, %v1085
    %1087 = vmatprep.mubr.f32.mxu0 0.0
    %1088 = vmatmul.mubr.f32.gmra.mrb[0].mxu0 %v979
    %v1089 = vpop.f32.mrb[0].mxu0
    %v1090 = vadd.f32 %v950, %v1089
    %v1091 = vpop.f32.mrb[0].mxu0
    %v1092 = vadd.f32 %v954, %v1091
    %1093 = vdwg.mxu0
    %1094 = vst [vmem:[#allocation2] sm:$0xff] %v1048
    %1095 = vst [vmem:[#allocation2 + $0x8] sm:$0xff] %v1050
    %1096 = vst [vmem:[#allocation2 + $0x10] sm:$0xff] %v1054
    %1097 = vst [vmem:[#allocation2 + $0x18] sm:$0xff] %v1056
    %1098 = vst [vmem:[#allocation2 + $0x20] sm:$0xff] %v1060
    %1099 = vst [vmem:[#allocation2 + $0x28] sm:$0xff] %v1062
    %1100 = vst [vmem:[#allocation2 + $0x30] sm:$0xff] %v1066
    %1101 = vst [vmem:[#allocation2 + $0x38] sm:$0xff] %v1068
    %1102 = vst [vmem:[#allocation2 + $0x40] sm:$0xff] %v1072
    %1103 = vst [vmem:[#allocation2 + $0x48] sm:$0xff] %v1074
    %1104 = vst [vmem:[#allocation2 + $0x50] sm:$0xff] %v1078
    %1105 = vst [vmem:[#allocation2 + $0x58] sm:$0xff] %v1080
    %1106 = vst [vmem:[#allocation2 + $0x60] sm:$0xff] %v1084
    %1107 = vst [vmem:[#allocation2 + $0x68] sm:$0xff] %v1086
    %1108 = vst [vmem:[#allocation2 + $0x70] sm:$0xff] %v1090
    %1109 = vst [vmem:[#allocation2 + $0x78] sm:$0xff] %v1092
    %s1110 = scalar_lea.vmem [#allocation4], 128
    %v1111 = vld [vmem:[%s1110] sm:$0xff]
    %v1112 = vld [vmem:[%s1110 + $0x8] sm:$0xff]
    %v1113 = vld [vmem:[%s1110 + $0x10] sm:$0xff]
    %v1114 = vld [vmem:[%s1110 + $0x18] sm:$0xff]
    %v1115 = vld [vmem:[%s1110 + $0x20] sm:$0xff]
    %v1116 = vld [vmem:[%s1110 + $0x28] sm:$0xff]
    %v1117 = vld [vmem:[%s1110 + $0x30] sm:$0xff]
    %v1118 = vld [vmem:[%s1110 + $0x38] sm:$0xff]
    %v1119 = vld [vmem:[%s1110 + $0x40] sm:$0xff]
    %v1120 = vld [vmem:[%s1110 + $0x48] sm:$0xff]
    %v1121 = vld [vmem:[%s1110 + $0x50] sm:$0xff]
    %v1122 = vld [vmem:[%s1110 + $0x58] sm:$0xff]
    %v1123 = vld [vmem:[%s1110 + $0x60] sm:$0xff]
    %v1124 = vld [vmem:[%s1110 + $0x68] sm:$0xff]
    %v1125 = vld [vmem:[%s1110 + $0x70] sm:$0xff]
    %v1126 = vld [vmem:[%s1110 + $0x78] sm:$0xff]
    %v1127 = vld [vmem:[%s2 + $0x5] ss:$0 sm:$0xff]
    %v1128 = vld [vmem:[#allocation2] sm:$0xff]
    %v1129 = vld [vmem:[#allocation2 + $0x8] sm:$0xff]
    %1130 = vmatprep.subr.mxu0 %v1112
    %1131 = vmatpush1.msra.mxu0 %v1111
    %1132 = vmatprep.subr.mxu0 %v1114
    %1133 = vmatpush1.msra.mxu0 %v1113
    %1134 = vmatprep.subr.mxu0 %v1116
    %1135 = vmatpush1.msra.mxu0 %v1115
    %1136 = vmatprep.subr.mxu0 %v1118
    %1137 = vmatpush1.msra.mxu0 %v1117
    %1138 = vmatprep.subr.mxu0 %v1120
    %1139 = vmatpush1.msra.mxu0 %v1119
    %1140 = vmatprep.subr.mxu0 %v1122
    %1141 = vmatpush1.msra.mxu0 %v1121
    %1142 = vmatprep.subr.mxu0 %v1124
    %1143 = vmatpush1.msra.mxu0 %v1123
    %1144 = vmatprep.subr.mxu0 %v1126
    %1145 = vmatpush1.msra.mxu0 %v1125
    %1146 = vmatprep.subr.mxu0 0.0
    %1147 = vmatpush1.msra.mxu0 0.0
    %1148 = vmatprep.subr.mxu0 0.0
    %1149 = vmatpush1.msra.mxu0 0.0
    %1150 = vmatprep.subr.mxu0 0.0
    %1151 = vmatpush1.msra.mxu0 0.0
    %1152 = vmatprep.subr.mxu0 0.0
    %1153 = vmatpush1.msra.mxu0 0.0
    %1154 = vmatprep.subr.mxu0 0.0
    %1155 = vmatpush1.msra.mxu0 0.0
    %1156 = vmatprep.subr.mxu0 0.0
    %1157 = vmatpush1.msra.mxu0 0.0
    %1158 = vmatprep.subr.mxu0 0.0
    %1159 = vmatpush1.msra.mxu0 0.0
    %1160 = vmatprep.subr.mxu0 0.0
    %1161 = vmatpush1.msra.mxu0 0.0
    %1162 = vmatprep.subr.mxu0 0.0
    %1163 = vmatpush1.msra.mxu0 0.0
    %1164 = vmatprep.subr.mxu0 0.0
    %1165 = vmatpush1.msra.mxu0 0.0
    %1166 = vmatprep.subr.mxu0 0.0
    %1167 = vmatpush1.msra.mxu0 0.0
    %1168 = vmatprep.subr.mxu0 0.0
    %1169 = vmatpush1.msra.mxu0 0.0
    %1170 = vmatprep.subr.mxu0 0.0
    %1171 = vmatpush1.msra.mxu0 0.0
    %1172 = vmatprep.subr.mxu0 0.0
    %1173 = vmatpush1.msra.mxu0 0.0
    %1174 = vmatprep.subr.mxu0 0.0
    %1175 = vmatpush1.msra.mxu0 0.0
    %1176 = vmatprep.subr.mxu0 0.0
    %1177 = vmatpush1.msra.mxu0 0.0
    %1178 = vmatprep.subr.mxu0 0.0
    %1179 = vmatpush1.msra.mxu0 0.0
    %1180 = vmatprep.subr.mxu0 0.0
    %1181 = vmatpush1.msra.mxu0 0.0
    %1182 = vmatprep.subr.mxu0 0.0
    %1183 = vmatpush1.msra.mxu0 0.0
    %1184 = vmatprep.subr.mxu0 0.0
    %1185 = vmatpush1.msra.mxu0 0.0
    %1186 = vmatprep.subr.mxu0 0.0
    %1187 = vmatpush1.msra.mxu0 0.0
    %1188 = vmatprep.subr.mxu0 0.0
    %1189 = vmatpush1.msra.mxu0 0.0
    %1190 = vmatprep.subr.mxu0 0.0
    %1191 = vmatpush1.msra.mxu0 0.0
    %1192 = vmatprep.subr.mxu0 0.0
    %1193 = vmatpush1.msra.mxu0 0.0
    %1194 = vmatprep.mubr.f32.mxu0 0.0
    %1195 = vmatmul.mubr.f32.gmra.mrb[0].mxu0 %v170
    %v1196 = vpop.f32.mrb[0].mxu0
    %v1197 = vadd.f32 0.0, %v1196
    %v1198 = vpop.f32.mrb[0].mxu0
    %v1199 = vadd.f32 0.0, %v1198
    %1200 = vdwg.mxu0
    %v1201 = vadd.f32 %v1128, %v1197
    %v1202 = vxor.u32 %v1201, 2147483648
    %v1203 = vmul.f32 %v1202, 1.442695
    %v1204 = vpow.pop %v1203
    %v1205 = vadd.f32 %v1204, 1.0
    %v1206 = vrcp.pop %v1205
    %v1207 = vmul.f32 1.0, %v1206
    %1208 = vrot.lane.b32.xlu0 %v1207, 64
    %v1209 = vpop.permute.xlu0 %1208
    %v1210 = vadd.f32 %v1199, %v1127
    %v1211 = vmul.f32 %v1207, %v1210
    %v1212 = vadd.f32 %v1129, %v1211
    %v1213 = vtanh.pop %v1212
    %v1214 = vsub.f32 1.0, %v1209
    %v1215 = vmul.f32 %v1214, %v1213
    %v1216 = vmul.f32 %v1209, 0.0
    %v1217 = vadd.f32 %v1215, %v1216
    %1218 = vst [vmem:[#allocation3] sm:$0xff] %v1217
    %v1219 = vld [vmem:[#allocation2 + $0x10] sm:$0xff]
    %v1220 = vld [vmem:[#allocation2 + $0x18] sm:$0xff]
    %v1222 = vsel %vm168, %v1217, 0
    %1224 = vmatprep.subr.mxu0 %v1112
    %1225 = vmatpush1.msra.mxu0 %v1111
    %1226 = vmatprep.subr.mxu0 %v1114
    %1227 = vmatpush1.msra.mxu0 %v1113
    %1228 = vmatprep.subr.mxu0 %v1116
    %1229 = vmatpush1.msra.mxu0 %v1115
    %1230 = vmatprep.subr.mxu0 %v1118
    %1231 = vmatpush1.msra.mxu0 %v1117
    %1232 = vmatprep.subr.mxu0 %v1120
    %1233 = vmatpush1.msra.mxu0 %v1119
    %1234 = vmatprep.subr.mxu0 %v1122
    %1235 = vmatpush1.msra.mxu0 %v1121
    %1236 = vmatprep.subr.mxu0 %v1124
    %1237 = vmatpush1.msra.mxu0 %v1123
    %1238 = vmatprep.subr.mxu0 %v1126
    %1239 = vmatpush1.msra.mxu0 %v1125
    %1240 = vmatprep.subr.mxu0 0.0
    %1241 = vmatpush1.msra.mxu0 0.0
    %1242 = vmatprep.subr.mxu0 0.0
    %1243 = vmatpush1.msra.mxu0 0.0
    %1244 = vmatprep.subr.mxu0 0.0
    %1245 = vmatpush1.msra.mxu0 0.0
    %1246 = vmatprep.subr.mxu0 0.0
    %1247 = vmatpush1.msra.mxu0 0.0
    %1248 = vmatprep.subr.mxu0 0.0
    %1249 = vmatpush1.msra.mxu0 0.0
    %1250 = vmatprep.subr.mxu0 0.0
    %1251 = vmatpush1.msra.mxu0 0.0
    %1252 = vmatprep.subr.mxu0 0.0
    %1253 = vmatpush1.msra.mxu0 0.0
    %1254 = vmatprep.subr.mxu0 0.0
    %1255 = vmatpush1.msra.mxu0 0.0
    %1256 = vmatprep.subr.mxu0 0.0
    %1257 = vmatpush1.msra.mxu0 0.0
    %1258 = vmatprep.subr.mxu0 0.0
    %1259 = vmatpush1.msra.mxu0 0.0
    %1260 = vmatprep.subr.mxu0 0.0
    %1261 = vmatpush1.msra.mxu0 0.0
    %1262 = vmatprep.subr.mxu0 0.0
    %1263 = vmatpush1.msra.mxu0 0.0
    %1264 = vmatprep.subr.mxu0 0.0
    %1265 = vmatpush1.msra.mxu0 0.0
    %1266 = vmatprep.subr.mxu0 0.0
    %1267 = vmatpush1.msra.mxu0 0.0
    %1268 = vmatprep.subr.mxu0 0.0
    %1269 = vmatpush1.msra.mxu0 0.0
    %1270 = vmatprep.subr.mxu0 0.0
    %1271 = vmatpush1.msra.mxu0 0.0
    %1272 = vmatprep.subr.mxu0 0.0
    %1273 = vmatpush1.msra.mxu0 0.0
    %1274 = vmatprep.subr.mxu0 0.0
    %1275 = vmatpush1.msra.mxu0 0.0
    %1276 = vmatprep.subr.mxu0 0.0
    %1277 = vmatpush1.msra.mxu0 0.0
    %1278 = vmatprep.subr.mxu0 0.0
    %1279 = vmatpush1.msra.mxu0 0.0
    %1280 = vmatprep.subr.mxu0 0.0
    %1281 = vmatpush1.msra.mxu0 0.0
    %1282 = vmatprep.subr.mxu0 0.0
    %1283 = vmatpush1.msra.mxu0 0.0
    %1284 = vmatprep.subr.mxu0 0.0
    %1285 = vmatpush1.msra.mxu0 0.0
    %1286 = vmatprep.subr.mxu0 0.0
    %1287 = vmatpush1.msra.mxu0 0.0
    %1288 = vmatprep.mubr.f32.mxu0 0.0
    %1289 = vmatmul.mubr.f32.gmra.mrb[0].mxu0 %v1222
    %v1290 = vpop.f32.mrb[0].mxu0
    %v1291 = vadd.f32 0.0, %v1290
    %v1292 = vpop.f32.mrb[0].mxu0
    %v1293 = vadd.f32 0.0, %v1292
    %1294 = vdwg.mxu0
    %v1295 = vadd.f32 %v1219, %v1291
    %v1296 = vxor.u32 %v1295, 2147483648
    %v1297 = vmul.f32 %v1296, 1.442695
    %v1298 = vpow.pop %v1297
    %v1299 = vadd.f32 %v1298, 1.0
    %v1300 = vrcp.pop %v1299
    %v1301 = vmul.f32 1.0, %v1300
    %1302 = vrot.lane.b32.xlu0 %v1301, 64
    %v1303 = vpop.permute.xlu0 %1302
    %v1304 = vadd.f32 %v1293, %v1127
    %v1305 = vmul.f32 %v1301, %v1304
    %v1306 = vadd.f32 %v1220, %v1305
    %v1307 = vtanh.pop %v1306
    %v1308 = vsub.f32 1.0, %v1303
    %v1309 = vmul.f32 %v1308, %v1307
    %v1310 = vmul.f32 %v1303, %v1217
    %v1311 = vadd.f32 %v1309, %v1310
    %1312 = vst [vmem:[#allocation3 + $0x8] sm:$0xff] %v1311
    %v1313 = vld [vmem:[#allocation2 + $0x20] sm:$0xff]
    %v1314 = vld [vmem:[#allocation2 + $0x28] sm:$0xff]
    %v1316 = vsel %vm168, %v1311, 0
    %1318 = vmatprep.subr.mxu0 %v1112
    %1319 = vmatpush1.msra.mxu0 %v1111
    %1320 = vmatprep.subr.mxu0 %v1114
    %1321 = vmatpush1.msra.mxu0 %v1113
    %1322 = vmatprep.subr.mxu0 %v1116
    %1323 = vmatpush1.msra.mxu0 %v1115
    %1324 = vmatprep.subr.mxu0 %v1118
    %1325 = vmatpush1.msra.mxu0 %v1117
    %1326 = vmatprep.subr.mxu0 %v1120
    %1327 = vmatpush1.msra.mxu0 %v1119
    %1328 = vmatprep.subr.mxu0 %v1122
    %1329 = vmatpush1.msra.mxu0 %v1121
    %1330 = vmatprep.subr.mxu0 %v1124
    %1331 = vmatpush1.msra.mxu0 %v1123
    %1332 = vmatprep.subr.mxu0 %v1126
    %1333 = vmatpush1.msra.mxu0 %v1125
    %1334 = vmatprep.subr.mxu0 0.0
    %1335 = vmatpush1.msra.mxu0 0.0
    %1336 = vmatprep.subr.mxu0 0.0
    %1337 = vmatpush1.msra.mxu0 0.0
    %1338 = vmatprep.subr.mxu0 0.0
    %1339 = vmatpush1.msra.mxu0 0.0
    %1340 = vmatprep.subr.mxu0 0.0
    %1341 = vmatpush1.msra.mxu0 0.0
    %1342 = vmatprep.subr.mxu0 0.0
    %1343 = vmatpush1.msra.mxu0 0.0
    %1344 = vmatprep.subr.mxu0 0.0
    %1345 = vmatpush1.msra.mxu0 0.0
    %1346 = vmatprep.subr.mxu0 0.0
    %1347 = vmatpush1.msra.mxu0 0.0
    %1348 = vmatprep.subr.mxu0 0.0
    %1349 = vmatpush1.msra.mxu0 0.0
    %1350 = vmatprep.subr.mxu0 0.0
    %1351 = vmatpush1.msra.mxu0 0.0
    %1352 = vmatprep.subr.mxu0 0.0
    %1353 = vmatpush1.msra.mxu0 0.0
    %1354 = vmatprep.subr.mxu0 0.0
    %1355 = vmatpush1.msra.mxu0 0.0
    %1356 = vmatprep.subr.mxu0 0.0
    %1357 = vmatpush1.msra.mxu0 0.0
    %1358 = vmatprep.subr.mxu0 0.0
    %1359 = vmatpush1.msra.mxu0 0.0
    %1360 = vmatprep.subr.mxu0 0.0
    %1361 = vmatpush1.msra.mxu0 0.0
    %1362 = vmatprep.subr.mxu0 0.0
    %1363 = vmatpush1.msra.mxu0 0.0
    %1364 = vmatprep.subr.mxu0 0.0
    %1365 = vmatpush1.msra.mxu0 0.0
    %1366 = vmatprep.subr.mxu0 0.0
    %1367 = vmatpush1.msra.mxu0 0.0
    %1368 = vmatprep.subr.mxu0 0.0
    %1369 = vmatpush1.msra.mxu0 0.0
    %1370 = vmatprep.subr.mxu0 0.0
    %1371 = vmatpush1.msra.mxu0 0.0
    %1372 = vmatprep.subr.mxu0 0.0
    %1373 = vmatpush1.msra.mxu0 0.0
    %1374 = vmatprep.subr.mxu0 0.0
    %1375 = vmatpush1.msra.mxu0 0.0
    %1376 = vmatprep.subr.mxu0 0.0
    %1377 = vmatpush1.msra.mxu0 0.0
    %1378 = vmatprep.subr.mxu0 0.0
    %1379 = vmatpush1.msra.mxu0 0.0
    %1380 = vmatprep.subr.mxu0 0.0
    %1381 = vmatpush1.msra.mxu0 0.0
    %1382 = vmatprep.mubr.f32.mxu0 0.0
    %1383 = vmatmul.mubr.f32.gmra.mrb[0].mxu0 %v1316
    %v1384 = vpop.f32.mrb[0].mxu0
    %v1385 = vadd.f32 0.0, %v1384
    %v1386 = vpop.f32.mrb[0].mxu0
    %v1387 = vadd.f32 0.0, %v1386
    %1388 = vdwg.mxu0
    %v1389 = vadd.f32 %v1313, %v1385
    %v1390 = vxor.u32 %v1389, 2147483648
    %v1391 = vmul.f32 %v1390, 1.442695
    %v1392 = vpow.pop %v1391
    %v1393 = vadd.f32 %v1392, 1.0
    %v1394 = vrcp.pop %v1393
    %v1395 = vmul.f32 1.0, %v1394
    %1396 = vrot.lane.b32.xlu0 %v1395, 64
    %v1397 = vpop.permute.xlu0 %1396
    %v1398 = vadd.f32 %v1387, %v1127
    %v1399 = vmul.f32 %v1395, %v1398
    %v1400 = vadd.f32 %v1314, %v1399
    %v1401 = vtanh.pop %v1400
    %v1402 = vsub.f32 1.0, %v1397
    %v1403 = vmul.f32 %v1402, %v1401
    %v1404 = vmul.f32 %v1397, %v1311
    %v1405 = vadd.f32 %v1403, %v1404
    %1406 = vst [vmem:[#allocation3 + $0x10] sm:$0xff] %v1405
    %v1407 = vld [vmem:[#allocation2 + $0x30] sm:$0xff]
    %v1408 = vld [vmem:[#allocation2 + $0x38] sm:$0xff]
    %v1410 = vsel %vm168, %v1405, 0
    %1412 = vmatprep.subr.mxu0 %v1112
    %1413 = vmatpush1.msra.mxu0 %v1111
    %1414 = vmatprep.subr.mxu0 %v1114
    %1415 = vmatpush1.msra.mxu0 %v1113
    %1416 = vmatprep.subr.mxu0 %v1116
    %1417 = vmatpush1.msra.mxu0 %v1115
    %1418 = vmatprep.subr.mxu0 %v1118
    %1419 = vmatpush1.msra.mxu0 %v1117
    %1420 = vmatprep.subr.mxu0 %v1120
    %1421 = vmatpush1.msra.mxu0 %v1119
    %1422 = vmatprep.subr.mxu0 %v1122
    %1423 = vmatpush1.msra.mxu0 %v1121
    %1424 = vmatprep.subr.mxu0 %v1124
    %1425 = vmatpush1.msra.mxu0 %v1123
    %1426 = vmatprep.subr.mxu0 %v1126
    %1427 = vmatpush1.msra.mxu0 %v1125
    %1428 = vmatprep.subr.mxu0 0.0
    %1429 = vmatpush1.msra.mxu0 0.0
    %1430 = vmatprep.subr.mxu0 0.0
    %1431 = vmatpush1.msra.mxu0 0.0
    %1432 = vmatprep.subr.mxu0 0.0
    %1433 = vmatpush1.msra.mxu0 0.0
    %1434 = vmatprep.subr.mxu0 0.0
    %1435 = vmatpush1.msra.mxu0 0.0
    %1436 = vmatprep.subr.mxu0 0.0
    %1437 = vmatpush1.msra.mxu0 0.0
    %1438 = vmatprep.subr.mxu0 0.0
    %1439 = vmatpush1.msra.mxu0 0.0
    %1440 = vmatprep.subr.mxu0 0.0
    %1441 = vmatpush1.msra.mxu0 0.0
    %1442 = vmatprep.subr.mxu0 0.0
    %1443 = vmatpush1.msra.mxu0 0.0
    %1444 = vmatprep.subr.mxu0 0.0
    %1445 = vmatpush1.msra.mxu0 0.0
    %1446 = vmatprep.subr.mxu0 0.0
    %1447 = vmatpush1.msra.mxu0 0.0
    %1448 = vmatprep.subr.mxu0 0.0
    %1449 = vmatpush1.msra.mxu0 0.0
    %1450 = vmatprep.subr.mxu0 0.0
    %1451 = vmatpush1.msra.mxu0 0.0
    %1452 = vmatprep.subr.mxu0 0.0
    %1453 = vmatpush1.msra.mxu0 0.0
    %1454 = vmatprep.subr.mxu0 0.0
    %1455 = vmatpush1.msra.mxu0 0.0
    %1456 = vmatprep.subr.mxu0 0.0
    %1457 = vmatpush1.msra.mxu0 0.0
    %1458 = vmatprep.subr.mxu0 0.0
    %1459 = vmatpush1.msra.mxu0 0.0
    %1460 = vmatprep.subr.mxu0 0.0
    %1461 = vmatpush1.msra.mxu0 0.0
    %1462 = vmatprep.subr.mxu0 0.0
    %1463 = vmatpush1.msra.mxu0 0.0
    %1464 = vmatprep.subr.mxu0 0.0
    %1465 = vmatpush1.msra.mxu0 0.0
    %1466 = vmatprep.subr.mxu0 0.0
    %1467 = vmatpush1.msra.mxu0 0.0
    %1468 = vmatprep.subr.mxu0 0.0
    %1469 = vmatpush1.msra.mxu0 0.0
    %1470 = vmatprep.subr.mxu0 0.0
    %1471 = vmatpush1.msra.mxu0 0.0
    %1472 = vmatprep.subr.mxu0 0.0
    %1473 = vmatpush1.msra.mxu0 0.0
    %1474 = vmatprep.subr.mxu0 0.0
    %1475 = vmatpush1.msra.mxu0 0.0
    %1476 = vmatprep.mubr.f32.mxu0 0.0
    %1477 = vmatmul.mubr.f32.gmra.mrb[0].mxu0 %v1410
    %v1478 = vpop.f32.mrb[0].mxu0
    %v1479 = vadd.f32 0.0, %v1478
    %v1480 = vpop.f32.mrb[0].mxu0
    %v1481 = vadd.f32 0.0, %v1480
    %1482 = vdwg.mxu0
    %v1483 = vadd.f32 %v1407, %v1479
    %v1484 = vxor.u32 %v1483, 2147483648
    %v1485 = vmul.f32 %v1484, 1.442695
    %v1486 = vpow.pop %v1485
    %v1487 = vadd.f32 %v1486, 1.0
    %v1488 = vrcp.pop %v1487
    %v1489 = vmul.f32 1.0, %v1488
    %1490 = vrot.lane.b32.xlu0 %v1489, 64
    %v1491 = vpop.permute.xlu0 %1490
    %v1492 = vadd.f32 %v1481, %v1127
    %v1493 = vmul.f32 %v1489, %v1492
    %v1494 = vadd.f32 %v1408, %v1493
    %v1495 = vtanh.pop %v1494
    %v1496 = vsub.f32 1.0, %v1491
    %v1497 = vmul.f32 %v1496, %v1495
    %v1498 = vmul.f32 %v1491, %v1405
    %v1499 = vadd.f32 %v1497, %v1498
    %1500 = vst [vmem:[#allocation3 + $0x18] sm:$0xff] %v1499
    %v1501 = vld [vmem:[#allocation2 + $0x40] sm:$0xff]
    %v1502 = vld [vmem:[#allocation2 + $0x48] sm:$0xff]
    %v1504 = vsel %vm168, %v1499, 0
    %1506 = vmatprep.subr.mxu0 %v1112
    %1507 = vmatpush1.msra.mxu0 %v1111
    %1508 = vmatprep.subr.mxu0 %v1114
    %1509 = vmatpush1.msra.mxu0 %v1113
    %1510 = vmatprep.subr.mxu0 %v1116
    %1511 = vmatpush1.msra.mxu0 %v1115
    %1512 = vmatprep.subr.mxu0 %v1118
    %1513 = vmatpush1.msra.mxu0 %v1117
    %1514 = vmatprep.subr.mxu0 %v1120
    %1515 = vmatpush1.msra.mxu0 %v1119
    %1516 = vmatprep.subr.mxu0 %v1122
    %1517 = vmatpush1.msra.mxu0 %v1121
    %1518 = vmatprep.subr.mxu0 %v1124
    %1519 = vmatpush1.msra.mxu0 %v1123
    %1520 = vmatprep.subr.mxu0 %v1126
    %1521 = vmatpush1.msra.mxu0 %v1125
    %1522 = vmatprep.subr.mxu0 0.0
    %1523 = vmatpush1.msra.mxu0 0.0
    %1524 = vmatprep.subr.mxu0 0.0
    %1525 = vmatpush1.msra.mxu0 0.0
    %1526 = vmatprep.subr.mxu0 0.0
    %1527 = vmatpush1.msra.mxu0 0.0
    %1528 = vmatprep.subr.mxu0 0.0
    %1529 = vmatpush1.msra.mxu0 0.0
    %1530 = vmatprep.subr.mxu0 0.0
    %1531 = vmatpush1.msra.mxu0 0.0
    %1532 = vmatprep.subr.mxu0 0.0
    %1533 = vmatpush1.msra.mxu0 0.0
    %1534 = vmatprep.subr.mxu0 0.0
    %1535 = vmatpush1.msra.mxu0 0.0
    %1536 = vmatprep.subr.mxu0 0.0
    %1537 = vmatpush1.msra.mxu0 0.0
    %1538 = vmatprep.subr.mxu0 0.0
    %1539 = vmatpush1.msra.mxu0 0.0
    %1540 = vmatprep.subr.mxu0 0.0
    %1541 = vmatpush1.msra.mxu0 0.0
    %1542 = vmatprep.subr.mxu0 0.0
    %1543 = vmatpush1.msra.mxu0 0.0
    %1544 = vmatprep.subr.mxu0 0.0
    %1545 = vmatpush1.msra.mxu0 0.0
    %1546 = vmatprep.subr.mxu0 0.0
    %1547 = vmatpush1.msra.mxu0 0.0
    %1548 = vmatprep.subr.mxu0 0.0
    %1549 = vmatpush1.msra.mxu0 0.0
    %1550 = vmatprep.subr.mxu0 0.0
    %1551 = vmatpush1.msra.mxu0 0.0
    %1552 = vmatprep.subr.mxu0 0.0
    %1553 = vmatpush1.msra.mxu0 0.0
    %1554 = vmatprep.subr.mxu0 0.0
    %1555 = vmatpush1.msra.mxu0 0.0
    %1556 = vmatprep.subr.mxu0 0.0
    %1557 = vmatpush1.msra.mxu0 0.0
    %1558 = vmatprep.subr.mxu0 0.0
    %1559 = vmatpush1.msra.mxu0 0.0
    %1560 = vmatprep.subr.mxu0 0.0
    %1561 = vmatpush1.msra.mxu0 0.0
    %1562 = vmatprep.subr.mxu0 0.0
    %1563 = vmatpush1.msra.mxu0 0.0
    %1564 = vmatprep.subr.mxu0 0.0
    %1565 = vmatpush1.msra.mxu0 0.0
    %1566 = vmatprep.subr.mxu0 0.0
    %1567 = vmatpush1.msra.mxu0 0.0
    %1568 = vmatprep.subr.mxu0 0.0
    %1569 = vmatpush1.msra.mxu0 0.0
    %1570 = vmatprep.mubr.f32.mxu0 0.0
    %1571 = vmatmul.mubr.f32.gmra.mrb[0].mxu0 %v1504
    %v1572 = vpop.f32.mrb[0].mxu0
    %v1573 = vadd.f32 0.0, %v1572
    %v1574 = vpop.f32.mrb[0].mxu0
    %v1575 = vadd.f32 0.0, %v1574
    %1576 = vdwg.mxu0
    %v1577 = vadd.f32 %v1501, %v1573
    %v1578 = vxor.u32 %v1577, 2147483648
    %v1579 = vmul.f32 %v1578, 1.442695
    %v1580 = vpow.pop %v1579
    %v1581 = vadd.f32 %v1580, 1.0
    %v1582 = vrcp.pop %v1581
    %v1583 = vmul.f32 1.0, %v1582
    %1584 = vrot.lane.b32.xlu0 %v1583, 64
    %v1585 = vpop.permute.xlu0 %1584
    %v1586 = vadd.f32 %v1575, %v1127
    %v1587 = vmul.f32 %v1583, %v1586
    %v1588 = vadd.f32 %v1502, %v1587
    %v1589 = vtanh.pop %v1588
    %v1590 = vsub.f32 1.0, %v1585
    %v1591 = vmul.f32 %v1590, %v1589
    %v1592 = vmul.f32 %v1585, %v1499
    %v1593 = vadd.f32 %v1591, %v1592
    %1594 = vst [vmem:[#allocation3 + $0x20] sm:$0xff] %v1593
    %v1595 = vld [vmem:[#allocation2 + $0x50] sm:$0xff]
    %v1596 = vld [vmem:[#allocation2 + $0x58] sm:$0xff]
    %v1598 = vsel %vm168, %v1593, 0
    %1600 = vmatprep.subr.mxu0 %v1112
    %1601 = vmatpush1.msra.mxu0 %v1111
    %1602 = vmatprep.subr.mxu0 %v1114
    %1603 = vmatpush1.msra.mxu0 %v1113
    %1604 = vmatprep.subr.mxu0 %v1116
    %1605 = vmatpush1.msra.mxu0 %v1115
    %1606 = vmatprep.subr.mxu0 %v1118
    %1607 = vmatpush1.msra.mxu0 %v1117
    %1608 = vmatprep.subr.mxu0 %v1120
    %1609 = vmatpush1.msra.mxu0 %v1119
    %1610 = vmatprep.subr.mxu0 %v1122
    %1611 = vmatpush1.msra.mxu0 %v1121
    %1612 = vmatprep.subr.mxu0 %v1124
    %1613 = vmatpush1.msra.mxu0 %v1123
    %1614 = vmatprep.subr.mxu0 %v1126
    %1615 = vmatpush1.msra.mxu0 %v1125
    %1616 = vmatprep.subr.mxu0 0.0
    %1617 = vmatpush1.msra.mxu0 0.0
    %1618 = vmatprep.subr.mxu0 0.0
    %1619 = vmatpush1.msra.mxu0 0.0
    %1620 = vmatprep.subr.mxu0 0.0
    %1621 = vmatpush1.msra.mxu0 0.0
    %1622 = vmatprep.subr.mxu0 0.0
    %1623 = vmatpush1.msra.mxu0 0.0
    %1624 = vmatprep.subr.mxu0 0.0
    %1625 = vmatpush1.msra.mxu0 0.0
    %1626 = vmatprep.subr.mxu0 0.0
    %1627 = vmatpush1.msra.mxu0 0.0
    %1628 = vmatprep.subr.mxu0 0.0
    %1629 = vmatpush1.msra.mxu0 0.0
    %1630 = vmatprep.subr.mxu0 0.0
    %1631 = vmatpush1.msra.mxu0 0.0
    %1632 = vmatprep.subr.mxu0 0.0
    %1633 = vmatpush1.msra.mxu0 0.0
    %1634 = vmatprep.subr.mxu0 0.0
    %1635 = vmatpush1.msra.mxu0 0.0
    %1636 = vmatprep.subr.mxu0 0.0
    %1637 = vmatpush1.msra.mxu0 0.0
    %1638 = vmatprep.subr.mxu0 0.0
    %1639 = vmatpush1.msra.mxu0 0.0
    %1640 = vmatprep.subr.mxu0 0.0
    %1641 = vmatpush1.msra.mxu0 0.0
    %1642 = vmatprep.subr.mxu0 0.0
    %1643 = vmatpush1.msra.mxu0 0.0
    %1644 = vmatprep.subr.mxu0 0.0
    %1645 = vmatpush1.msra.mxu0 0.0
    %1646 = vmatprep.subr.mxu0 0.0
    %1647 = vmatpush1.msra.mxu0 0.0
    %1648 = vmatprep.subr.mxu0 0.0
    %1649 = vmatpush1.msra.mxu0 0.0
    %1650 = vmatprep.subr.mxu0 0.0
    %1651 = vmatpush1.msra.mxu0 0.0
    %1652 = vmatprep.subr.mxu0 0.0
    %1653 = vmatpush1.msra.mxu0 0.0
    %1654 = vmatprep.subr.mxu0 0.0
    %1655 = vmatpush1.msra.mxu0 0.0
    %1656 = vmatprep.subr.mxu0 0.0
    %1657 = vmatpush1.msra.mxu0 0.0
    %1658 = vmatprep.subr.mxu0 0.0
    %1659 = vmatpush1.msra.mxu0 0.0
    %1660 = vmatprep.subr.mxu0 0.0
    %1661 = vmatpush1.msra.mxu0 0.0
    %1662 = vmatprep.subr.mxu0 0.0
    %1663 = vmatpush1.msra.mxu0 0.0
    %1664 = vmatprep.mubr.f32.mxu0 0.0
    %1665 = vmatmul.mubr.f32.gmra.mrb[0].mxu0 %v1598
    %v1666 = vpop.f32.mrb[0].mxu0
    %v1667 = vadd.f32 0.0, %v1666
    %v1668 = vpop.f32.mrb[0].mxu0
    %v1669 = vadd.f32 0.0, %v1668
    %1670 = vdwg.mxu0
    %v1671 = vadd.f32 %v1595, %v1667
    %v1672 = vxor.u32 %v1671, 2147483648
    %v1673 = vmul.f32 %v1672, 1.442695
    %v1674 = vpow.pop %v1673
    %v1675 = vadd.f32 %v1674, 1.0
    %v1676 = vrcp.pop %v1675
    %v1677 = vmul.f32 1.0, %v1676
    %1678 = vrot.lane.b32.xlu0 %v1677, 64
    %v1679 = vpop.permute.xlu0 %1678
    %v1680 = vadd.f32 %v1669, %v1127
    %v1681 = vmul.f32 %v1677, %v1680
    %v1682 = vadd.f32 %v1596, %v1681
    %v1683 = vtanh.pop %v1682
    %v1684 = vsub.f32 1.0, %v1679
    %v1685 = vmul.f32 %v1684, %v1683
    %v1686 = vmul.f32 %v1679, %v1593
    %v1687 = vadd.f32 %v1685, %v1686
    %1688 = vst [vmem:[#allocation3 + $0x28] sm:$0xff] %v1687
    %v1689 = vld [vmem:[#allocation2 + $0x60] sm:$0xff]
    %v1690 = vld [vmem:[#allocation2 + $0x68] sm:$0xff]
    %v1692 = vsel %vm168, %v1687, 0
    %1694 = vmatprep.subr.mxu0 %v1112
    %1695 = vmatpush1.msra.mxu0 %v1111
    %1696 = vmatprep.subr.mxu0 %v1114
    %1697 = vmatpush1.msra.mxu0 %v1113
    %1698 = vmatprep.subr.mxu0 %v1116
    %1699 = vmatpush1.msra.mxu0 %v1115
    %1700 = vmatprep.subr.mxu0 %v1118
    %1701 = vmatpush1.msra.mxu0 %v1117
    %1702 = vmatprep.subr.mxu0 %v1120
    %1703 = vmatpush1.msra.mxu0 %v1119
    %1704 = vmatprep.subr.mxu0 %v1122
    %1705 = vmatpush1.msra.mxu0 %v1121
    %1706 = vmatprep.subr.mxu0 %v1124
    %1707 = vmatpush1.msra.mxu0 %v1123
    %1708 = vmatprep.subr.mxu0 %v1126
    %1709 = vmatpush1.msra.mxu0 %v1125
    %1710 = vmatprep.subr.mxu0 0.0
    %1711 = vmatpush1.msra.mxu0 0.0
    %1712 = vmatprep.subr.mxu0 0.0
    %1713 = vmatpush1.msra.mxu0 0.0
    %1714 = vmatprep.subr.mxu0 0.0
    %1715 = vmatpush1.msra.mxu0 0.0
    %1716 = vmatprep.subr.mxu0 0.0
    %1717 = vmatpush1.msra.mxu0 0.0
    %1718 = vmatprep.subr.mxu0 0.0
    %1719 = vmatpush1.msra.mxu0 0.0
    %1720 = vmatprep.subr.mxu0 0.0
    %1721 = vmatpush1.msra.mxu0 0.0
    %1722 = vmatprep.subr.mxu0 0.0
    %1723 = vmatpush1.msra.mxu0 0.0
    %1724 = vmatprep.subr.mxu0 0.0
    %1725 = vmatpush1.msra.mxu0 0.0
    %1726 = vmatprep.subr.mxu0 0.0
    %1727 = vmatpush1.msra.mxu0 0.0
    %1728 = vmatprep.subr.mxu0 0.0
    %1729 = vmatpush1.msra.mxu0 0.0
    %1730 = vmatprep.subr.mxu0 0.0
    %1731 = vmatpush1.msra.mxu0 0.0
    %1732 = vmatprep.subr.mxu0 0.0
    %1733 = vmatpush1.msra.mxu0 0.0
    %1734 = vmatprep.subr.mxu0 0.0
    %1735 = vmatpush1.msra.mxu0 0.0
    %1736 = vmatprep.subr.mxu0 0.0
    %1737 = vmatpush1.msra.mxu0 0.0
    %1738 = vmatprep.subr.mxu0 0.0
    %1739 = vmatpush1.msra.mxu0 0.0
    %1740 = vmatprep.subr.mxu0 0.0
    %1741 = vmatpush1.msra.mxu0 0.0
    %1742 = vmatprep.subr.mxu0 0.0
    %1743 = vmatpush1.msra.mxu0 0.0
    %1744 = vmatprep.subr.mxu0 0.0
    %1745 = vmatpush1.msra.mxu0 0.0
    %1746 = vmatprep.subr.mxu0 0.0
    %1747 = vmatpush1.msra.mxu0 0.0
    %1748 = vmatprep.subr.mxu0 0.0
    %1749 = vmatpush1.msra.mxu0 0.0
    %1750 = vmatprep.subr.mxu0 0.0
    %1751 = vmatpush1.msra.mxu0 0.0
    %1752 = vmatprep.subr.mxu0 0.0
    %1753 = vmatpush1.msra.mxu0 0.0
    %1754 = vmatprep.subr.mxu0 0.0
    %1755 = vmatpush1.msra.mxu0 0.0
    %1756 = vmatprep.subr.mxu0 0.0
    %1757 = vmatpush1.msra.mxu0 0.0
    %1758 = vmatprep.mubr.f32.mxu0 0.0
    %1759 = vmatmul.mubr.f32.gmra.mrb[0].mxu0 %v1692
    %v1760 = vpop.f32.mrb[0].mxu0
    %v1761 = vadd.f32 0.0, %v1760
    %v1762 = vpop.f32.mrb[0].mxu0
    %v1763 = vadd.f32 0.0, %v1762
    %1764 = vdwg.mxu0
    %v1765 = vadd.f32 %v1689, %v1761
    %v1766 = vxor.u32 %v1765, 2147483648
    %v1767 = vmul.f32 %v1766, 1.442695
    %v1768 = vpow.pop %v1767
    %v1769 = vadd.f32 %v1768, 1.0
    %v1770 = vrcp.pop %v1769
    %v1771 = vmul.f32 1.0, %v1770
    %1772 = vrot.lane.b32.xlu0 %v1771, 64
    %v1773 = vpop.permute.xlu0 %1772
    %v1774 = vadd.f32 %v1763, %v1127
    %v1775 = vmul.f32 %v1771, %v1774
    %v1776 = vadd.f32 %v1690, %v1775
    %v1777 = vtanh.pop %v1776
    %v1778 = vsub.f32 1.0, %v1773
    %v1779 = vmul.f32 %v1778, %v1777
    %v1780 = vmul.f32 %v1773, %v1687
    %v1781 = vadd.f32 %v1779, %v1780
    %1782 = vst [vmem:[#allocation3 + $0x30] sm:$0xff] %v1781
    %v1783 = vld [vmem:[#allocation2 + $0x70] sm:$0xff]
    %v1784 = vld [vmem:[#allocation2 + $0x78] sm:$0xff]
    %v1786 = vsel %vm168, %v1781, 0
    %1788 = vmatprep.subr.mxu0 %v1112
    %1789 = vmatpush1.msra.mxu0 %v1111
    %1790 = vmatprep.subr.mxu0 %v1114
    %1791 = vmatpush1.msra.mxu0 %v1113
    %1792 = vmatprep.subr.mxu0 %v1116
    %1793 = vmatpush1.msra.mxu0 %v1115
    %1794 = vmatprep.subr.mxu0 %v1118
    %1795 = vmatpush1.msra.mxu0 %v1117
    %1796 = vmatprep.subr.mxu0 %v1120
    %1797 = vmatpush1.msra.mxu0 %v1119
    %1798 = vmatprep.subr.mxu0 %v1122
    %1799 = vmatpush1.msra.mxu0 %v1121
    %1800 = vmatprep.subr.mxu0 %v1124
    %1801 = vmatpush1.msra.mxu0 %v1123
    %1802 = vmatprep.subr.mxu0 %v1126
    %1803 = vmatpush1.msra.mxu0 %v1125
    %1804 = vmatprep.subr.mxu0 0.0
    %1805 = vmatpush1.msra.mxu0 0.0
    %1806 = vmatprep.subr.mxu0 0.0
    %1807 = vmatpush1.msra.mxu0 0.0
    %1808 = vmatprep.subr.mxu0 0.0
    %1809 = vmatpush1.msra.mxu0 0.0
    %1810 = vmatprep.subr.mxu0 0.0
    %1811 = vmatpush1.msra.mxu0 0.0
    %1812 = vmatprep.subr.mxu0 0.0
    %1813 = vmatpush1.msra.mxu0 0.0
    %1814 = vmatprep.subr.mxu0 0.0
    %1815 = vmatpush1.msra.mxu0 0.0
    %1816 = vmatprep.subr.mxu0 0.0
    %1817 = vmatpush1.msra.mxu0 0.0
    %1818 = vmatprep.subr.mxu0 0.0
    %1819 = vmatpush1.msra.mxu0 0.0
    %1820 = vmatprep.subr.mxu0 0.0
    %1821 = vmatpush1.msra.mxu0 0.0
    %1822 = vmatprep.subr.mxu0 0.0
    %1823 = vmatpush1.msra.mxu0 0.0
    %1824 = vmatprep.subr.mxu0 0.0
    %1825 = vmatpush1.msra.mxu0 0.0
    %1826 = vmatprep.subr.mxu0 0.0
    %1827 = vmatpush1.msra.mxu0 0.0
    %1828 = vmatprep.subr.mxu0 0.0
    %1829 = vmatpush1.msra.mxu0 0.0
    %1830 = vmatprep.subr.mxu0 0.0
    %1831 = vmatpush1.msra.mxu0 0.0
    %1832 = vmatprep.subr.mxu0 0.0
    %1833 = vmatpush1.msra.mxu0 0.0
    %1834 = vmatprep.subr.mxu0 0.0
    %1835 = vmatpush1.msra.mxu0 0.0
    %1836 = vmatprep.subr.mxu0 0.0
    %1837 = vmatpush1.msra.mxu0 0.0
    %1838 = vmatprep.subr.mxu0 0.0
    %1839 = vmatpush1.msra.mxu0 0.0
    %1840 = vmatprep.subr.mxu0 0.0
    %1841 = vmatpush1.msra.mxu0 0.0
    %1842 = vmatprep.subr.mxu0 0.0
    %1843 = vmatpush1.msra.mxu0 0.0
    %1844 = vmatprep.subr.mxu0 0.0
    %1845 = vmatpush1.msra.mxu0 0.0
    %1846 = vmatprep.subr.mxu0 0.0
    %1847 = vmatpush1.msra.mxu0 0.0
    %1848 = vmatprep.subr.mxu0 0.0
    %1849 = vmatpush1.msra.mxu0 0.0
    %1850 = vmatprep.subr.mxu0 0.0
    %1851 = vmatpush1.msra.mxu0 0.0
    %1852 = vmatprep.mubr.f32.mxu0 0.0
    %1853 = vmatmul.mubr.f32.gmra.mrb[0].mxu0 %v1786
    %v1854 = vpop.f32.mrb[0].mxu0
    %v1855 = vadd.f32 0.0, %v1854
    %v1856 = vpop.f32.mrb[0].mxu0
    %v1857 = vadd.f32 0.0, %v1856
    %1858 = vdwg.mxu0
    %v1859 = vadd.f32 %v1783, %v1855
    %v1860 = vxor.u32 %v1859, 2147483648
    %v1861 = vmul.f32 %v1860, 1.442695
    %v1862 = vpow.pop %v1861
    %v1863 = vadd.f32 %v1862, 1.0
    %v1864 = vrcp.pop %v1863
    %v1865 = vmul.f32 1.0, %v1864
    %1866 = vrot.lane.b32.xlu0 %v1865, 64
    %v1867 = vpop.permute.xlu0 %1866
    %v1868 = vadd.f32 %v1857, %v1127
    %v1869 = vmul.f32 %v1865, %v1868
    %v1870 = vadd.f32 %v1784, %v1869
    %v1871 = vtanh.pop %v1870
    %v1872 = vsub.f32 1.0, %v1867
    %v1873 = vmul.f32 %v1872, %v1871
    %v1874 = vmul.f32 %v1867, %v1781
    %v1875 = vadd.f32 %v1873, %v1874
    %1876 = vst [vmem:[#allocation3 + $0x38] sm:$0xff] %v1875
    %v1877 = vld [vmem:[#allocation3] sm:$0xff]
    %v1878 = vld [vmem:[#allocation3 + $0x8] sm:$0xff]
    %v1879 = vld [vmem:[#allocation3 + $0x10] sm:$0xff]
    %v1880 = vld [vmem:[#allocation3 + $0x18] sm:$0xff]
    %v1881 = vld [vmem:[#allocation3 + $0x20] sm:$0xff]
    %v1882 = vld [vmem:[#allocation3 + $0x28] sm:$0xff]
    %v1883 = vld [vmem:[#allocation3 + $0x30] sm:$0xff]
    %v1884 = vld [vmem:[#allocation3 + $0x38] sm:$0xff]
    %s1885 = scalar_lea.vmem [#allocation4], 512
    %v1886 = vld [vmem:[%s1885] sm:$0xff]
    %v1887 = vld [vmem:[%s1885 + $0x8] sm:$0xff]
    %v1888 = vld [vmem:[%s1885 + $0x10] sm:$0xff]
    %v1889 = vld [vmem:[%s1885 + $0x18] sm:$0xff]
    %v1890 = vld [vmem:[%s1885 + $0x20] sm:$0xff]
    %v1891 = vld [vmem:[%s1885 + $0x28] sm:$0xff]
    %v1892 = vld [vmem:[%s1885 + $0x30] sm:$0xff]
    %v1893 = vld [vmem:[%s1885 + $0x38] sm:$0xff]
    %v1894 = vld [vmem:[%s1885 + $0x40] sm:$0xff]
    %v1895 = vld [vmem:[%s1885 + $0x48] sm:$0xff]
    %v1896 = vld [vmem:[%s1885 + $0x50] sm:$0xff]
    %v1897 = vld [vmem:[%s1885 + $0x58] sm:$0xff]
    %v1898 = vld [vmem:[%s1885 + $0x60] sm:$0xff]
    %v1899 = vld [vmem:[%s1885 + $0x68] sm:$0xff]
    %v1900 = vld [vmem:[%s1885 + $0x70] sm:$0xff]
    %v1901 = vld [vmem:[%s1885 + $0x78] sm:$0xff]
    %s1902 = scalar_lea.vmem %s2, 3
    %v1903 = vld [vmem:[%s1902] ss:$8 sm:$0x3]
    %v1905 = vlaneseq
    %v1906 = vshrl.u32 %v1905, 7
    %v1907 = vsub.s32 0, %v1906
    %v1908 = vrot.slane %v1903, %v1907
    %v1909 = vlaneseq
    %v1910 = vshrl.u32 %v1909, 7
    %v1911 = vsub.s32 1, %v1910
    %v1912 = vrot.slane %v1903, %v1911
    %v1916 = vsel %vm168, %v1877, 0
    %v1919 = vsel %vm168, %v1878, 0
    %v1922 = vsel %vm168, %v1879, 0
    %v1925 = vsel %vm168, %v1880, 0
    %v1928 = vsel %vm168, %v1881, 0
    %v1931 = vsel %vm168, %v1882, 0
    %v1934 = vsel %vm168, %v1883, 0
    %v1937 = vsel %vm168, %v1884, 0
    %1939 = vmatprep.subr.mxu0 %v1887
    %1940 = vmatpush1.msra.mxu0 %v1886
    %1941 = vmatprep.subr.mxu0 %v1889
    %1942 = vmatpush1.msra.mxu0 %v1888
    %1943 = vmatprep.subr.mxu0 %v1891
    %1944 = vmatpush1.msra.mxu0 %v1890
    %1945 = vmatprep.subr.mxu0 %v1893
    %1946 = vmatpush1.msra.mxu0 %v1892
    %1947 = vmatprep.subr.mxu0 %v1895
    %1948 = vmatpush1.msra.mxu0 %v1894
    %1949 = vmatprep.subr.mxu0 %v1897
    %1950 = vmatpush1.msra.mxu0 %v1896
    %1951 = vmatprep.subr.mxu0 %v1899
    %1952 = vmatpush1.msra.mxu0 %v1898
    %1953 = vmatprep.subr.mxu0 %v1901
    %1954 = vmatpush1.msra.mxu0 %v1900
    %1955 = vmatprep.subr.mxu0 0.0
    %1956 = vmatpush1.msra.mxu0 0.0
    %1957 = vmatprep.subr.mxu0 0.0
    %1958 = vmatpush1.msra.mxu0 0.0
    %1959 = vmatprep.subr.mxu0 0.0
    %1960 = vmatpush1.msra.mxu0 0.0
    %1961 = vmatprep.subr.mxu0 0.0
    %1962 = vmatpush1.msra.mxu0 0.0
    %1963 = vmatprep.subr.mxu0 0.0
    %1964 = vmatpush1.msra.mxu0 0.0
    %1965 = vmatprep.subr.mxu0 0.0
    %1966 = vmatpush1.msra.mxu0 0.0
    %1967 = vmatprep.subr.mxu0 0.0
    %1968 = vmatpush1.msra.mxu0 0.0
    %1969 = vmatprep.subr.mxu0 0.0
    %1970 = vmatpush1.msra.mxu0 0.0
    %1971 = vmatprep.subr.mxu0 0.0
    %1972 = vmatpush1.msra.mxu0 0.0
    %1973 = vmatprep.subr.mxu0 0.0
    %1974 = vmatpush1.msra.mxu0 0.0
    %1975 = vmatprep.subr.mxu0 0.0
    %1976 = vmatpush1.msra.mxu0 0.0
    %1977 = vmatprep.subr.mxu0 0.0
    %1978 = vmatpush1.msra.mxu0 0.0
    %1979 = vmatprep.subr.mxu0 0.0
    %1980 = vmatpush1.msra.mxu0 0.0
    %1981 = vmatprep.subr.mxu0 0.0
    %1982 = vmatpush1.msra.mxu0 0.0
    %1983 = vmatprep.subr.mxu0 0.0
    %1984 = vmatpush1.msra.mxu0 0.0
    %1985 = vmatprep.subr.mxu0 0.0
    %1986 = vmatpush1.msra.mxu0 0.0
    %1987 = vmatprep.subr.mxu0 0.0
    %1988 = vmatpush1.msra.mxu0 0.0
    %1989 = vmatprep.subr.mxu0 0.0
    %1990 = vmatpush1.msra.mxu0 0.0
    %1991 = vmatprep.subr.mxu0 0.0
    %1992 = vmatpush1.msra.mxu0 0.0
    %1993 = vmatprep.subr.mxu0 0.0
    %1994 = vmatpush1.msra.mxu0 0.0
    %1995 = vmatprep.subr.mxu0 0.0
    %1996 = vmatpush1.msra.mxu0 0.0
    %1997 = vmatprep.subr.mxu0 0.0
    %1998 = vmatpush1.msra.mxu0 0.0
    %1999 = vmatprep.subr.mxu0 0.0
    %2000 = vmatpush1.msra.mxu0 0.0
    %2001 = vmatprep.subr.mxu0 0.0
    %2002 = vmatpush1.msra.mxu0 0.0
    %2003 = vmatprep.mubr.f32.mxu0 0.0
    %2004 = vmatmul.mubr.f32.gmra.mrb[0].mxu0 %v1916
    %v2005 = vpop.f32.mrb[0].mxu0
    %v2006 = vadd.f32 %v1908, %v2005
    %v2007 = vpop.f32.mrb[0].mxu0
    %v2008 = vadd.f32 %v1912, %v2007
    %2009 = vmatprep.mubr.f32.mxu0 0.0
    %2010 = vmatmul.mubr.f32.gmra.mrb[0].mxu0 %v1919
    %v2011 = vpop.f32.mrb[0].mxu0
    %v2012 = vadd.f32 %v1908, %v2011
    %v2013 = vpop.f32.mrb[0].mxu0
    %v2014 = vadd.f32 %v1912, %v2013
    %2015 = vmatprep.mubr.f32.mxu0 0.0
    %2016 = vmatmul.mubr.f32.gmra.mrb[0].mxu0 %v1922
    %v2017 = vpop.f32.mrb[0].mxu0
    %v2018 = vadd.f32 %v1908, %v2017
    %v2019 = vpop.f32.mrb[0].mxu0
    %v2020 = vadd.f32 %v1912, %v2019
    %2021 = vmatprep.mubr.f32.mxu0 0.0
    %2022 = vmatmul.mubr.f32.gmra.mrb[0].mxu0 %v1925
    %v2023 = vpop.f32.mrb[0].mxu0
    %v2024 = vadd.f32 %v1908, %v2023
    %v2025 = vpop.f32.mrb[0].mxu0
    %v2026 = vadd.f32 %v1912, %v2025
    %2027 = vmatprep.mubr.f32.mxu0 0.0
    %2028 = vmatmul.mubr.f32.gmra.mrb[0].mxu0 %v1928
    %v2029 = vpop.f32.mrb[0].mxu0
    %v2030 = vadd.f32 %v1908, %v2029
    %v2031 = vpop.f32.mrb[0].mxu0
    %v2032 = vadd.f32 %v1912, %v2031
    %2033 = vmatprep.mubr.f32.mxu0 0.0
    %2034 = vmatmul.mubr.f32.gmra.mrb[0].mxu0 %v1931
    %v2035 = vpop.f32.mrb[0].mxu0
    %v2036 = vadd.f32 %v1908, %v2035
    %v2037 = vpop.f32.mrb[0].mxu0
    %v2038 = vadd.f32 %v1912, %v2037
    %2039 = vmatprep.mubr.f32.mxu0 0.0
    %2040 = vmatmul.mubr.f32.gmra.mrb[0].mxu0 %v1934
    %v2041 = vpop.f32.mrb[0].mxu0
    %v2042 = vadd.f32 %v1908, %v2041
    %v2043 = vpop.f32.mrb[0].mxu0
    %v2044 = vadd.f32 %v1912, %v2043
    %2045 = vmatprep.mubr.f32.mxu0 0.0
    %2046 = vmatmul.mubr.f32.gmra.mrb[0].mxu0 %v1937
    %v2047 = vpop.f32.mrb[0].mxu0
    %v2048 = vadd.f32 %v1908, %v2047
    %v2049 = vpop.f32.mrb[0].mxu0
    %v2050 = vadd.f32 %v1912, %v2049
    %2051 = vdwg.mxu0
    %2052 = vst [vmem:[#allocation2] sm:$0xff] %v2006
    %2053 = vst [vmem:[#allocation2 + $0x8] sm:$0xff] %v2008
    %2054 = vst [vmem:[#allocation2 + $0x10] sm:$0xff] %v2012
    %2055 = vst [vmem:[#allocation2 + $0x18] sm:$0xff] %v2014
    %2056 = vst [vmem:[#allocation2 + $0x20] sm:$0xff] %v2018
    %2057 = vst [vmem:[#allocation2 + $0x28] sm:$0xff] %v2020
    %2058 = vst [vmem:[#allocation2 + $0x30] sm:$0xff] %v2024
    %2059 = vst [vmem:[#allocation2 + $0x38] sm:$0xff] %v2026
    %2060 = vst [vmem:[#allocation2 + $0x40] sm:$0xff] %v2030
    %2061 = vst [vmem:[#allocation2 + $0x48] sm:$0xff] %v2032
    %2062 = vst [vmem:[#allocation2 + $0x50] sm:$0xff] %v2036
    %2063 = vst [vmem:[#allocation2 + $0x58] sm:$0xff] %v2038
    %2064 = vst [vmem:[#allocation2 + $0x60] sm:$0xff] %v2042
    %2065 = vst [vmem:[#allocation2 + $0x68] sm:$0xff] %v2044
    %2066 = vst [vmem:[#allocation2 + $0x70] sm:$0xff] %v2048
    %2067 = vst [vmem:[#allocation2 + $0x78] sm:$0xff] %v2050
    %s2068 = scalar_lea.vmem [#allocation4], 256
    %v2069 = vld [vmem:[%s2068] sm:$0xff]
    %v2070 = vld [vmem:[%s2068 + $0x8] sm:$0xff]
    %v2071 = vld [vmem:[%s2068 + $0x10] sm:$0xff]
    %v2072 = vld [vmem:[%s2068 + $0x18] sm:$0xff]
    %v2073 = vld [vmem:[%s2068 + $0x20] sm:$0xff]
    %v2074 = vld [vmem:[%s2068 + $0x28] sm:$0xff]
    %v2075 = vld [vmem:[%s2068 + $0x30] sm:$0xff]
    %v2076 = vld [vmem:[%s2068 + $0x38] sm:$0xff]
    %v2077 = vld [vmem:[%s2068 + $0x40] sm:$0xff]
    %v2078 = vld [vmem:[%s2068 + $0x48] sm:$0xff]
    %v2079 = vld [vmem:[%s2068 + $0x50] sm:$0xff]
    %v2080 = vld [vmem:[%s2068 + $0x58] sm:$0xff]
    %v2081 = vld [vmem:[%s2068 + $0x60] sm:$0xff]
    %v2082 = vld [vmem:[%s2068 + $0x68] sm:$0xff]
    %v2083 = vld [vmem:[%s2068 + $0x70] sm:$0xff]
    %v2084 = vld [vmem:[%s2068 + $0x78] sm:$0xff]
    %v2085 = vld [vmem:[%s2 + $0x6] ss:$0 sm:$0xff]
    %v2086 = vld [vmem:[#allocation2] sm:$0xff]
    %v2087 = vld [vmem:[#allocation2 + $0x8] sm:$0xff]
    %2088 = vmatprep.subr.mxu0 %v2070
    %2089 = vmatpush1.msra.mxu0 %v2069
    %2090 = vmatprep.subr.mxu0 %v2072
    %2091 = vmatpush1.msra.mxu0 %v2071
    %2092 = vmatprep.subr.mxu0 %v2074
    %2093 = vmatpush1.msra.mxu0 %v2073
    %2094 = vmatprep.subr.mxu0 %v2076
    %2095 = vmatpush1.msra.mxu0 %v2075
    %2096 = vmatprep.subr.mxu0 %v2078
    %2097 = vmatpush1.msra.mxu0 %v2077
    %2098 = vmatprep.subr.mxu0 %v2080
    %2099 = vmatpush1.msra.mxu0 %v2079
    %2100 = vmatprep.subr.mxu0 %v2082
    %2101 = vmatpush1.msra.mxu0 %v2081
    %2102 = vmatprep.subr.mxu0 %v2084
    %2103 = vmatpush1.msra.mxu0 %v2083
    %2104 = vmatprep.subr.mxu0 0.0
    %2105 = vmatpush1.msra.mxu0 0.0
    %2106 = vmatprep.subr.mxu0 0.0
    %2107 = vmatpush1.msra.mxu0 0.0
    %2108 = vmatprep.subr.mxu0 0.0
    %2109 = vmatpush1.msra.mxu0 0.0
    %2110 = vmatprep.subr.mxu0 0.0
    %2111 = vmatpush1.msra.mxu0 0.0
    %2112 = vmatprep.subr.mxu0 0.0
    %2113 = vmatpush1.msra.mxu0 0.0
    %2114 = vmatprep.subr.mxu0 0.0
    %2115 = vmatpush1.msra.mxu0 0.0
    %2116 = vmatprep.subr.mxu0 0.0
    %2117 = vmatpush1.msra.mxu0 0.0
    %2118 = vmatprep.subr.mxu0 0.0
    %2119 = vmatpush1.msra.mxu0 0.0
    %2120 = vmatprep.subr.mxu0 0.0
    %2121 = vmatpush1.msra.mxu0 0.0
    %2122 = vmatprep.subr.mxu0 0.0
    %2123 = vmatpush1.msra.mxu0 0.0
    %2124 = vmatprep.subr.mxu0 0.0
    %2125 = vmatpush1.msra.mxu0 0.0
    %2126 = vmatprep.subr.mxu0 0.0
    %2127 = vmatpush1.msra.mxu0 0.0
    %2128 = vmatprep.subr.mxu0 0.0
    %2129 = vmatpush1.msra.mxu0 0.0
    %2130 = vmatprep.subr.mxu0 0.0
    %2131 = vmatpush1.msra.mxu0 0.0
    %2132 = vmatprep.subr.mxu0 0.0
    %2133 = vmatpush1.msra.mxu0 0.0
    %2134 = vmatprep.subr.mxu0 0.0
    %2135 = vmatpush1.msra.mxu0 0.0
    %2136 = vmatprep.subr.mxu0 0.0
    %2137 = vmatpush1.msra.mxu0 0.0
    %2138 = vmatprep.subr.mxu0 0.0
    %2139 = vmatpush1.msra.mxu0 0.0
    %2140 = vmatprep.subr.mxu0 0.0
    %2141 = vmatpush1.msra.mxu0 0.0
    %2142 = vmatprep.subr.mxu0 0.0
    %2143 = vmatpush1.msra.mxu0 0.0
    %2144 = vmatprep.subr.mxu0 0.0
    %2145 = vmatpush1.msra.mxu0 0.0
    %2146 = vmatprep.subr.mxu0 0.0
    %2147 = vmatpush1.msra.mxu0 0.0
    %2148 = vmatprep.subr.mxu0 0.0
    %2149 = vmatpush1.msra.mxu0 0.0
    %2150 = vmatprep.subr.mxu0 0.0
    %2151 = vmatpush1.msra.mxu0 0.0
    %2152 = vmatprep.mubr.f32.mxu0 0.0
    %2153 = vmatmul.mubr.f32.gmra.mrb[0].mxu0 %v170
    %v2154 = vpop.f32.mrb[0].mxu0
    %v2155 = vadd.f32 0.0, %v2154
    %v2156 = vpop.f32.mrb[0].mxu0
    %v2157 = vadd.f32 0.0, %v2156
    %2158 = vdwg.mxu0
    %v2159 = vadd.f32 %v2086, %v2155
    %v2160 = vxor.u32 %v2159, 2147483648
    %v2161 = vmul.f32 %v2160, 1.442695
    %v2162 = vpow.pop %v2161
    %v2163 = vadd.f32 %v2162, 1.0
    %v2164 = vrcp.pop %v2163
    %v2165 = vmul.f32 1.0, %v2164
    %2166 = vrot.lane.b32.xlu0 %v2165, 64
    %v2167 = vpop.permute.xlu0 %2166
    %v2168 = vadd.f32 %v2157, %v2085
    %v2169 = vmul.f32 %v2165, %v2168
    %v2170 = vadd.f32 %v2087, %v2169
    %v2171 = vtanh.pop %v2170
    %v2172 = vsub.f32 1.0, %v2167
    %v2173 = vmul.f32 %v2172, %v2171
    %v2174 = vmul.f32 %v2167, 0.0
    %v2175 = vadd.f32 %v2173, %v2174
    %v2176 = vld [vmem:[#allocation2 + $0x10] sm:$0xff]
    %v2177 = vld [vmem:[#allocation2 + $0x18] sm:$0xff]
    %v2179 = vsel %vm168, %v2175, 0
    %2181 = vmatprep.subr.mxu0 %v2070
    %2182 = vmatpush1.msra.mxu0 %v2069
    %2183 = vmatprep.subr.mxu0 %v2072
    %2184 = vmatpush1.msra.mxu0 %v2071
    %2185 = vmatprep.subr.mxu0 %v2074
    %2186 = vmatpush1.msra.mxu0 %v2073
    %2187 = vmatprep.subr.mxu0 %v2076
    %2188 = vmatpush1.msra.mxu0 %v2075
    %2189 = vmatprep.subr.mxu0 %v2078
    %2190 = vmatpush1.msra.mxu0 %v2077
    %2191 = vmatprep.subr.mxu0 %v2080
    %2192 = vmatpush1.msra.mxu0 %v2079
    %2193 = vmatprep.subr.mxu0 %v2082
    %2194 = vmatpush1.msra.mxu0 %v2081
    %2195 = vmatprep.subr.mxu0 %v2084
    %2196 = vmatpush1.msra.mxu0 %v2083
    %2197 = vmatprep.subr.mxu0 0.0
    %2198 = vmatpush1.msra.mxu0 0.0
    %2199 = vmatprep.subr.mxu0 0.0
    %2200 = vmatpush1.msra.mxu0 0.0
    %2201 = vmatprep.subr.mxu0 0.0
    %2202 = vmatpush1.msra.mxu0 0.0
    %2203 = vmatprep.subr.mxu0 0.0
    %2204 = vmatpush1.msra.mxu0 0.0
    %2205 = vmatprep.subr.mxu0 0.0
    %2206 = vmatpush1.msra.mxu0 0.0
    %2207 = vmatprep.subr.mxu0 0.0
    %2208 = vmatpush1.msra.mxu0 0.0
    %2209 = vmatprep.subr.mxu0 0.0
    %2210 = vmatpush1.msra.mxu0 0.0
    %2211 = vmatprep.subr.mxu0 0.0
    %2212 = vmatpush1.msra.mxu0 0.0
    %2213 = vmatprep.subr.mxu0 0.0
    %2214 = vmatpush1.msra.mxu0 0.0
    %2215 = vmatprep.subr.mxu0 0.0
    %2216 = vmatpush1.msra.mxu0 0.0
    %2217 = vmatprep.subr.mxu0 0.0
    %2218 = vmatpush1.msra.mxu0 0.0
    %2219 = vmatprep.subr.mxu0 0.0
    %2220 = vmatpush1.msra.mxu0 0.0
    %2221 = vmatprep.subr.mxu0 0.0
    %2222 = vmatpush1.msra.mxu0 0.0
    %2223 = vmatprep.subr.mxu0 0.0
    %2224 = vmatpush1.msra.mxu0 0.0
    %2225 = vmatprep.subr.mxu0 0.0
    %2226 = vmatpush1.msra.mxu0 0.0
    %2227 = vmatprep.subr.mxu0 0.0
    %2228 = vmatpush1.msra.mxu0 0.0
    %2229 = vmatprep.subr.mxu0 0.0
    %2230 = vmatpush1.msra.mxu0 0.0
    %2231 = vmatprep.subr.mxu0 0.0
    %2232 = vmatpush1.msra.mxu0 0.0
    %2233 = vmatprep.subr.mxu0 0.0
    %2234 = vmatpush1.msra.mxu0 0.0
    %2235 = vmatprep.subr.mxu0 0.0
    %2236 = vmatpush1.msra.mxu0 0.0
    %2237 = vmatprep.subr.mxu0 0.0
    %2238 = vmatpush1.msra.mxu0 0.0
    %2239 = vmatprep.subr.mxu0 0.0
    %2240 = vmatpush1.msra.mxu0 0.0
    %2241 = vmatprep.subr.mxu0 0.0
    %2242 = vmatpush1.msra.mxu0 0.0
    %2243 = vmatprep.subr.mxu0 0.0
    %2244 = vmatpush1.msra.mxu0 0.0
    %2245 = vmatprep.mubr.f32.mxu0 0.0
    %2246 = vmatmul.mubr.f32.gmra.mrb[0].mxu0 %v2179
    %v2247 = vpop.f32.mrb[0].mxu0
    %v2248 = vadd.f32 0.0, %v2247
    %v2249 = vpop.f32.mrb[0].mxu0
    %v2250 = vadd.f32 0.0, %v2249
    %2251 = vdwg.mxu0
    %v2252 = vadd.f32 %v2176, %v2248
    %v2253 = vxor.u32 %v2252, 2147483648
    %v2254 = vmul.f32 %v2253, 1.442695
    %v2255 = vpow.pop %v2254
    %v2256 = vadd.f32 %v2255, 1.0
    %v2257 = vrcp.pop %v2256
    %v2258 = vmul.f32 1.0, %v2257
    %2259 = vrot.lane.b32.xlu0 %v2258, 64
    %v2260 = vpop.permute.xlu0 %2259
    %v2261 = vadd.f32 %v2250, %v2085
    %v2262 = vmul.f32 %v2258, %v2261
    %v2263 = vadd.f32 %v2177, %v2262
    %v2264 = vtanh.pop %v2263
    %v2265 = vsub.f32 1.0, %v2260
    %v2266 = vmul.f32 %v2265, %v2264
    %v2267 = vmul.f32 %v2260, %v2175
    %v2268 = vadd.f32 %v2266, %v2267
    %v2269 = vld [vmem:[#allocation2 + $0x20] sm:$0xff]
    %v2270 = vld [vmem:[#allocation2 + $0x28] sm:$0xff]
    %v2272 = vsel %vm168, %v2268, 0
    %2274 = vmatprep.subr.mxu0 %v2070
    %2275 = vmatpush1.msra.mxu0 %v2069
    %2276 = vmatprep.subr.mxu0 %v2072
    %2277 = vmatpush1.msra.mxu0 %v2071
    %2278 = vmatprep.subr.mxu0 %v2074
    %2279 = vmatpush1.msra.mxu0 %v2073
    %2280 = vmatprep.subr.mxu0 %v2076
    %2281 = vmatpush1.msra.mxu0 %v2075
    %2282 = vmatprep.subr.mxu0 %v2078
    %2283 = vmatpush1.msra.mxu0 %v2077
    %2284 = vmatprep.subr.mxu0 %v2080
    %2285 = vmatpush1.msra.mxu0 %v2079
    %2286 = vmatprep.subr.mxu0 %v2082
    %2287 = vmatpush1.msra.mxu0 %v2081
    %2288 = vmatprep.subr.mxu0 %v2084
    %2289 = vmatpush1.msra.mxu0 %v2083
    %2290 = vmatprep.subr.mxu0 0.0
    %2291 = vmatpush1.msra.mxu0 0.0
    %2292 = vmatprep.subr.mxu0 0.0
    %2293 = vmatpush1.msra.mxu0 0.0
    %2294 = vmatprep.subr.mxu0 0.0
    %2295 = vmatpush1.msra.mxu0 0.0
    %2296 = vmatprep.subr.mxu0 0.0
    %2297 = vmatpush1.msra.mxu0 0.0
    %2298 = vmatprep.subr.mxu0 0.0
    %2299 = vmatpush1.msra.mxu0 0.0
    %2300 = vmatprep.subr.mxu0 0.0
    %2301 = vmatpush1.msra.mxu0 0.0
    %2302 = vmatprep.subr.mxu0 0.0
    %2303 = vmatpush1.msra.mxu0 0.0
    %2304 = vmatprep.subr.mxu0 0.0
    %2305 = vmatpush1.msra.mxu0 0.0
    %2306 = vmatprep.subr.mxu0 0.0
    %2307 = vmatpush1.msra.mxu0 0.0
    %2308 = vmatprep.subr.mxu0 0.0
    %2309 = vmatpush1.msra.mxu0 0.0
    %2310 = vmatprep.subr.mxu0 0.0
    %2311 = vmatpush1.msra.mxu0 0.0
    %2312 = vmatprep.subr.mxu0 0.0
    %2313 = vmatpush1.msra.mxu0 0.0
    %2314 = vmatprep.subr.mxu0 0.0
    %2315 = vmatpush1.msra.mxu0 0.0
    %2316 = vmatprep.subr.mxu0 0.0
    %2317 = vmatpush1.msra.mxu0 0.0
    %2318 = vmatprep.subr.mxu0 0.0
    %2319 = vmatpush1.msra.mxu0 0.0
    %2320 = vmatprep.subr.mxu0 0.0
    %2321 = vmatpush1.msra.mxu0 0.0
    %2322 = vmatprep.subr.mxu0 0.0
    %2323 = vmatpush1.msra.mxu0 0.0
    %2324 = vmatprep.subr.mxu0 0.0
    %2325 = vmatpush1.msra.mxu0 0.0
    %2326 = vmatprep.subr.mxu0 0.0
    %2327 = vmatpush1.msra.mxu0 0.0
    %2328 = vmatprep.subr.mxu0 0.0
    %2329 = vmatpush1.msra.mxu0 0.0
    %2330 = vmatprep.subr.mxu0 0.0
    %2331 = vmatpush1.msra.mxu0 0.0
    %2332 = vmatprep.subr.mxu0 0.0
    %2333 = vmatpush1.msra.mxu0 0.0
    %2334 = vmatprep.subr.mxu0 0.0
    %2335 = vmatpush1.msra.mxu0 0.0
    %2336 = vmatprep.subr.mxu0 0.0
    %2337 = vmatpush1.msra.mxu0 0.0
    %2338 = vmatprep.mubr.f32.mxu0 0.0
    %2339 = vmatmul.mubr.f32.gmra.mrb[0].mxu0 %v2272
    %v2340 = vpop.f32.mrb[0].mxu0
    %v2341 = vadd.f32 0.0, %v2340
    %v2342 = vpop.f32.mrb[0].mxu0
    %v2343 = vadd.f32 0.0, %v2342
    %2344 = vdwg.mxu0
    %v2345 = vadd.f32 %v2269, %v2341
    %v2346 = vxor.u32 %v2345, 2147483648
    %v2347 = vmul.f32 %v2346, 1.442695
    %v2348 = vpow.pop %v2347
    %v2349 = vadd.f32 %v2348, 1.0
    %v2350 = vrcp.pop %v2349
    %v2351 = vmul.f32 1.0, %v2350
    %2352 = vrot.lane.b32.xlu0 %v2351, 64
    %v2353 = vpop.permute.xlu0 %2352
    %v2354 = vadd.f32 %v2343, %v2085
    %v2355 = vmul.f32 %v2351, %v2354
    %v2356 = vadd.f32 %v2270, %v2355
    %v2357 = vtanh.pop %v2356
    %v2358 = vsub.f32 1.0, %v2353
    %v2359 = vmul.f32 %v2358, %v2357
    %v2360 = vmul.f32 %v2353, %v2268
    %v2361 = vadd.f32 %v2359, %v2360
    %v2362 = vld [vmem:[#allocation2 + $0x30] sm:$0xff]
    %v2363 = vld [vmem:[#allocation2 + $0x38] sm:$0xff]
    %v2365 = vsel %vm168, %v2361, 0
    %2367 = vmatprep.subr.mxu0 %v2070
    %2368 = vmatpush1.msra.mxu0 %v2069
    %2369 = vmatprep.subr.mxu0 %v2072
    %2370 = vmatpush1.msra.mxu0 %v2071
    %2371 = vmatprep.subr.mxu0 %v2074
    %2372 = vmatpush1.msra.mxu0 %v2073
    %2373 = vmatprep.subr.mxu0 %v2076
    %2374 = vmatpush1.msra.mxu0 %v2075
    %2375 = vmatprep.subr.mxu0 %v2078
    %2376 = vmatpush1.msra.mxu0 %v2077
    %2377 = vmatprep.subr.mxu0 %v2080
    %2378 = vmatpush1.msra.mxu0 %v2079
    %2379 = vmatprep.subr.mxu0 %v2082
    %2380 = vmatpush1.msra.mxu0 %v2081
    %2381 = vmatprep.subr.mxu0 %v2084
    %2382 = vmatpush1.msra.mxu0 %v2083
    %2383 = vmatprep.subr.mxu0 0.0
    %2384 = vmatpush1.msra.mxu0 0.0
    %2385 = vmatprep.subr.mxu0 0.0
    %2386 = vmatpush1.msra.mxu0 0.0
    %2387 = vmatprep.subr.mxu0 0.0
    %2388 = vmatpush1.msra.mxu0 0.0
    %2389 = vmatprep.subr.mxu0 0.0
    %2390 = vmatpush1.msra.mxu0 0.0
    %2391 = vmatprep.subr.mxu0 0.0
    %2392 = vmatpush1.msra.mxu0 0.0
    %2393 = vmatprep.subr.mxu0 0.0
    %2394 = vmatpush1.msra.mxu0 0.0
    %2395 = vmatprep.subr.mxu0 0.0
    %2396 = vmatpush1.msra.mxu0 0.0
    %2397 = vmatprep.subr.mxu0 0.0
    %2398 = vmatpush1.msra.mxu0 0.0
    %2399 = vmatprep.subr.mxu0 0.0
    %2400 = vmatpush1.msra.mxu0 0.0
    %2401 = vmatprep.subr.mxu0 0.0
    %2402 = vmatpush1.msra.mxu0 0.0
    %2403 = vmatprep.subr.mxu0 0.0
    %2404 = vmatpush1.msra.mxu0 0.0
    %2405 = vmatprep.subr.mxu0 0.0
    %2406 = vmatpush1.msra.mxu0 0.0
    %2407 = vmatprep.subr.mxu0 0.0
    %2408 = vmatpush1.msra.mxu0 0.0
    %2409 = vmatprep.subr.mxu0 0.0
    %2410 = vmatpush1.msra.mxu0 0.0
    %2411 = vmatprep.subr.mxu0 0.0
    %2412 = vmatpush1.msra.mxu0 0.0
    %2413 = vmatprep.subr.mxu0 0.0
    %2414 = vmatpush1.msra.mxu0 0.0
    %2415 = vmatprep.subr.mxu0 0.0
    %2416 = vmatpush1.msra.mxu0 0.0
    %2417 = vmatprep.subr.mxu0 0.0
    %2418 = vmatpush1.msra.mxu0 0.0
    %2419 = vmatprep.subr.mxu0 0.0
    %2420 = vmatpush1.msra.mxu0 0.0
    %2421 = vmatprep.subr.mxu0 0.0
    %2422 = vmatpush1.msra.mxu0 0.0
    %2423 = vmatprep.subr.mxu0 0.0
    %2424 = vmatpush1.msra.mxu0 0.0
    %2425 = vmatprep.subr.mxu0 0.0
    %2426 = vmatpush1.msra.mxu0 0.0
    %2427 = vmatprep.subr.mxu0 0.0
    %2428 = vmatpush1.msra.mxu0 0.0
    %2429 = vmatprep.subr.mxu0 0.0
    %2430 = vmatpush1.msra.mxu0 0.0
    %2431 = vmatprep.mubr.f32.mxu0 0.0
    %2432 = vmatmul.mubr.f32.gmra.mrb[0].mxu0 %v2365
    %v2433 = vpop.f32.mrb[0].mxu0
    %v2434 = vadd.f32 0.0, %v2433
    %v2435 = vpop.f32.mrb[0].mxu0
    %v2436 = vadd.f32 0.0, %v2435
    %2437 = vdwg.mxu0
    %v2438 = vadd.f32 %v2362, %v2434
    %v2439 = vxor.u32 %v2438, 2147483648
    %v2440 = vmul.f32 %v2439, 1.442695
    %v2441 = vpow.pop %v2440
    %v2442 = vadd.f32 %v2441, 1.0
    %v2443 = vrcp.pop %v2442
    %v2444 = vmul.f32 1.0, %v2443
    %2445 = vrot.lane.b32.xlu0 %v2444, 64
    %v2446 = vpop.permute.xlu0 %2445
    %v2447 = vadd.f32 %v2436, %v2085
    %v2448 = vmul.f32 %v2444, %v2447
    %v2449 = vadd.f32 %v2363, %v2448
    %v2450 = vtanh.pop %v2449
    %v2451 = vsub.f32 1.0, %v2446
    %v2452 = vmul.f32 %v2451, %v2450
    %v2453 = vmul.f32 %v2446, %v2361
    %v2454 = vadd.f32 %v2452, %v2453
    %v2455 = vld [vmem:[#allocation2 + $0x40] sm:$0xff]
    %v2456 = vld [vmem:[#allocation2 + $0x48] sm:$0xff]
    %v2458 = vsel %vm168, %v2454, 0
    %2460 = vmatprep.subr.mxu0 %v2070
    %2461 = vmatpush1.msra.mxu0 %v2069
    %2462 = vmatprep.subr.mxu0 %v2072
    %2463 = vmatpush1.msra.mxu0 %v2071
    %2464 = vmatprep.subr.mxu0 %v2074
    %2465 = vmatpush1.msra.mxu0 %v2073
    %2466 = vmatprep.subr.mxu0 %v2076
    %2467 = vmatpush1.msra.mxu0 %v2075
    %2468 = vmatprep.subr.mxu0 %v2078
    %2469 = vmatpush1.msra.mxu0 %v2077
    %2470 = vmatprep.subr.mxu0 %v2080
    %2471 = vmatpush1.msra.mxu0 %v2079
    %2472 = vmatprep.subr.mxu0 %v2082
    %2473 = vmatpush1.msra.mxu0 %v2081
    %2474 = vmatprep.subr.mxu0 %v2084
    %2475 = vmatpush1.msra.mxu0 %v2083
    %2476 = vmatprep.subr.mxu0 0.0
    %2477 = vmatpush1.msra.mxu0 0.0
    %2478 = vmatprep.subr.mxu0 0.0
    %2479 = vmatpush1.msra.mxu0 0.0
    %2480 = vmatprep.subr.mxu0 0.0
    %2481 = vmatpush1.msra.mxu0 0.0
    %2482 = vmatprep.subr.mxu0 0.0
    %2483 = vmatpush1.msra.mxu0 0.0
    %2484 = vmatprep.subr.mxu0 0.0
    %2485 = vmatpush1.msra.mxu0 0.0
    %2486 = vmatprep.subr.mxu0 0.0
    %2487 = vmatpush1.msra.mxu0 0.0
    %2488 = vmatprep.subr.mxu0 0.0
    %2489 = vmatpush1.msra.mxu0 0.0
    %2490 = vmatprep.subr.mxu0 0.0
    %2491 = vmatpush1.msra.mxu0 0.0
    %2492 = vmatprep.subr.mxu0 0.0
    %2493 = vmatpush1.msra.mxu0 0.0
    %2494 = vmatprep.subr.mxu0 0.0
    %2495 = vmatpush1.msra.mxu0 0.0
    %2496 = vmatprep.subr.mxu0 0.0
    %2497 = vmatpush1.msra.mxu0 0.0
    %2498 = vmatprep.subr.mxu0 0.0
    %2499 = vmatpush1.msra.mxu0 0.0
    %2500 = vmatprep.subr.mxu0 0.0
    %2501 = vmatpush1.msra.mxu0 0.0
    %2502 = vmatprep.subr.mxu0 0.0
    %2503 = vmatpush1.msra.mxu0 0.0
    %2504 = vmatprep.subr.mxu0 0.0
    %2505 = vmatpush1.msra.mxu0 0.0
    %2506 = vmatprep.subr.mxu0 0.0
    %2507 = vmatpush1.msra.mxu0 0.0
    %2508 = vmatprep.subr.mxu0 0.0
    %2509 = vmatpush1.msra.mxu0 0.0
    %2510 = vmatprep.subr.mxu0 0.0
    %2511 = vmatpush1.msra.mxu0 0.0
    %2512 = vmatprep.subr.mxu0 0.0
    %2513 = vmatpush1.msra.mxu0 0.0
    %2514 = vmatprep.subr.mxu0 0.0
    %2515 = vmatpush1.msra.mxu0 0.0
    %2516 = vmatprep.subr.mxu0 0.0
    %2517 = vmatpush1.msra.mxu0 0.0
    %2518 = vmatprep.subr.mxu0 0.0
    %2519 = vmatpush1.msra.mxu0 0.0
    %2520 = vmatprep.subr.mxu0 0.0
    %2521 = vmatpush1.msra.mxu0 0.0
    %2522 = vmatprep.subr.mxu0 0.0
    %2523 = vmatpush1.msra.mxu0 0.0
    %2524 = vmatprep.mubr.f32.mxu0 0.0
    %2525 = vmatmul.mubr.f32.gmra.mrb[0].mxu0 %v2458
    %v2526 = vpop.f32.mrb[0].mxu0
    %v2527 = vadd.f32 0.0, %v2526
    %v2528 = vpop.f32.mrb[0].mxu0
    %v2529 = vadd.f32 0.0, %v2528
    %2530 = vdwg.mxu0
    %v2531 = vadd.f32 %v2455, %v2527
    %v2532 = vxor.u32 %v2531, 2147483648
    %v2533 = vmul.f32 %v2532, 1.442695
    %v2534 = vpow.pop %v2533
    %v2535 = vadd.f32 %v2534, 1.0
    %v2536 = vrcp.pop %v2535
    %v2537 = vmul.f32 1.0, %v2536
    %2538 = vrot.lane.b32.xlu0 %v2537, 64
    %v2539 = vpop.permute.xlu0 %2538
    %v2540 = vadd.f32 %v2529, %v2085
    %v2541 = vmul.f32 %v2537, %v2540
    %v2542 = vadd.f32 %v2456, %v2541
    %v2543 = vtanh.pop %v2542
    %v2544 = vsub.f32 1.0, %v2539
    %v2545 = vmul.f32 %v2544, %v2543
    %v2546 = vmul.f32 %v2539, %v2454
    %v2547 = vadd.f32 %v2545, %v2546
    %v2548 = vld [vmem:[#allocation2 + $0x50] sm:$0xff]
    %v2549 = vld [vmem:[#allocation2 + $0x58] sm:$0xff]
    %v2551 = vsel %vm168, %v2547, 0
    %2553 = vmatprep.subr.mxu0 %v2070
    %2554 = vmatpush1.msra.mxu0 %v2069
    %2555 = vmatprep.subr.mxu0 %v2072
    %2556 = vmatpush1.msra.mxu0 %v2071
    %2557 = vmatprep.subr.mxu0 %v2074
    %2558 = vmatpush1.msra.mxu0 %v2073
    %2559 = vmatprep.subr.mxu0 %v2076
    %2560 = vmatpush1.msra.mxu0 %v2075
    %2561 = vmatprep.subr.mxu0 %v2078
    %2562 = vmatpush1.msra.mxu0 %v2077
    %2563 = vmatprep.subr.mxu0 %v2080
    %2564 = vmatpush1.msra.mxu0 %v2079
    %2565 = vmatprep.subr.mxu0 %v2082
    %2566 = vmatpush1.msra.mxu0 %v2081
    %2567 = vmatprep.subr.mxu0 %v2084
    %2568 = vmatpush1.msra.mxu0 %v2083
    %2569 = vmatprep.subr.mxu0 0.0
    %2570 = vmatpush1.msra.mxu0 0.0
    %2571 = vmatprep.subr.mxu0 0.0
    %2572 = vmatpush1.msra.mxu0 0.0
    %2573 = vmatprep.subr.mxu0 0.0
    %2574 = vmatpush1.msra.mxu0 0.0
    %2575 = vmatprep.subr.mxu0 0.0
    %2576 = vmatpush1.msra.mxu0 0.0
    %2577 = vmatprep.subr.mxu0 0.0
    %2578 = vmatpush1.msra.mxu0 0.0
    %2579 = vmatprep.subr.mxu0 0.0
    %2580 = vmatpush1.msra.mxu0 0.0
    %2581 = vmatprep.subr.mxu0 0.0
    %2582 = vmatpush1.msra.mxu0 0.0
    %2583 = vmatprep.subr.mxu0 0.0
    %2584 = vmatpush1.msra.mxu0 0.0
    %2585 = vmatprep.subr.mxu0 0.0
    %2586 = vmatpush1.msra.mxu0 0.0
    %2587 = vmatprep.subr.mxu0 0.0
    %2588 = vmatpush1.msra.mxu0 0.0
    %2589 = vmatprep.subr.mxu0 0.0
    %2590 = vmatpush1.msra.mxu0 0.0
    %2591 = vmatprep.subr.mxu0 0.0
    %2592 = vmatpush1.msra.mxu0 0.0
    %2593 = vmatprep.subr.mxu0 0.0
    %2594 = vmatpush1.msra.mxu0 0.0
    %2595 = vmatprep.subr.mxu0 0.0
    %2596 = vmatpush1.msra.mxu0 0.0
    %2597 = vmatprep.subr.mxu0 0.0
    %2598 = vmatpush1.msra.mxu0 0.0
    %2599 = vmatprep.subr.mxu0 0.0
    %2600 = vmatpush1.msra.mxu0 0.0
    %2601 = vmatprep.subr.mxu0 0.0
    %2602 = vmatpush1.msra.mxu0 0.0
    %2603 = vmatprep.subr.mxu0 0.0
    %2604 = vmatpush1.msra.mxu0 0.0
    %2605 = vmatprep.subr.mxu0 0.0
    %2606 = vmatpush1.msra.mxu0 0.0
    %2607 = vmatprep.subr.mxu0 0.0
    %2608 = vmatpush1.msra.mxu0 0.0
    %2609 = vmatprep.subr.mxu0 0.0
    %2610 = vmatpush1.msra.mxu0 0.0
    %2611 = vmatprep.subr.mxu0 0.0
    %2612 = vmatpush1.msra.mxu0 0.0
    %2613 = vmatprep.subr.mxu0 0.0
    %2614 = vmatpush1.msra.mxu0 0.0
    %2615 = vmatprep.subr.mxu0 0.0
    %2616 = vmatpush1.msra.mxu0 0.0
    %2617 = vmatprep.mubr.f32.mxu0 0.0
    %2618 = vmatmul.mubr.f32.gmra.mrb[0].mxu0 %v2551
    %v2619 = vpop.f32.mrb[0].mxu0
    %v2620 = vadd.f32 0.0, %v2619
    %v2621 = vpop.f32.mrb[0].mxu0
    %v2622 = vadd.f32 0.0, %v2621
    %2623 = vdwg.mxu0
    %v2624 = vadd.f32 %v2548, %v2620
    %v2625 = vxor.u32 %v2624, 2147483648
    %v2626 = vmul.f32 %v2625, 1.442695
    %v2627 = vpow.pop %v2626
    %v2628 = vadd.f32 %v2627, 1.0
    %v2629 = vrcp.pop %v2628
    %v2630 = vmul.f32 1.0, %v2629
    %2631 = vrot.lane.b32.xlu0 %v2630, 64
    %v2632 = vpop.permute.xlu0 %2631
    %v2633 = vadd.f32 %v2622, %v2085
    %v2634 = vmul.f32 %v2630, %v2633
    %v2635 = vadd.f32 %v2549, %v2634
    %v2636 = vtanh.pop %v2635
    %v2637 = vsub.f32 1.0, %v2632
    %v2638 = vmul.f32 %v2637, %v2636
    %v2639 = vmul.f32 %v2632, %v2547
    %v2640 = vadd.f32 %v2638, %v2639
    %v2641 = vld [vmem:[#allocation2 + $0x60] sm:$0xff]
    %v2642 = vld [vmem:[#allocation2 + $0x68] sm:$0xff]
    %v2644 = vsel %vm168, %v2640, 0
    %2646 = vmatprep.subr.mxu0 %v2070
    %2647 = vmatpush1.msra.mxu0 %v2069
    %2648 = vmatprep.subr.mxu0 %v2072
    %2649 = vmatpush1.msra.mxu0 %v2071
    %2650 = vmatprep.subr.mxu0 %v2074
    %2651 = vmatpush1.msra.mxu0 %v2073
    %2652 = vmatprep.subr.mxu0 %v2076
    %2653 = vmatpush1.msra.mxu0 %v2075
    %2654 = vmatprep.subr.mxu0 %v2078
    %2655 = vmatpush1.msra.mxu0 %v2077
    %2656 = vmatprep.subr.mxu0 %v2080
    %2657 = vmatpush1.msra.mxu0 %v2079
    %2658 = vmatprep.subr.mxu0 %v2082
    %2659 = vmatpush1.msra.mxu0 %v2081
    %2660 = vmatprep.subr.mxu0 %v2084
    %2661 = vmatpush1.msra.mxu0 %v2083
    %2662 = vmatprep.subr.mxu0 0.0
    %2663 = vmatpush1.msra.mxu0 0.0
    %2664 = vmatprep.subr.mxu0 0.0
    %2665 = vmatpush1.msra.mxu0 0.0
    %2666 = vmatprep.subr.mxu0 0.0
    %2667 = vmatpush1.msra.mxu0 0.0
    %2668 = vmatprep.subr.mxu0 0.0
    %2669 = vmatpush1.msra.mxu0 0.0
    %2670 = vmatprep.subr.mxu0 0.0
    %2671 = vmatpush1.msra.mxu0 0.0
    %2672 = vmatprep.subr.mxu0 0.0
    %2673 = vmatpush1.msra.mxu0 0.0
    %2674 = vmatprep.subr.mxu0 0.0
    %2675 = vmatpush1.msra.mxu0 0.0
    %2676 = vmatprep.subr.mxu0 0.0
    %2677 = vmatpush1.msra.mxu0 0.0
    %2678 = vmatprep.subr.mxu0 0.0
    %2679 = vmatpush1.msra.mxu0 0.0
    %2680 = vmatprep.subr.mxu0 0.0
    %2681 = vmatpush1.msra.mxu0 0.0
    %2682 = vmatprep.subr.mxu0 0.0
    %2683 = vmatpush1.msra.mxu0 0.0
    %2684 = vmatprep.subr.mxu0 0.0
    %2685 = vmatpush1.msra.mxu0 0.0
    %2686 = vmatprep.subr.mxu0 0.0
    %2687 = vmatpush1.msra.mxu0 0.0
    %2688 = vmatprep.subr.mxu0 0.0
    %2689 = vmatpush1.msra.mxu0 0.0
    %2690 = vmatprep.subr.mxu0 0.0
    %2691 = vmatpush1.msra.mxu0 0.0
    %2692 = vmatprep.subr.mxu0 0.0
    %2693 = vmatpush1.msra.mxu0 0.0
    %2694 = vmatprep.subr.mxu0 0.0
    %2695 = vmatpush1.msra.mxu0 0.0
    %2696 = vmatprep.subr.mxu0 0.0
    %2697 = vmatpush1.msra.mxu0 0.0
    %2698 = vmatprep.subr.mxu0 0.0
    %2699 = vmatpush1.msra.mxu0 0.0
    %2700 = vmatprep.subr.mxu0 0.0
    %2701 = vmatpush1.msra.mxu0 0.0
    %2702 = vmatprep.subr.mxu0 0.0
    %2703 = vmatpush1.msra.mxu0 0.0
    %2704 = vmatprep.subr.mxu0 0.0
    %2705 = vmatpush1.msra.mxu0 0.0
    %2706 = vmatprep.subr.mxu0 0.0
    %2707 = vmatpush1.msra.mxu0 0.0
    %2708 = vmatprep.subr.mxu0 0.0
    %2709 = vmatpush1.msra.mxu0 0.0
    %2710 = vmatprep.mubr.f32.mxu0 0.0
    %2711 = vmatmul.mubr.f32.gmra.mrb[0].mxu0 %v2644
    %v2712 = vpop.f32.mrb[0].mxu0
    %v2713 = vadd.f32 0.0, %v2712
    %v2714 = vpop.f32.mrb[0].mxu0
    %v2715 = vadd.f32 0.0, %v2714
    %2716 = vdwg.mxu0
    %v2717 = vadd.f32 %v2641, %v2713
    %v2718 = vxor.u32 %v2717, 2147483648
    %v2719 = vmul.f32 %v2718, 1.442695
    %v2720 = vpow.pop %v2719
    %v2721 = vadd.f32 %v2720, 1.0
    %v2722 = vrcp.pop %v2721
    %v2723 = vmul.f32 1.0, %v2722
    %2724 = vrot.lane.b32.xlu0 %v2723, 64
    %v2725 = vpop.permute.xlu0 %2724
    %v2726 = vadd.f32 %v2715, %v2085
    %v2727 = vmul.f32 %v2723, %v2726
    %v2728 = vadd.f32 %v2642, %v2727
    %v2729 = vtanh.pop %v2728
    %v2730 = vsub.f32 1.0, %v2725
    %v2731 = vmul.f32 %v2730, %v2729
    %v2732 = vmul.f32 %v2725, %v2640
    %v2733 = vadd.f32 %v2731, %v2732
    %v2734 = vld [vmem:[#allocation2 + $0x70] sm:$0xff]
    %v2735 = vld [vmem:[#allocation2 + $0x78] sm:$0xff]
    %v2737 = vsel %vm168, %v2733, 0
    %2739 = vmatprep.subr.mxu0 %v2070
    %2740 = vmatpush1.msra.mxu0 %v2069
    %2741 = vmatprep.subr.mxu0 %v2072
    %2742 = vmatpush1.msra.mxu0 %v2071
    %2743 = vmatprep.subr.mxu0 %v2074
    %2744 = vmatpush1.msra.mxu0 %v2073
    %2745 = vmatprep.subr.mxu0 %v2076
    %2746 = vmatpush1.msra.mxu0 %v2075
    %2747 = vmatprep.subr.mxu0 %v2078
    %2748 = vmatpush1.msra.mxu0 %v2077
    %2749 = vmatprep.subr.mxu0 %v2080
    %2750 = vmatpush1.msra.mxu0 %v2079
    %2751 = vmatprep.subr.mxu0 %v2082
    %2752 = vmatpush1.msra.mxu0 %v2081
    %2753 = vmatprep.subr.mxu0 %v2084
    %2754 = vmatpush1.msra.mxu0 %v2083
    %2755 = vmatprep.subr.mxu0 0.0
    %2756 = vmatpush1.msra.mxu0 0.0
    %2757 = vmatprep.subr.mxu0 0.0
    %2758 = vmatpush1.msra.mxu0 0.0
    %2759 = vmatprep.subr.mxu0 0.0
    %2760 = vmatpush1.msra.mxu0 0.0
    %2761 = vmatprep.subr.mxu0 0.0
    %2762 = vmatpush1.msra.mxu0 0.0
    %2763 = vmatprep.subr.mxu0 0.0
    %2764 = vmatpush1.msra.mxu0 0.0
    %2765 = vmatprep.subr.mxu0 0.0
    %2766 = vmatpush1.msra.mxu0 0.0
    %2767 = vmatprep.subr.mxu0 0.0
    %2768 = vmatpush1.msra.mxu0 0.0
    %2769 = vmatprep.subr.mxu0 0.0
    %2770 = vmatpush1.msra.mxu0 0.0
    %2771 = vmatprep.subr.mxu0 0.0
    %2772 = vmatpush1.msra.mxu0 0.0
    %2773 = vmatprep.subr.mxu0 0.0
    %2774 = vmatpush1.msra.mxu0 0.0
    %2775 = vmatprep.subr.mxu0 0.0
    %2776 = vmatpush1.msra.mxu0 0.0
    %2777 = vmatprep.subr.mxu0 0.0
    %2778 = vmatpush1.msra.mxu0 0.0
    %2779 = vmatprep.subr.mxu0 0.0
    %2780 = vmatpush1.msra.mxu0 0.0
    %2781 = vmatprep.subr.mxu0 0.0
    %2782 = vmatpush1.msra.mxu0 0.0
    %2783 = vmatprep.subr.mxu0 0.0
    %2784 = vmatpush1.msra.mxu0 0.0
    %2785 = vmatprep.subr.mxu0 0.0
    %2786 = vmatpush1.msra.mxu0 0.0
    %2787 = vmatprep.subr.mxu0 0.0
    %2788 = vmatpush1.msra.mxu0 0.0
    %2789 = vmatprep.subr.mxu0 0.0
    %2790 = vmatpush1.msra.mxu0 0.0
    %2791 = vmatprep.subr.mxu0 0.0
    %2792 = vmatpush1.msra.mxu0 0.0
    %2793 = vmatprep.subr.mxu0 0.0
    %2794 = vmatpush1.msra.mxu0 0.0
    %2795 = vmatprep.subr.mxu0 0.0
    %2796 = vmatpush1.msra.mxu0 0.0
    %2797 = vmatprep.subr.mxu0 0.0
    %2798 = vmatpush1.msra.mxu0 0.0
    %2799 = vmatprep.subr.mxu0 0.0
    %2800 = vmatpush1.msra.mxu0 0.0
    %2801 = vmatprep.subr.mxu0 0.0
    %2802 = vmatpush1.msra.mxu0 0.0
    %2803 = vmatprep.mubr.f32.mxu0 0.0
    %2804 = vmatmul.mubr.f32.gmra.mrb[0].mxu0 %v2737
    %v2805 = vpop.f32.mrb[0].mxu0
    %v2806 = vadd.f32 0.0, %v2805
    %v2807 = vpop.f32.mrb[0].mxu0
    %v2808 = vadd.f32 0.0, %v2807
    %2809 = vdwg.mxu0
    %v2810 = vadd.f32 %v2734, %v2806
    %v2811 = vxor.u32 %v2810, 2147483648
    %v2812 = vmul.f32 %v2811, 1.442695
    %v2813 = vpow.pop %v2812
    %v2814 = vadd.f32 %v2813, 1.0
    %v2815 = vrcp.pop %v2814
    %v2816 = vmul.f32 1.0, %v2815
    %2817 = vrot.lane.b32.xlu0 %v2816, 64
    %v2818 = vpop.permute.xlu0 %2817
    %v2819 = vadd.f32 %v2808, %v2085
    %v2820 = vmul.f32 %v2816, %v2819
    %v2821 = vadd.f32 %v2735, %v2820
    %v2822 = vtanh.pop %v2821
    %v2823 = vsub.f32 1.0, %v2818
    %v2824 = vmul.f32 %v2823, %v2822
    %v2825 = vmul.f32 %v2818, %v2733
    %v2826 = vadd.f32 %v2824, %v2825
    %s2827 = scalar_lea.vmem [#allocation4], 640
    %v2828 = vld [vmem:[%s2827] sm:$0xff]
    %v2829 = vld [vmem:[%s2827 + $0x10] sm:$0xff]
    %v2830 = vld [vmem:[%s2827 + $0x20] sm:$0xff]
    %v2831 = vld [vmem:[%s2827 + $0x30] sm:$0xff]
    %v2832 = vld [vmem:[%s2827 + $0x40] sm:$0xff]
    %v2833 = vld [vmem:[%s2827 + $0x50] sm:$0xff]
    %v2834 = vld [vmem:[%s2827 + $0x60] sm:$0xff]
    %v2835 = vld [vmem:[%s2827 + $0x70] sm:$0xff]
    %v2836 = vld [vmem:[%s2 + $0x7] ss:$0 sm:$0xff]
    %v2838 = vsel %vm168, %v2826, 0
    %2840 = vmatprep.subr.mxu0 0.0
    %2841 = vmatpush1.msra.mxu0 %v2828
    %2842 = vmatprep.subr.mxu0 0.0
    %2843 = vmatpush1.msra.mxu0 %v2829
    %2844 = vmatprep.subr.mxu0 0.0
    %2845 = vmatpush1.msra.mxu0 %v2830
    %2846 = vmatprep.subr.mxu0 0.0
    %2847 = vmatpush1.msra.mxu0 %v2831
    %2848 = vmatprep.subr.mxu0 0.0
    %2849 = vmatpush1.msra.mxu0 %v2832
    %2850 = vmatprep.subr.mxu0 0.0
    %2851 = vmatpush1.msra.mxu0 %v2833
    %2852 = vmatprep.subr.mxu0 0.0
    %2853 = vmatpush1.msra.mxu0 %v2834
    %2854 = vmatprep.subr.mxu0 0.0
    %2855 = vmatpush1.msra.mxu0 %v2835
    %2856 = vmatprep.subr.mxu0 0.0
    %2857 = vmatpush1.msra.mxu0 0.0
    %2858 = vmatprep.subr.mxu0 0.0
    %2859 = vmatpush1.msra.mxu0 0.0
    %2860 = vmatprep.subr.mxu0 0.0
    %2861 = vmatpush1.msra.mxu0 0.0
    %2862 = vmatprep.subr.mxu0 0.0
    %2863 = vmatpush1.msra.mxu0 0.0
    %2864 = vmatprep.subr.mxu0 0.0
    %2865 = vmatpush1.msra.mxu0 0.0
    %2866 = vmatprep.subr.mxu0 0.0
    %2867 = vmatpush1.msra.mxu0 0.0
    %2868 = vmatprep.subr.mxu0 0.0
    %2869 = vmatpush1.msra.mxu0 0.0
    %2870 = vmatprep.subr.mxu0 0.0
    %2871 = vmatpush1.msra.mxu0 0.0
    %2872 = vmatprep.subr.mxu0 0.0
    %2873 = vmatpush1.msra.mxu0 0.0
    %2874 = vmatprep.subr.mxu0 0.0
    %2875 = vmatpush1.msra.mxu0 0.0
    %2876 = vmatprep.subr.mxu0 0.0
    %2877 = vmatpush1.msra.mxu0 0.0
    %2878 = vmatprep.subr.mxu0 0.0
    %2879 = vmatpush1.msra.mxu0 0.0
    %2880 = vmatprep.subr.mxu0 0.0
    %2881 = vmatpush1.msra.mxu0 0.0
    %2882 = vmatprep.subr.mxu0 0.0
    %2883 = vmatpush1.msra.mxu0 0.0
    %2884 = vmatprep.subr.mxu0 0.0
    %2885 = vmatpush1.msra.mxu0 0.0
    %2886 = vmatprep.subr.mxu0 0.0
    %2887 = vmatpush1.msra.mxu0 0.0
    %2888 = vmatprep.subr.mxu0 0.0
    %2889 = vmatpush1.msra.mxu0 0.0
    %2890 = vmatprep.subr.mxu0 0.0
    %2891 = vmatpush1.msra.mxu0 0.0
    %2892 = vmatprep.subr.mxu0 0.0
    %2893 = vmatpush1.msra.mxu0 0.0
    %2894 = vmatprep.subr.mxu0 0.0
    %2895 = vmatpush1.msra.mxu0 0.0
    %2896 = vmatprep.subr.mxu0 0.0
    %2897 = vmatpush1.msra.mxu0 0.0
    %2898 = vmatprep.subr.mxu0 0.0
    %2899 = vmatpush1.msra.mxu0 0.0
    %2900 = vmatprep.subr.mxu0 0.0
    %2901 = vmatpush1.msra.mxu0 0.0
    %2902 = vmatprep.subr.mxu0 0.0
    %2903 = vmatpush1.msra.mxu0 0.0
    %2904 = vmatprep.mubr.f32.mxu0 0.0
    %2905 = vmatmul.mubr.f32.gmra.mrb[0].mxu0 %v2838
    %v2906 = vpop.f32.mrb[0].mxu0
    %v2907 = vadd.f32 %v2836, %v2906
    %v2908 = vpop.f32.mrb[0].mxu0
    %2909 = vdwg.mxu0
    %2910 = vst [vmem:[%s3] sm:$0xff] %v2907
    // Predicated region
    $region18: #{gru_model_forward.1} parent=1 // pred_check
      _
    $region19: #{gru_model_forward.1} parent=1 // pred_check_branch
      %2912 = sbr.rel (0) target = $region21
    $region20: #{gru_model_forward.1} parent=1 // pred_region
      _
    $region21: #{gru_model_forward.1} parent=1 // pred_fallthru
      _
    // Predicated region
    $region22: #{gru_model_forward.1} parent=1 // pred_check
      _
    $region23: #{gru_model_forward.1} parent=1 // pred_check_branch
      %2914 = sbr.rel (0) target = $region25
    $region24: #{gru_model_forward.1} parent=1 // pred_region
      _
    $region25: #{gru_model_forward.1} parent=1 // pred_fallthru
      _
    %2915 = vsyncpa [#allocation5], 1

</llo_original>
